<compile_context>
chip_gen: v7x
topology: tpu7x:2x2x1
jax: 0.10.0
libtpu: 0.0.40
codegen_flags: <defaults>
</compile_context>

<pallas_src>
import math
import jax
import jax.numpy as jnp
from jax.experimental import pallas as pl
from jax.experimental.pallas import tpu as pltpu

# ----------------------------- configuration -----------------------------
B = 2          # batch
S_SRC = 8      # source sequence length
S_TGT = 8      # target sequence length
D_MODEL = 32   # model width
N_HEADS = 4
D_HEAD = D_MODEL // N_HEADS
D_FF = 64
N_LAYERS = 2
EPS = 1e-6     # Annotated-Transformer LayerNorm eps
LANE = 128
NEG = 1e9

R_TOK = B * S_SRC            # token rows per stream (== B * S_TGT)
R_BLK = N_HEADS * R_TOK      # rows of the head-blocked K / V (64)

assert S_SRC == S_TGT, "head-blocked attention layout assumes equal lengths"


# --------------------- packed-parameter layout (static) --------------------
def _build_layout():
    idx = {}
    off = 0

    def add(name, r, c):
        nonlocal off
        idx[name] = (off, r, c)
        off += -(-r // 8) * 8          # keep every slice 8-row (sublane) aligned

    D, F = D_MODEL, D_FF
    for l in range(N_LAYERS):
        p = f"e{l}_"
        add(p + "wqkv", D, 3 * D); add(p + "bqkv", 1, 3 * D)
        add(p + "wo", D, D);       add(p + "bo", 1, D)
        add(p + "w1", D, F);       add(p + "b1", 1, F)
        add(p + "w2", F, D);       add(p + "b2", 1, D)
        for n in ("ln1g", "ln1b", "ln2g", "ln2b"):
            add(p + n, 1, D)
    add("e_ng", 1, D); add("e_nb", 1, D)
    for l in range(N_LAYERS):
        p = f"d{l}_"
        add(p + "wqkv_s", D, 3 * D); add(p + "bqkv_s", 1, 3 * D)
        add(p + "wo_s", D, D);       add(p + "bo_s", 1, D)
        add(p + "wq_c", D, D);       add(p + "bq_c", 1, D)
        add(p + "wkv_c", D, 2 * D);  add(p + "bkv_c", 1, 2 * D)
        add(p + "wo_c", D, D);       add(p + "bo_c", 1, D)
        add(p + "w1", D, F);         add(p + "b1", 1, F)
        add(p + "w2", F, D);         add(p + "b2", 1, D)
        for n in ("ln1g", "ln1b", "ln2g", "ln2b", "ln3g", "ln3b"):
            add(p + n, 1, D)
    add("d_ng", 1, D); add("d_nb", 1, D)
    # static attention-blocking constants (ride the same single DMA)
    add("vmask", R_BLK, D)          # head block-diagonal lane mask for K / V
    add("gones", R_BLK, R_BLK)      # same-head-group indicator (softmax denom)
    add("selb", R_TOK, R_TOK)       # same-batch indicator (cross-batch mask)
    return idx, off


PACK_INDEX, PACK_ROWS = _build_layout()


def pack_params(tree):
    """Pack every parameter / constant into one lane-dense (PACK_ROWS,128) buffer."""
    buf = jnp.zeros((PACK_ROWS, LANE), jnp.float32)
    for name, (off, r, c) in PACK_INDEX.items():
        a = jnp.asarray(tree[name], jnp.float32).reshape(r, c)
        buf = buf.at[off:off + r, :c].set(a)
    return buf


# ----------------------- in-kernel helper functions -----------------------
def _slab(p_ref, name):
    off, r, c = PACK_INDEX[name]
    return p_ref[off:off + r, :c]          # static, 8-row-aligned VMEM slice


def _layernorm(x, g, b):
    # Annotated-Transformer LayerNorm: unbiased (n-1) std, eps added to std.
    mean = jnp.mean(x, axis=-1, keepdims=True)
    xc = x - mean
    std = jnp.sqrt(jnp.sum(xc * xc, axis=-1, keepdims=True) * (1.0 / (D_MODEL - 1)))
    return g * xc / (std + EPS) + b        # exact division (correctness feedback)


def _block_bias(mask_rows, selb):
    """(B*t_q, t_k) {0,1} mask -> (B*t_q, H*B*t_k) additive bias {0,-1e9};
    cross-batch (row-batch != key-batch) pairs are always masked."""
    tiled = jnp.concatenate([mask_rows] * B, axis=1)          # (R_TOK, R_TOK)
    bias = (tiled * selb - 1.0) * NEG                         # 0 keep / -1e9 drop
    return jnp.concatenate([bias] * N_HEADS, axis=1)          # (R_TOK, R_BLK)


def _attention(q2, k2, v2, bias_all, vmask, gones):
    """All heads and both batch rows in one shot (2-D MXU matmuls only)."""
    kb = jnp.concatenate([k2] * N_HEADS, axis=0) * vmask      # (R_BLK, D)
    vb = jnp.concatenate([v2] * N_HEADS, axis=0) * vmask      # (R_BLK, D)
    s = jnp.einsum("rd,jd->rj", q2, kb,
                   preferred_element_type=jnp.float32)        # (R_TOK, R_BLK)
    s = s * (1.0 / math.sqrt(D_HEAD)) + bias_all
    # global row max is a valid softmax shift (scores are small); per-group
    # normalization comes from the block-diagonal `gones` matmul below.
    s = s - jnp.max(s, axis=-1, keepdims=True)
    e = jnp.exp(s)
    denom = jnp.dot(e, gones, preferred_element_type=jnp.float32)   # per-(row,head)
    p = e * pl.reciprocal(denom, approx=True)                 # softmax probs
    return jnp.dot(p, vb, preferred_element_type=jnp.float32)       # (R_TOK, D)


def _self_attn(xn, w_qkv, b_qkv, w_o, b_o, bias_all, vmask, gones):
    qkv = jnp.dot(xn, w_qkv, preferred_element_type=jnp.float32) + b_qkv
    o = _attention(qkv[:, :D_MODEL], qkv[:, D_MODEL:2 * D_MODEL],
                   qkv[:, 2 * D_MODEL:], bias_all, vmask, gones)
    return jnp.dot(o, w_o, preferred_element_type=jnp.float32) + b_o


def _cross_attn(yn, memory, w_q, b_q, w_kv, b_kv, w_o, b_o, bias_all, vmask, gones):
    q = jnp.dot(yn, w_q, preferred_element_type=jnp.float32) + b_q
    kv = jnp.dot(memory, w_kv, preferred_element_type=jnp.float32) + b_kv
    o = _attention(q, kv[:, :D_MODEL], kv[:, D_MODEL:], bias_all, vmask, gones)
    return jnp.dot(o, w_o, preferred_element_type=jnp.float32) + b_o


def _ffn(xn, w1, b1, w2, b2):
    h = jnp.maximum(jnp.dot(xn, w1, preferred_element_type=jnp.float32) + b1, 0.0)
    return jnp.dot(h, w2, preferred_element_type=jnp.float32) + b2


# ----------------------------- fused kernel -------------------------------
def _encdec_kernel(p_ref, src_ref, tgt_ref, smask_ref, tmask_ref, out_ref):
    g = lambda name: _slab(p_ref, name)
    vmask, gones, selb = g("vmask"), g("gones"), g("selb")

    # Raw masks -> additive head-blocked biases, computed once, stay in VMEM.
    sm = jnp.broadcast_to(smask_ref[...], (B, S_TGT, S_SRC)).reshape(R_TOK, S_SRC)
    tm = tmask_ref[...].reshape(R_TOK, S_TGT)
    bias_src = _block_bias(sm, selb)       # enc self-attn & dec cross-attn
    bias_tgt = _block_bias(tm, selb)       # dec self-attn (causal)

    # ------------------------------ encoder ------------------------------
    x = src_ref[...].reshape(R_TOK, D_MODEL)
    for l in range(N_LAYERS):              # unrolled at trace time (static)
        p = f"e{l}_"
        xn = _layernorm(x, g(p + "ln1g"), g(p + "ln1b"))
        x = x + _self_attn(xn, g(p + "wqkv"), g(p + "bqkv"), g(p + "wo"),
                           g(p + "bo"), bias_src, vmask, gones)
        xn = _layernorm(x, g(p + "ln2g"), g(p + "ln2b"))
        x = x + _ffn(xn, g(p + "w1"), g(p + "b1"), g(p + "w2"), g(p + "b2"))
    memory = _layernorm(x, g("e_ng"), g("e_nb"))   # (R_TOK, D) stays in VMEM

    # ------------------------------ decoder ------------------------------
    y = tgt_ref[...].reshape(R_TOK, D_MODEL)
    for l in range(N_LAYERS):
        p = f"d{l}_"
        yn = _layernorm(y, g(p + "ln1g"), g(p + "ln1b"))
        y = y + _self_attn(yn, g(p + "wqkv_s"), g(p + "bqkv_s"), g(p + "wo_s"),
                           g(p + "bo_s"), bias_tgt, vmask, gones)
        yn = _layernorm(y, g(p + "ln2g"), g(p + "ln2b"))
        y = y + _cross_attn(yn, memory, g(p + "wq_c"), g(p + "bq_c"),
                            g(p + "wkv_c"), g(p + "bkv_c"), g(p + "wo_c"),
                            g(p + "bo_c"), bias_src, vmask, gones)
        yn = _layernorm(y, g(p + "ln3g"), g(p + "ln3b"))
        y = y + _ffn(yn, g(p + "w1"), g(p + "b1"), g(p + "w2"), g(p + "b2"))
    y = _layernorm(y, g("d_ng"), g("d_nb"))
    out_ref[...] = y.astype(out_ref.dtype)


# ----------------------------- wrapper -------------------------------------
def encoder_decoder_forward(packed, src, target, src_mask, target_mask):
    # TODO(synk): the PyTorch forward passes args to the decoder in a literally
    # inconsistent order (decoder(memory, src_mask, target, target_mask)); we
    # implement the intended Annotated-Transformer semantics: self-attend over
    # `target` (target_mask), cross-attend to encoder `memory` (src_mask).
    b, t_t, d = target.shape
    vm = pl.BlockSpec(memory_space=pltpu.MemorySpace.VMEM)   # whole array, VMEM
    out = pl.pallas_call(
        _encdec_kernel,
        out_shape=jax.ShapeDtypeStruct((b * t_t, d), jnp.float32),
        in_specs=[vm, vm, vm, vm, vm],
        out_specs=vm,
    )(packed, src, target, src_mask, target_mask)
    return out.reshape(b, t_t, d)


# ----------------------------- parameter init -----------------------------
def init_params(key):
    keys = iter(jax.random.split(key, 64))

    def w(shape):
        return jax.random.normal(next(keys), shape, jnp.float32) * 0.02

    def zeros(shape):
        return jnp.zeros(shape, jnp.float32)

    def ones(shape):
        return jnp.ones(shape, jnp.float32)

    D, F = D_MODEL, D_FF
    p = {}
    for l in range(N_LAYERS):
        pre = f"e{l}_"
        p[pre + "wqkv"], p[pre + "bqkv"] = w((D, 3 * D)), zeros((1, 3 * D))
        p[pre + "wo"], p[pre + "bo"] = w((D, D)), zeros((1, D))
        p[pre + "w1"], p[pre + "b1"] = w((D, F)), zeros((1, F))
        p[pre + "w2"], p[pre + "b2"] = w((F, D)), zeros((1, D))
        for n in ("ln1g", "ln2g"):
            p[pre + n] = ones((1, D))
        for n in ("ln1b", "ln2b"):
            p[pre + n] = zeros((1, D))
    p["e_ng"], p["e_nb"] = ones((1, D)), zeros((1, D))
    for l in range(N_LAYERS):
        pre = f"d{l}_"
        p[pre + "wqkv_s"], p[pre + "bqkv_s"] = w((D, 3 * D)), zeros((1, 3 * D))
        p[pre + "wo_s"], p[pre + "bo_s"] = w((D, D)), zeros((1, D))
        p[pre + "wq_c"], p[pre + "bq_c"] = w((D, D)), zeros((1, D))
        p[pre + "wkv_c"], p[pre + "bkv_c"] = w((D, 2 * D)), zeros((1, 2 * D))
        p[pre + "wo_c"], p[pre + "bo_c"] = w((D, D)), zeros((1, D))
        p[pre + "w1"], p[pre + "b1"] = w((D, F)), zeros((1, F))
        p[pre + "w2"], p[pre + "b2"] = w((F, D)), zeros((1, D))
        for n in ("ln1g", "ln2g", "ln3g"):
            p[pre + n] = ones((1, D))
        for n in ("ln1b", "ln2b", "ln3b"):
            p[pre + n] = zeros((1, D))
    p["d_ng"], p["d_nb"] = ones((1, D)), zeros((1, D))

    # Static attention-blocking constants (packed alongside the weights).
    p["vmask"] = jnp.kron(jnp.eye(N_HEADS, dtype=jnp.float32),
                          jnp.ones((R_TOK, D_HEAD), jnp.float32))   # (64, 32)
    p["gones"] = jnp.kron(jnp.eye(N_HEADS, dtype=jnp.float32),
                          jnp.ones((R_TOK, R_TOK), jnp.float32))    # (64, 64)
    p["selb"] = jnp.kron(jnp.eye(B, dtype=jnp.float32),
                         jnp.ones((S_TGT, S_SRC), jnp.float32))     # (16, 16)
    return p


# ----------------------------- main ---------------------------------------
if __name__ == "__main__":
    root = jax.random.PRNGKey(0)
    k_params, k_src, k_tgt = jax.random.split(root, 3)
    params = init_params(k_params)
    packed = pack_params(params)   # one lane-dense (PACK_ROWS, 128) f32 buffer

    # src / target are already-embedded sequences (the forward bypasses the
    # src_embed / target_embed submodules and never calls the generator).
    src = jax.random.normal(k_src, (B, S_SRC, D_MODEL), jnp.float32)
    target = jax.random.normal(k_tgt, (B, S_TGT, D_MODEL), jnp.float32)
    src_mask = jnp.ones((B, 1, S_SRC), jnp.float32)                  # padding mask
    causal = jnp.tril(jnp.ones((S_TGT, S_TGT), jnp.float32))         # subsequent mask
    target_mask = jnp.broadcast_to(causal[None], (B, S_TGT, S_TGT))

    fwd = jax.jit(encoder_decoder_forward)
    out = fwd(packed, src, target, src_mask, target_mask)
    out = jax.block_until_ready(out)
    assert out.shape == (B, S_TGT, D_MODEL)
    assert bool(jnp.all(jnp.isfinite(out)))
    print("KERNEL_OK")
</pallas_src>

<mosaic_0001>
module attributes {stable_mosaic.version = 11 : i64} {
  func.func @_encdec_kernel(%arg0: memref<1344x128xf32, #tpu.memory_space<vmem>>, %arg1: memref<2x8x32xf32, #tpu.memory_space<vmem>>, %arg2: memref<2x8x32xf32, #tpu.memory_space<vmem>>, %arg3: memref<2x1x8xf32, #tpu.memory_space<vmem>>, %arg4: memref<2x8x8xf32, #tpu.memory_space<vmem>>, %arg5: memref<16x32xf32, #tpu.memory_space<vmem>>) attributes {dimension_semantics = [], scalar_prefetch = 0 : i64, scratch_operands = 0 : i64, tpu.core_type = #tpu.core_type<tc>} {
    %c1200 = arith.constant 1200 : index
    %c0 = arith.constant 0 : index
    %0 = vector.load %arg0[%c1200, %c0] : memref<1344x128xf32, #tpu.memory_space<vmem>>, vector<64x32xf32>
    %c1264 = arith.constant 1264 : index
    %c0_0 = arith.constant 0 : index
    %1 = vector.load %arg0[%c1264, %c0_0] : memref<1344x128xf32, #tpu.memory_space<vmem>>, vector<64x64xf32>
    %c1328 = arith.constant 1328 : index
    %c0_1 = arith.constant 0 : index
    %2 = vector.load %arg0[%c1328, %c0_1] : memref<1344x128xf32, #tpu.memory_space<vmem>>, vector<16x16xf32>
    %c0_2 = arith.constant 0 : index
    %c0_3 = arith.constant 0 : index
    %c0_4 = arith.constant 0 : index
    %3 = vector.load %arg3[%c0_2, %c0_3, %c0_4] : memref<2x1x8xf32, #tpu.memory_space<vmem>>, vector<2x1x8xf32>
    %4 = vector.shape_cast %3 : vector<2x1x8xf32> to vector<2x1x8xf32>
    %5 = vector.broadcast %4 : vector<2x1x8xf32> to vector<2x8x8xf32>
    %6 = vector.shape_cast %5 : vector<2x8x8xf32> to vector<16x8xf32>
    %c0_5 = arith.constant 0 : index
    %c0_6 = arith.constant 0 : index
    %c0_7 = arith.constant 0 : index
    %7 = vector.load %arg4[%c0_5, %c0_6, %c0_7] : memref<2x8x8xf32, #tpu.memory_space<vmem>>, vector<2x8x8xf32>
    %8 = vector.shape_cast %7 : vector<2x8x8xf32> to vector<16x8xf32>
    %9 = tpu.concatenate %6, %6 in 1 : vector<16x8xf32>, vector<16x8xf32> -> vector<16x16xf32>
    %10 = arith.mulf %9, %2 : vector<16x16xf32>
    %cst = arith.constant 1.000000e+00 : f32
    %11 = vector.broadcast %cst : f32 to vector<16x16xf32>
    %12 = arith.subf %10, %11 : vector<16x16xf32>
    %cst_8 = arith.constant 1.000000e+09 : f32
    %13 = vector.broadcast %cst_8 : f32 to vector<16x16xf32>
    %14 = arith.mulf %12, %13 : vector<16x16xf32>
    %15 = tpu.concatenate %14, %14, %14, %14 in 1 : vector<16x16xf32>, vector<16x16xf32>, vector<16x16xf32>, vector<16x16xf32> -> vector<16x64xf32>
    %16 = tpu.concatenate %8, %8 in 1 : vector<16x8xf32>, vector<16x8xf32> -> vector<16x16xf32>
    %17 = arith.mulf %16, %2 : vector<16x16xf32>
    %cst_9 = arith.constant 1.000000e+00 : f32
    %18 = vector.broadcast %cst_9 : f32 to vector<16x16xf32>
    %19 = arith.subf %17, %18 : vector<16x16xf32>
    %cst_10 = arith.constant 1.000000e+09 : f32
    %20 = vector.broadcast %cst_10 : f32 to vector<16x16xf32>
    %21 = arith.mulf %19, %20 : vector<16x16xf32>
    %22 = tpu.concatenate %21, %21, %21, %21 in 1 : vector<16x16xf32>, vector<16x16xf32>, vector<16x16xf32>, vector<16x16xf32> -> vector<16x64xf32>
    %c0_11 = arith.constant 0 : index
    %c0_12 = arith.constant 0 : index
    %c0_13 = arith.constant 0 : index
    %23 = vector.load %arg1[%c0_11, %c0_12, %c0_13] : memref<2x8x32xf32, #tpu.memory_space<vmem>>, vector<2x8x32xf32>
    %24 = vector.shape_cast %23 : vector<2x8x32xf32> to vector<16x32xf32>
    %c192 = arith.constant 192 : index
    %c0_14 = arith.constant 0 : index
    %25 = vector.load %arg0[%c192, %c0_14] : memref<1344x128xf32, #tpu.memory_space<vmem>>, vector<1x32xf32>
    %c200 = arith.constant 200 : index
    %c0_15 = arith.constant 0 : index
    %26 = vector.load %arg0[%c200, %c0_15] : memref<1344x128xf32, #tpu.memory_space<vmem>>, vector<1x32xf32>
    %cst_16 = arith.constant dense<0.000000e+00> : vector<16xf32>
    %27 = vector.multi_reduction <add>, %24, %cst_16 [1] : vector<16x32xf32> to vector<16xf32>
    %28 = vector.shape_cast %27 : vector<16xf32> to vector<16x1xf32>
    %cst_17 = arith.constant 3.200000e+01 : f32
    %29 = vector.broadcast %cst_17 : f32 to vector<16x1xf32>
    %30 = arith.divf %28, %29 : vector<16x1xf32>
    %31 = vector.broadcast %30 : vector<16x1xf32> to vector<16x32xf32>
    %32 = arith.subf %24, %31 : vector<16x32xf32>
    %33 = arith.mulf %32, %32 : vector<16x32xf32>
    %cst_18 = arith.constant dense<0.000000e+00> : vector<16xf32>
    %34 = vector.multi_reduction <add>, %33, %cst_18 [1] : vector<16x32xf32> to vector<16xf32>
    %35 = vector.shape_cast %34 : vector<16xf32> to vector<16x1xf32>
    %cst_19 = arith.constant 0.0322580636 : f32
    %36 = vector.broadcast %cst_19 : f32 to vector<16x1xf32>
    %37 = arith.mulf %35, %36 : vector<16x1xf32>
    %38 = math.sqrt %37 : vector<16x1xf32>
    %39 = vector.broadcast %25 : vector<1x32xf32> to vector<16x32xf32>
    %40 = arith.mulf %39, %32 : vector<16x32xf32>
    %cst_20 = arith.constant 9.99999997E-7 : f32
    %41 = vector.broadcast %cst_20 : f32 to vector<16x1xf32>
    %42 = arith.addf %38, %41 : vector<16x1xf32>
    %43 = vector.broadcast %42 : vector<16x1xf32> to vector<16x32xf32>
    %44 = arith.divf %40, %43 : vector<16x32xf32>
    %45 = vector.broadcast %26 : vector<1x32xf32> to vector<16x32xf32>
    %46 = arith.addf %44, %45 : vector<16x32xf32>
    %c0_21 = arith.constant 0 : index
    %c0_22 = arith.constant 0 : index
    %47 = vector.load %arg0[%c0_21, %c0_22] : memref<1344x128xf32, #tpu.memory_space<vmem>>, vector<32x96xf32>
    %c32 = arith.constant 32 : index
    %c0_23 = arith.constant 0 : index
    %48 = vector.load %arg0[%c32, %c0_23] : memref<1344x128xf32, #tpu.memory_space<vmem>>, vector<1x96xf32>
    %c40 = arith.constant 40 : index
    %c0_24 = arith.constant 0 : index
    %49 = vector.load %arg0[%c40, %c0_24] : memref<1344x128xf32, #tpu.memory_space<vmem>>, vector<32x32xf32>
    %c72 = arith.constant 72 : index
    %c0_25 = arith.constant 0 : index
    %50 = vector.load %arg0[%c72, %c0_25] : memref<1344x128xf32, #tpu.memory_space<vmem>>, vector<1x32xf32>
    %cst_26 = arith.constant dense<0.000000e+00> : vector<16x96xf32>
    %51 = tpu.matmul %46, %47, %cst_26 {dimension_numbers = #tpu.dot_dimension_numbers<[1], [0], [0], [1], [0, 0, 1, 1], [], []>} : vector<16x32xf32>, vector<32x96xf32>, vector<16x96xf32> -> vector<16x96xf32>
    %52 = vector.broadcast %48 : vector<1x96xf32> to vector<16x96xf32>
    %53 = arith.addf %51, %52 : vector<16x96xf32>
    %54 = vector.extract_strided_slice %53 {offsets = [0, 0], sizes = [16, 32], strides = [1, 1]} : vector<16x96xf32> to vector<16x32xf32>
    %55 = vector.extract_strided_slice %53 {offsets = [0, 32], sizes = [16, 32], strides = [1, 1]} : vector<16x96xf32> to vector<16x32xf32>
    %56 = vector.extract_strided_slice %53 {offsets = [0, 64], sizes = [16, 32], strides = [1, 1]} : vector<16x96xf32> to vector<16x32xf32>
    %57 = tpu.concatenate %55, %55, %55, %55 in 0 : vector<16x32xf32>, vector<16x32xf32>, vector<16x32xf32>, vector<16x32xf32> -> vector<64x32xf32>
    %58 = arith.mulf %57, %0 : vector<64x32xf32>
    %59 = tpu.concatenate %56, %56, %56, %56 in 0 : vector<16x32xf32>, vector<16x32xf32>, vector<16x32xf32>, vector<16x32xf32> -> vector<64x32xf32>
    %60 = arith.mulf %59, %0 : vector<64x32xf32>
    "tpu.trace_start"() <{level = 10 : i32, message = "rd,jd->rj"}> : () -> ()
    %cst_27 = arith.constant dense<0.000000e+00> : vector<16x64xf32>
    %61 = tpu.matmul %54, %58, %cst_27 {dimension_numbers = #tpu.dot_dimension_numbers<[1], [1], [0], [0], [0, 0, 1, 0], [], []>} : vector<16x32xf32>, vector<64x32xf32>, vector<16x64xf32> -> vector<16x64xf32>
    "tpu.trace_stop"() : () -> ()
    %cst_28 = arith.constant 0.353553385 : f32
    %62 = vector.broadcast %cst_28 : f32 to vector<16x64xf32>
    %63 = arith.mulf %61, %62 : vector<16x64xf32>
    %64 = arith.addf %63, %15 : vector<16x64xf32>
    %cst_29 = arith.constant dense<0xFF800000> : vector<16xf32>
    %65 = vector.multi_reduction <maximumf>, %64, %cst_29 [1] : vector<16x64xf32> to vector<16xf32>
    %66 = vector.shape_cast %65 : vector<16xf32> to vector<16x1xf32>
    %67 = vector.broadcast %66 : vector<16x1xf32> to vector<16x64xf32>
    %68 = arith.subf %64, %67 : vector<16x64xf32>
    %69 = math.exp %68 : vector<16x64xf32>
    %cst_30 = arith.constant dense<0.000000e+00> : vector<16x64xf32>
    %70 = tpu.matmul %69, %1, %cst_30 {dimension_numbers = #tpu.dot_dimension_numbers<[1], [0], [0], [1], [0, 0, 1, 1], [], []>} : vector<16x64xf32>, vector<64x64xf32>, vector<16x64xf32> -> vector<16x64xf32>
    %71 = tpu.reciprocal %70 {approx = true} : vector<16x64xf32> -> vector<16x64xf32>
    %72 = arith.mulf %69, %71 : vector<16x64xf32>
    %cst_31 = arith.constant dense<0.000000e+00> : vector<16x32xf32>
    %73 = tpu.matmul %72, %60, %cst_31 {dimension_numbers = #tpu.dot_dimension_numbers<[1], [0], [0], [1], [0, 0, 1, 1], [], []>} : vector<16x64xf32>, vector<64x32xf32>, vector<16x32xf32> -> vector<16x32xf32>
    %cst_32 = arith.constant dense<0.000000e+00> : vector<16x32xf32>
    %74 = tpu.matmul %73, %49, %cst_32 {dimension_numbers = #tpu.dot_dimension_numbers<[1], [0], [0], [1], [0, 0, 1, 1], [], []>} : vector<16x32xf32>, vector<32x32xf32>, vector<16x32xf32> -> vector<16x32xf32>
    %75 = vector.broadcast %50 : vector<1x32xf32> to vector<16x32xf32>
    %76 = arith.addf %74, %75 : vector<16x32xf32>
    %77 = arith.addf %24, %76 : vector<16x32xf32>
    %c208 = arith.constant 208 : index
    %c0_33 = arith.constant 0 : index
    %78 = vector.load %arg0[%c208, %c0_33] : memref<1344x128xf32, #tpu.memory_space<vmem>>, vector<1x32xf32>
    %c216 = arith.constant 216 : index
    %c0_34 = arith.constant 0 : index
    %79 = vector.load %arg0[%c216, %c0_34] : memref<1344x128xf32, #tpu.memory_space<vmem>>, vector<1x32xf32>
    %cst_35 = arith.constant dense<0.000000e+00> : vector<16xf32>
    %80 = vector.multi_reduction <add>, %77, %cst_35 [1] : vector<16x32xf32> to vector<16xf32>
    %81 = vector.shape_cast %80 : vector<16xf32> to vector<16x1xf32>
    %cst_36 = arith.constant 3.200000e+01 : f32
    %82 = vector.broadcast %cst_36 : f32 to vector<16x1xf32>
    %83 = arith.divf %81, %82 : vector<16x1xf32>
    %84 = vector.broadcast %83 : vector<16x1xf32> to vector<16x32xf32>
    %85 = arith.subf %77, %84 : vector<16x32xf32>
    %86 = arith.mulf %85, %85 : vector<16x32xf32>
    %cst_37 = arith.constant dense<0.000000e+00> : vector<16xf32>
    %87 = vector.multi_reduction <add>, %86, %cst_37 [1] : vector<16x32xf32> to vector<16xf32>
    %88 = vector.shape_cast %87 : vector<16xf32> to vector<16x1xf32>
    %cst_38 = arith.constant 0.0322580636 : f32
    %89 = vector.broadcast %cst_38 : f32 to vector<16x1xf32>
    %90 = arith.mulf %88, %89 : vector<16x1xf32>
    %91 = math.sqrt %90 : vector<16x1xf32>
    %92 = vector.broadcast %78 : vector<1x32xf32> to vector<16x32xf32>
    %93 = arith.mulf %92, %85 : vector<16x32xf32>
    %cst_39 = arith.constant 9.99999997E-7 : f32
    %94 = vector.broadcast %cst_39 : f32 to vector<16x1xf32>
    %95 = arith.addf %91, %94 : vector<16x1xf32>
    %96 = vector.broadcast %95 : vector<16x1xf32> to vector<16x32xf32>
    %97 = arith.divf %93, %96 : vector<16x32xf32>
    %98 = vector.broadcast %79 : vector<1x32xf32> to vector<16x32xf32>
    %99 = arith.addf %97, %98 : vector<16x32xf32>
    %c80 = arith.constant 80 : index
    %c0_40 = arith.constant 0 : index
    %100 = vector.load %arg0[%c80, %c0_40] : memref<1344x128xf32, #tpu.memory_space<vmem>>, vector<32x64xf32>
    %c112 = arith.constant 112 : index
    %c0_41 = arith.constant 0 : index
    %101 = vector.load %arg0[%c112, %c0_41] : memref<1344x128xf32, #tpu.memory_space<vmem>>, vector<1x64xf32>
    %c120 = arith.constant 120 : index
    %c0_42 = arith.constant 0 : index
    %102 = vector.load %arg0[%c120, %c0_42] : memref<1344x128xf32, #tpu.memory_space<vmem>>, vector<64x32xf32>
    %c184 = arith.constant 184 : index
    %c0_43 = arith.constant 0 : index
    %103 = vector.load %arg0[%c184, %c0_43] : memref<1344x128xf32, #tpu.memory_space<vmem>>, vector<1x32xf32>
    %cst_44 = arith.constant dense<0.000000e+00> : vector<16x64xf32>
    %104 = tpu.matmul %99, %100, %cst_44 {dimension_numbers = #tpu.dot_dimension_numbers<[1], [0], [0], [1], [0, 0, 1, 1], [], []>} : vector<16x32xf32>, vector<32x64xf32>, vector<16x64xf32> -> vector<16x64xf32>
    %105 = vector.broadcast %101 : vector<1x64xf32> to vector<16x64xf32>
    %106 = arith.addf %104, %105 : vector<16x64xf32>
    %cst_45 = arith.constant 0.000000e+00 : f32
    %107 = vector.broadcast %cst_45 : f32 to vector<16x64xf32>
    %108 = arith.maximumf %106, %107 : vector<16x64xf32>
    %cst_46 = arith.constant dense<0.000000e+00> : vector<16x32xf32>
    %109 = tpu.matmul %108, %102, %cst_46 {dimension_numbers = #tpu.dot_dimension_numbers<[1], [0], [0], [1], [0, 0, 1, 1], [], []>} : vector<16x64xf32>, vector<64x32xf32>, vector<16x32xf32> -> vector<16x32xf32>
    %110 = vector.broadcast %103 : vector<1x32xf32> to vector<16x32xf32>
    %111 = arith.addf %109, %110 : vector<16x32xf32>
    %112 = arith.addf %77, %111 : vector<16x32xf32>
    %c416 = arith.constant 416 : index
    %c0_47 = arith.constant 0 : index
    %113 = vector.load %arg0[%c416, %c0_47] : memref<1344x128xf32, #tpu.memory_space<vmem>>, vector<1x32xf32>
    %c424 = arith.constant 424 : index
    %c0_48 = arith.constant 0 : index
    %114 = vector.load %arg0[%c424, %c0_48] : memref<1344x128xf32, #tpu.memory_space<vmem>>, vector<1x32xf32>
    %cst_49 = arith.constant dense<0.000000e+00> : vector<16xf32>
    %115 = vector.multi_reduction <add>, %112, %cst_49 [1] : vector<16x32xf32> to vector<16xf32>
    %116 = vector.shape_cast %115 : vector<16xf32> to vector<16x1xf32>
    %cst_50 = arith.constant 3.200000e+01 : f32
    %117 = vector.broadcast %cst_50 : f32 to vector<16x1xf32>
    %118 = arith.divf %116, %117 : vector<16x1xf32>
    %119 = vector.broadcast %118 : vector<16x1xf32> to vector<16x32xf32>
    %120 = arith.subf %112, %119 : vector<16x32xf32>
    %121 = arith.mulf %120, %120 : vector<16x32xf32>
    %cst_51 = arith.constant dense<0.000000e+00> : vector<16xf32>
    %122 = vector.multi_reduction <add>, %121, %cst_51 [1] : vector<16x32xf32> to vector<16xf32>
    %123 = vector.shape_cast %122 : vector<16xf32> to vector<16x1xf32>
    %cst_52 = arith.constant 0.0322580636 : f32
    %124 = vector.broadcast %cst_52 : f32 to vector<16x1xf32>
    %125 = arith.mulf %123, %124 : vector<16x1xf32>
    %126 = math.sqrt %125 : vector<16x1xf32>
    %127 = vector.broadcast %113 : vector<1x32xf32> to vector<16x32xf32>
    %128 = arith.mulf %127, %120 : vector<16x32xf32>
    %cst_53 = arith.constant 9.99999997E-7 : f32
    %129 = vector.broadcast %cst_53 : f32 to vector<16x1xf32>
    %130 = arith.addf %126, %129 : vector<16x1xf32>
    %131 = vector.broadcast %130 : vector<16x1xf32> to vector<16x32xf32>
    %132 = arith.divf %128, %131 : vector<16x32xf32>
    %133 = vector.broadcast %114 : vector<1x32xf32> to vector<16x32xf32>
    %134 = arith.addf %132, %133 : vector<16x32xf32>
    %c224 = arith.constant 224 : index
    %c0_54 = arith.constant 0 : index
    %135 = vector.load %arg0[%c224, %c0_54] : memref<1344x128xf32, #tpu.memory_space<vmem>>, vector<32x96xf32>
    %c256 = arith.constant 256 : index
    %c0_55 = arith.constant 0 : index
    %136 = vector.load %arg0[%c256, %c0_55] : memref<1344x128xf32, #tpu.memory_space<vmem>>, vector<1x96xf32>
    %c264 = arith.constant 264 : index
    %c0_56 = arith.constant 0 : index
    %137 = vector.load %arg0[%c264, %c0_56] : memref<1344x128xf32, #tpu.memory_space<vmem>>, vector<32x32xf32>
    %c296 = arith.constant 296 : index
    %c0_57 = arith.constant 0 : index
    %138 = vector.load %arg0[%c296, %c0_57] : memref<1344x128xf32, #tpu.memory_space<vmem>>, vector<1x32xf32>
    %cst_58 = arith.constant dense<0.000000e+00> : vector<16x96xf32>
    %139 = tpu.matmul %134, %135, %cst_58 {dimension_numbers = #tpu.dot_dimension_numbers<[1], [0], [0], [1], [0, 0, 1, 1], [], []>} : vector<16x32xf32>, vector<32x96xf32>, vector<16x96xf32> -> vector<16x96xf32>
    %140 = vector.broadcast %136 : vector<1x96xf32> to vector<16x96xf32>
    %141 = arith.addf %139, %140 : vector<16x96xf32>
    %142 = vector.extract_strided_slice %141 {offsets = [0, 0], sizes = [16, 32], strides = [1, 1]} : vector<16x96xf32> to vector<16x32xf32>
    %143 = vector.extract_strided_slice %141 {offsets = [0, 32], sizes = [16, 32], strides = [1, 1]} : vector<16x96xf32> to vector<16x32xf32>
    %144 = vector.extract_strided_slice %141 {offsets = [0, 64], sizes = [16, 32], strides = [1, 1]} : vector<16x96xf32> to vector<16x32xf32>
    %145 = tpu.concatenate %143, %143, %143, %143 in 0 : vector<16x32xf32>, vector<16x32xf32>, vector<16x32xf32>, vector<16x32xf32> -> vector<64x32xf32>
    %146 = arith.mulf %145, %0 : vector<64x32xf32>
    %147 = tpu.concatenate %144, %144, %144, %144 in 0 : vector<16x32xf32>, vector<16x32xf32>, vector<16x32xf32>, vector<16x32xf32> -> vector<64x32xf32>
    %148 = arith.mulf %147, %0 : vector<64x32xf32>
    "tpu.trace_start"() <{level = 10 : i32, message = "rd,jd->rj"}> : () -> ()
    %cst_59 = arith.constant dense<0.000000e+00> : vector<16x64xf32>
    %149 = tpu.matmul %142, %146, %cst_59 {dimension_numbers = #tpu.dot_dimension_numbers<[1], [1], [0], [0], [0, 0, 1, 0], [], []>} : vector<16x32xf32>, vector<64x32xf32>, vector<16x64xf32> -> vector<16x64xf32>
    "tpu.trace_stop"() : () -> ()
    %cst_60 = arith.constant 0.353553385 : f32
    %150 = vector.broadcast %cst_60 : f32 to vector<16x64xf32>
    %151 = arith.mulf %149, %150 : vector<16x64xf32>
    %152 = arith.addf %151, %15 : vector<16x64xf32>
    %cst_61 = arith.constant dense<0xFF800000> : vector<16xf32>
    %153 = vector.multi_reduction <maximumf>, %152, %cst_61 [1] : vector<16x64xf32> to vector<16xf32>
    %154 = vector.shape_cast %153 : vector<16xf32> to vector<16x1xf32>
    %155 = vector.broadcast %154 : vector<16x1xf32> to vector<16x64xf32>
    %156 = arith.subf %152, %155 : vector<16x64xf32>
    %157 = math.exp %156 : vector<16x64xf32>
    %cst_62 = arith.constant dense<0.000000e+00> : vector<16x64xf32>
    %158 = tpu.matmul %157, %1, %cst_62 {dimension_numbers = #tpu.dot_dimension_numbers<[1], [0], [0], [1], [0, 0, 1, 1], [], []>} : vector<16x64xf32>, vector<64x64xf32>, vector<16x64xf32> -> vector<16x64xf32>
    %159 = tpu.reciprocal %158 {approx = true} : vector<16x64xf32> -> vector<16x64xf32>
    %160 = arith.mulf %157, %159 : vector<16x64xf32>
    %cst_63 = arith.constant dense<0.000000e+00> : vector<16x32xf32>
    %161 = tpu.matmul %160, %148, %cst_63 {dimension_numbers = #tpu.dot_dimension_numbers<[1], [0], [0], [1], [0, 0, 1, 1], [], []>} : vector<16x64xf32>, vector<64x32xf32>, vector<16x32xf32> -> vector<16x32xf32>
    %cst_64 = arith.constant dense<0.000000e+00> : vector<16x32xf32>
    %162 = tpu.matmul %161, %137, %cst_64 {dimension_numbers = #tpu.dot_dimension_numbers<[1], [0], [0], [1], [0, 0, 1, 1], [], []>} : vector<16x32xf32>, vector<32x32xf32>, vector<16x32xf32> -> vector<16x32xf32>
    %163 = vector.broadcast %138 : vector<1x32xf32> to vector<16x32xf32>
    %164 = arith.addf %162, %163 : vector<16x32xf32>
    %165 = arith.addf %112, %164 : vector<16x32xf32>
    %c432 = arith.constant 432 : index
    %c0_65 = arith.constant 0 : index
    %166 = vector.load %arg0[%c432, %c0_65] : memref<1344x128xf32, #tpu.memory_space<vmem>>, vector<1x32xf32>
    %c440 = arith.constant 440 : index
    %c0_66 = arith.constant 0 : index
    %167 = vector.load %arg0[%c440, %c0_66] : memref<1344x128xf32, #tpu.memory_space<vmem>>, vector<1x32xf32>
    %cst_67 = arith.constant dense<0.000000e+00> : vector<16xf32>
    %168 = vector.multi_reduction <add>, %165, %cst_67 [1] : vector<16x32xf32> to vector<16xf32>
    %169 = vector.shape_cast %168 : vector<16xf32> to vector<16x1xf32>
    %cst_68 = arith.constant 3.200000e+01 : f32
    %170 = vector.broadcast %cst_68 : f32 to vector<16x1xf32>
    %171 = arith.divf %169, %170 : vector<16x1xf32>
    %172 = vector.broadcast %171 : vector<16x1xf32> to vector<16x32xf32>
    %173 = arith.subf %165, %172 : vector<16x32xf32>
    %174 = arith.mulf %173, %173 : vector<16x32xf32>
    %cst_69 = arith.constant dense<0.000000e+00> : vector<16xf32>
    %175 = vector.multi_reduction <add>, %174, %cst_69 [1] : vector<16x32xf32> to vector<16xf32>
    %176 = vector.shape_cast %175 : vector<16xf32> to vector<16x1xf32>
    %cst_70 = arith.constant 0.0322580636 : f32
    %177 = vector.broadcast %cst_70 : f32 to vector<16x1xf32>
    %178 = arith.mulf %176, %177 : vector<16x1xf32>
    %179 = math.sqrt %178 : vector<16x1xf32>
    %180 = vector.broadcast %166 : vector<1x32xf32> to vector<16x32xf32>
    %181 = arith.mulf %180, %173 : vector<16x32xf32>
    %cst_71 = arith.constant 9.99999997E-7 : f32
    %182 = vector.broadcast %cst_71 : f32 to vector<16x1xf32>
    %183 = arith.addf %179, %182 : vector<16x1xf32>
    %184 = vector.broadcast %183 : vector<16x1xf32> to vector<16x32xf32>
    %185 = arith.divf %181, %184 : vector<16x32xf32>
    %186 = vector.broadcast %167 : vector<1x32xf32> to vector<16x32xf32>
    %187 = arith.addf %185, %186 : vector<16x32xf32>
    %c304 = arith.constant 304 : index
    %c0_72 = arith.constant 0 : index
    %188 = vector.load %arg0[%c304, %c0_72] : memref<1344x128xf32, #tpu.memory_space<vmem>>, vector<32x64xf32>
    %c336 = arith.constant 336 : index
    %c0_73 = arith.constant 0 : index
    %189 = vector.load %arg0[%c336, %c0_73] : memref<1344x128xf32, #tpu.memory_space<vmem>>, vector<1x64xf32>
    %c344 = arith.constant 344 : index
    %c0_74 = arith.constant 0 : index
    %190 = vector.load %arg0[%c344, %c0_74] : memref<1344x128xf32, #tpu.memory_space<vmem>>, vector<64x32xf32>
    %c408 = arith.constant 408 : index
    %c0_75 = arith.constant 0 : index
    %191 = vector.load %arg0[%c408, %c0_75] : memref<1344x128xf32, #tpu.memory_space<vmem>>, vector<1x32xf32>
    %cst_76 = arith.constant dense<0.000000e+00> : vector<16x64xf32>
    %192 = tpu.matmul %187, %188, %cst_76 {dimension_numbers = #tpu.dot_dimension_numbers<[1], [0], [0], [1], [0, 0, 1, 1], [], []>} : vector<16x32xf32>, vector<32x64xf32>, vector<16x64xf32> -> vector<16x64xf32>
    %193 = vector.broadcast %189 : vector<1x64xf32> to vector<16x64xf32>
    %194 = arith.addf %192, %193 : vector<16x64xf32>
    %cst_77 = arith.constant 0.000000e+00 : f32
    %195 = vector.broadcast %cst_77 : f32 to vector<16x64xf32>
    %196 = arith.maximumf %194, %195 : vector<16x64xf32>
    %cst_78 = arith.constant dense<0.000000e+00> : vector<16x32xf32>
    %197 = tpu.matmul %196, %190, %cst_78 {dimension_numbers = #tpu.dot_dimension_numbers<[1], [0], [0], [1], [0, 0, 1, 1], [], []>} : vector<16x64xf32>, vector<64x32xf32>, vector<16x32xf32> -> vector<16x32xf32>
    %198 = vector.broadcast %191 : vector<1x32xf32> to vector<16x32xf32>
    %199 = arith.addf %197, %198 : vector<16x32xf32>
    %200 = arith.addf %165, %199 : vector<16x32xf32>
    %c448 = arith.constant 448 : index
    %c0_79 = arith.constant 0 : index
    %201 = vector.load %arg0[%c448, %c0_79] : memref<1344x128xf32, #tpu.memory_space<vmem>>, vector<1x32xf32>
    %c456 = arith.constant 456 : index
    %c0_80 = arith.constant 0 : index
    %202 = vector.load %arg0[%c456, %c0_80] : memref<1344x128xf32, #tpu.memory_space<vmem>>, vector<1x32xf32>
    %cst_81 = arith.constant dense<0.000000e+00> : vector<16xf32>
    %203 = vector.multi_reduction <add>, %200, %cst_81 [1] : vector<16x32xf32> to vector<16xf32>
    %204 = vector.shape_cast %203 : vector<16xf32> to vector<16x1xf32>
    %cst_82 = arith.constant 3.200000e+01 : f32
    %205 = vector.broadcast %cst_82 : f32 to vector<16x1xf32>
    %206 = arith.divf %204, %205 : vector<16x1xf32>
    %207 = vector.broadcast %206 : vector<16x1xf32> to vector<16x32xf32>
    %208 = arith.subf %200, %207 : vector<16x32xf32>
    %209 = arith.mulf %208, %208 : vector<16x32xf32>
    %cst_83 = arith.constant dense<0.000000e+00> : vector<16xf32>
    %210 = vector.multi_reduction <add>, %209, %cst_83 [1] : vector<16x32xf32> to vector<16xf32>
    %211 = vector.shape_cast %210 : vector<16xf32> to vector<16x1xf32>
    %cst_84 = arith.constant 0.0322580636 : f32
    %212 = vector.broadcast %cst_84 : f32 to vector<16x1xf32>
    %213 = arith.mulf %211, %212 : vector<16x1xf32>
    %214 = math.sqrt %213 : vector<16x1xf32>
    %215 = vector.broadcast %201 : vector<1x32xf32> to vector<16x32xf32>
    %216 = arith.mulf %215, %208 : vector<16x32xf32>
    %cst_85 = arith.constant 9.99999997E-7 : f32
    %217 = vector.broadcast %cst_85 : f32 to vector<16x1xf32>
    %218 = arith.addf %214, %217 : vector<16x1xf32>
    %219 = vector.broadcast %218 : vector<16x1xf32> to vector<16x32xf32>
    %220 = arith.divf %216, %219 : vector<16x32xf32>
    %221 = vector.broadcast %202 : vector<1x32xf32> to vector<16x32xf32>
    %222 = arith.addf %220, %221 : vector<16x32xf32>
    %c0_86 = arith.constant 0 : index
    %c0_87 = arith.constant 0 : index
    %c0_88 = arith.constant 0 : index
    %223 = vector.load %arg2[%c0_86, %c0_87, %c0_88] : memref<2x8x32xf32, #tpu.memory_space<vmem>>, vector<2x8x32xf32>
    %224 = vector.shape_cast %223 : vector<2x8x32xf32> to vector<16x32xf32>
    %c776 = arith.constant 776 : index
    %c0_89 = arith.constant 0 : index
    %225 = vector.load %arg0[%c776, %c0_89] : memref<1344x128xf32, #tpu.memory_space<vmem>>, vector<1x32xf32>
    %c784 = arith.constant 784 : index
    %c0_90 = arith.constant 0 : index
    %226 = vector.load %arg0[%c784, %c0_90] : memref<1344x128xf32, #tpu.memory_space<vmem>>, vector<1x32xf32>
    %cst_91 = arith.constant dense<0.000000e+00> : vector<16xf32>
    %227 = vector.multi_reduction <add>, %224, %cst_91 [1] : vector<16x32xf32> to vector<16xf32>
    %228 = vector.shape_cast %227 : vector<16xf32> to vector<16x1xf32>
    %cst_92 = arith.constant 3.200000e+01 : f32
    %229 = vector.broadcast %cst_92 : f32 to vector<16x1xf32>
    %230 = arith.divf %228, %229 : vector<16x1xf32>
    %231 = vector.broadcast %230 : vector<16x1xf32> to vector<16x32xf32>
    %232 = arith.subf %224, %231 : vector<16x32xf32>
    %233 = arith.mulf %232, %232 : vector<16x32xf32>
    %cst_93 = arith.constant dense<0.000000e+00> : vector<16xf32>
    %234 = vector.multi_reduction <add>, %233, %cst_93 [1] : vector<16x32xf32> to vector<16xf32>
    %235 = vector.shape_cast %234 : vector<16xf32> to vector<16x1xf32>
    %cst_94 = arith.constant 0.0322580636 : f32
    %236 = vector.broadcast %cst_94 : f32 to vector<16x1xf32>
    %237 = arith.mulf %235, %236 : vector<16x1xf32>
    %238 = math.sqrt %237 : vector<16x1xf32>
    %239 = vector.broadcast %225 : vector<1x32xf32> to vector<16x32xf32>
    %240 = arith.mulf %239, %232 : vector<16x32xf32>
    %cst_95 = arith.constant 9.99999997E-7 : f32
    %241 = vector.broadcast %cst_95 : f32 to vector<16x1xf32>
    %242 = arith.addf %238, %241 : vector<16x1xf32>
    %243 = vector.broadcast %242 : vector<16x1xf32> to vector<16x32xf32>
    %244 = arith.divf %240, %243 : vector<16x32xf32>
    %245 = vector.broadcast %226 : vector<1x32xf32> to vector<16x32xf32>
    %246 = arith.addf %244, %245 : vector<16x32xf32>
    %c464 = arith.constant 464 : index
    %c0_96 = arith.constant 0 : index
    %247 = vector.load %arg0[%c464, %c0_96] : memref<1344x128xf32, #tpu.memory_space<vmem>>, vector<32x96xf32>
    %c496 = arith.constant 496 : index
    %c0_97 = arith.constant 0 : index
    %248 = vector.load %arg0[%c496, %c0_97] : memref<1344x128xf32, #tpu.memory_space<vmem>>, vector<1x96xf32>
    %c504 = arith.constant 504 : index
    %c0_98 = arith.constant 0 : index
    %249 = vector.load %arg0[%c504, %c0_98] : memref<1344x128xf32, #tpu.memory_space<vmem>>, vector<32x32xf32>
    %c536 = arith.constant 536 : index
    %c0_99 = arith.constant 0 : index
    %250 = vector.load %arg0[%c536, %c0_99] : memref<1344x128xf32, #tpu.memory_space<vmem>>, vector<1x32xf32>
    %cst_100 = arith.constant dense<0.000000e+00> : vector<16x96xf32>
    %251 = tpu.matmul %246, %247, %cst_100 {dimension_numbers = #tpu.dot_dimension_numbers<[1], [0], [0], [1], [0, 0, 1, 1], [], []>} : vector<16x32xf32>, vector<32x96xf32>, vector<16x96xf32> -> vector<16x96xf32>
    %252 = vector.broadcast %248 : vector<1x96xf32> to vector<16x96xf32>
    %253 = arith.addf %251, %252 : vector<16x96xf32>
    %254 = vector.extract_strided_slice %253 {offsets = [0, 0], sizes = [16, 32], strides = [1, 1]} : vector<16x96xf32> to vector<16x32xf32>
    %255 = vector.extract_strided_slice %253 {offsets = [0, 32], sizes = [16, 32], strides = [1, 1]} : vector<16x96xf32> to vector<16x32xf32>
    %256 = vector.extract_strided_slice %253 {offsets = [0, 64], sizes = [16, 32], strides = [1, 1]} : vector<16x96xf32> to vector<16x32xf32>
    %257 = tpu.concatenate %255, %255, %255, %255 in 0 : vector<16x32xf32>, vector<16x32xf32>, vector<16x32xf32>, vector<16x32xf32> -> vector<64x32xf32>
    %258 = arith.mulf %257, %0 : vector<64x32xf32>
    %259 = tpu.concatenate %256, %256, %256, %256 in 0 : vector<16x32xf32>, vector<16x32xf32>, vector<16x32xf32>, vector<16x32xf32> -> vector<64x32xf32>
    %260 = arith.mulf %259, %0 : vector<64x32xf32>
    "tpu.trace_start"() <{level = 10 : i32, message = "rd,jd->rj"}> : () -> ()
    %cst_101 = arith.constant dense<0.000000e+00> : vector<16x64xf32>
    %261 = tpu.matmul %254, %258, %cst_101 {dimension_numbers = #tpu.dot_dimension_numbers<[1], [1], [0], [0], [0, 0, 1, 0], [], []>} : vector<16x32xf32>, vector<64x32xf32>, vector<16x64xf32> -> vector<16x64xf32>
    "tpu.trace_stop"() : () -> ()
    %cst_102 = arith.constant 0.353553385 : f32
    %262 = vector.broadcast %cst_102 : f32 to vector<16x64xf32>
    %263 = arith.mulf %261, %262 : vector<16x64xf32>
    %264 = arith.addf %263, %22 : vector<16x64xf32>
    %cst_103 = arith.constant dense<0xFF800000> : vector<16xf32>
    %265 = vector.multi_reduction <maximumf>, %264, %cst_103 [1] : vector<16x64xf32> to vector<16xf32>
    %266 = vector.shape_cast %265 : vector<16xf32> to vector<16x1xf32>
    %267 = vector.broadcast %266 : vector<16x1xf32> to vector<16x64xf32>
    %268 = arith.subf %264, %267 : vector<16x64xf32>
    %269 = math.exp %268 : vector<16x64xf32>
    %cst_104 = arith.constant dense<0.000000e+00> : vector<16x64xf32>
    %270 = tpu.matmul %269, %1, %cst_104 {dimension_numbers = #tpu.dot_dimension_numbers<[1], [0], [0], [1], [0, 0, 1, 1], [], []>} : vector<16x64xf32>, vector<64x64xf32>, vector<16x64xf32> -> vector<16x64xf32>
    %271 = tpu.reciprocal %270 {approx = true} : vector<16x64xf32> -> vector<16x64xf32>
    %272 = arith.mulf %269, %271 : vector<16x64xf32>
    %cst_105 = arith.constant dense<0.000000e+00> : vector<16x32xf32>
    %273 = tpu.matmul %272, %260, %cst_105 {dimension_numbers = #tpu.dot_dimension_numbers<[1], [0], [0], [1], [0, 0, 1, 1], [], []>} : vector<16x64xf32>, vector<64x32xf32>, vector<16x32xf32> -> vector<16x32xf32>
    %cst_106 = arith.constant dense<0.000000e+00> : vector<16x32xf32>
    %274 = tpu.matmul %273, %249, %cst_106 {dimension_numbers = #tpu.dot_dimension_numbers<[1], [0], [0], [1], [0, 0, 1, 1], [], []>} : vector<16x32xf32>, vector<32x32xf32>, vector<16x32xf32> -> vector<16x32xf32>
    %275 = vector.broadcast %250 : vector<1x32xf32> to vector<16x32xf32>
    %276 = arith.addf %274, %275 : vector<16x32xf32>
    %277 = arith.addf %224, %276 : vector<16x32xf32>
    %c792 = arith.constant 792 : index
    %c0_107 = arith.constant 0 : index
    %278 = vector.load %arg0[%c792, %c0_107] : memref<1344x128xf32, #tpu.memory_space<vmem>>, vector<1x32xf32>
    %c800 = arith.constant 800 : index
    %c0_108 = arith.constant 0 : index
    %279 = vector.load %arg0[%c800, %c0_108] : memref<1344x128xf32, #tpu.memory_space<vmem>>, vector<1x32xf32>
    %cst_109 = arith.constant dense<0.000000e+00> : vector<16xf32>
    %280 = vector.multi_reduction <add>, %277, %cst_109 [1] : vector<16x32xf32> to vector<16xf32>
    %281 = vector.shape_cast %280 : vector<16xf32> to vector<16x1xf32>
    %cst_110 = arith.constant 3.200000e+01 : f32
    %282 = vector.broadcast %cst_110 : f32 to vector<16x1xf32>
    %283 = arith.divf %281, %282 : vector<16x1xf32>
    %284 = vector.broadcast %283 : vector<16x1xf32> to vector<16x32xf32>
    %285 = arith.subf %277, %284 : vector<16x32xf32>
    %286 = arith.mulf %285, %285 : vector<16x32xf32>
    %cst_111 = arith.constant dense<0.000000e+00> : vector<16xf32>
    %287 = vector.multi_reduction <add>, %286, %cst_111 [1] : vector<16x32xf32> to vector<16xf32>
    %288 = vector.shape_cast %287 : vector<16xf32> to vector<16x1xf32>
    %cst_112 = arith.constant 0.0322580636 : f32
    %289 = vector.broadcast %cst_112 : f32 to vector<16x1xf32>
    %290 = arith.mulf %288, %289 : vector<16x1xf32>
    %291 = math.sqrt %290 : vector<16x1xf32>
    %292 = vector.broadcast %278 : vector<1x32xf32> to vector<16x32xf32>
    %293 = arith.mulf %292, %285 : vector<16x32xf32>
    %cst_113 = arith.constant 9.99999997E-7 : f32
    %294 = vector.broadcast %cst_113 : f32 to vector<16x1xf32>
    %295 = arith.addf %291, %294 : vector<16x1xf32>
    %296 = vector.broadcast %295 : vector<16x1xf32> to vector<16x32xf32>
    %297 = arith.divf %293, %296 : vector<16x32xf32>
    %298 = vector.broadcast %279 : vector<1x32xf32> to vector<16x32xf32>
    %299 = arith.addf %297, %298 : vector<16x32xf32>
    %c544 = arith.constant 544 : index
    %c0_114 = arith.constant 0 : index
    %300 = vector.load %arg0[%c544, %c0_114] : memref<1344x128xf32, #tpu.memory_space<vmem>>, vector<32x32xf32>
    %c576 = arith.constant 576 : index
    %c0_115 = arith.constant 0 : index
    %301 = vector.load %arg0[%c576, %c0_115] : memref<1344x128xf32, #tpu.memory_space<vmem>>, vector<1x32xf32>
    %c584 = arith.constant 584 : index
    %c0_116 = arith.constant 0 : index
    %302 = vector.load %arg0[%c584, %c0_116] : memref<1344x128xf32, #tpu.memory_space<vmem>>, vector<32x64xf32>
    %c616 = arith.constant 616 : index
    %c0_117 = arith.constant 0 : index
    %303 = vector.load %arg0[%c616, %c0_117] : memref<1344x128xf32, #tpu.memory_space<vmem>>, vector<1x64xf32>
    %c624 = arith.constant 624 : index
    %c0_118 = arith.constant 0 : index
    %304 = vector.load %arg0[%c624, %c0_118] : memref<1344x128xf32, #tpu.memory_space<vmem>>, vector<32x32xf32>
    %c656 = arith.constant 656 : index
    %c0_119 = arith.constant 0 : index
    %305 = vector.load %arg0[%c656, %c0_119] : memref<1344x128xf32, #tpu.memory_space<vmem>>, vector<1x32xf32>
    %cst_120 = arith.constant dense<0.000000e+00> : vector<16x32xf32>
    %306 = tpu.matmul %299, %300, %cst_120 {dimension_numbers = #tpu.dot_dimension_numbers<[1], [0], [0], [1], [0, 0, 1, 1], [], []>} : vector<16x32xf32>, vector<32x32xf32>, vector<16x32xf32> -> vector<16x32xf32>
    %307 = vector.broadcast %301 : vector<1x32xf32> to vector<16x32xf32>
    %308 = arith.addf %306, %307 : vector<16x32xf32>
    %cst_121 = arith.constant dense<0.000000e+00> : vector<16x64xf32>
    %309 = tpu.matmul %222, %302, %cst_121 {dimension_numbers = #tpu.dot_dimension_numbers<[1], [0], [0], [1], [0, 0, 1, 1], [], []>} : vector<16x32xf32>, vector<32x64xf32>, vector<16x64xf32> -> vector<16x64xf32>
    %310 = vector.broadcast %303 : vector<1x64xf32> to vector<16x64xf32>
    %311 = arith.addf %309, %310 : vector<16x64xf32>
    %312 = vector.extract_strided_slice %311 {offsets = [0, 0], sizes = [16, 32], strides = [1, 1]} : vector<16x64xf32> to vector<16x32xf32>
    %313 = vector.extract_strided_slice %311 {offsets = [0, 32], sizes = [16, 32], strides = [1, 1]} : vector<16x64xf32> to vector<16x32xf32>
    %314 = tpu.concatenate %312, %312, %312, %312 in 0 : vector<16x32xf32>, vector<16x32xf32>, vector<16x32xf32>, vector<16x32xf32> -> vector<64x32xf32>
    %315 = arith.mulf %314, %0 : vector<64x32xf32>
    %316 = tpu.concatenate %313, %313, %313, %313 in 0 : vector<16x32xf32>, vector<16x32xf32>, vector<16x32xf32>, vector<16x32xf32> -> vector<64x32xf32>
    %317 = arith.mulf %316, %0 : vector<64x32xf32>
    "tpu.trace_start"() <{level = 10 : i32, message = "rd,jd->rj"}> : () -> ()
    %cst_122 = arith.constant dense<0.000000e+00> : vector<16x64xf32>
    %318 = tpu.matmul %308, %315, %cst_122 {dimension_numbers = #tpu.dot_dimension_numbers<[1], [1], [0], [0], [0, 0, 1, 0], [], []>} : vector<16x32xf32>, vector<64x32xf32>, vector<16x64xf32> -> vector<16x64xf32>
    "tpu.trace_stop"() : () -> ()
    %cst_123 = arith.constant 0.353553385 : f32
    %319 = vector.broadcast %cst_123 : f32 to vector<16x64xf32>
    %320 = arith.mulf %318, %319 : vector<16x64xf32>
    %321 = arith.addf %320, %15 : vector<16x64xf32>
    %cst_124 = arith.constant dense<0xFF800000> : vector<16xf32>
    %322 = vector.multi_reduction <maximumf>, %321, %cst_124 [1] : vector<16x64xf32> to vector<16xf32>
    %323 = vector.shape_cast %322 : vector<16xf32> to vector<16x1xf32>
    %324 = vector.broadcast %323 : vector<16x1xf32> to vector<16x64xf32>
    %325 = arith.subf %321, %324 : vector<16x64xf32>
    %326 = math.exp %325 : vector<16x64xf32>
    %cst_125 = arith.constant dense<0.000000e+00> : vector<16x64xf32>
    %327 = tpu.matmul %326, %1, %cst_125 {dimension_numbers = #tpu.dot_dimension_numbers<[1], [0], [0], [1], [0, 0, 1, 1], [], []>} : vector<16x64xf32>, vector<64x64xf32>, vector<16x64xf32> -> vector<16x64xf32>
    %328 = tpu.reciprocal %327 {approx = true} : vector<16x64xf32> -> vector<16x64xf32>
    %329 = arith.mulf %326, %328 : vector<16x64xf32>
    %cst_126 = arith.constant dense<0.000000e+00> : vector<16x32xf32>
    %330 = tpu.matmul %329, %317, %cst_126 {dimension_numbers = #tpu.dot_dimension_numbers<[1], [0], [0], [1], [0, 0, 1, 1], [], []>} : vector<16x64xf32>, vector<64x32xf32>, vector<16x32xf32> -> vector<16x32xf32>
    %cst_127 = arith.constant dense<0.000000e+00> : vector<16x32xf32>
    %331 = tpu.matmul %330, %304, %cst_127 {dimension_numbers = #tpu.dot_dimension_numbers<[1], [0], [0], [1], [0, 0, 1, 1], [], []>} : vector<16x32xf32>, vector<32x32xf32>, vector<16x32xf32> -> vector<16x32xf32>
    %332 = vector.broadcast %305 : vector<1x32xf32> to vector<16x32xf32>
    %333 = arith.addf %331, %332 : vector<16x32xf32>
    %334 = arith.addf %277, %333 : vector<16x32xf32>
    %c808 = arith.constant 808 : index
    %c0_128 = arith.constant 0 : index
    %335 = vector.load %arg0[%c808, %c0_128] : memref<1344x128xf32, #tpu.memory_space<vmem>>, vector<1x32xf32>
    %c816 = arith.constant 816 : index
    %c0_129 = arith.constant 0 : index
    %336 = vector.load %arg0[%c816, %c0_129] : memref<1344x128xf32, #tpu.memory_space<vmem>>, vector<1x32xf32>
    %cst_130 = arith.constant dense<0.000000e+00> : vector<16xf32>
    %337 = vector.multi_reduction <add>, %334, %cst_130 [1] : vector<16x32xf32> to vector<16xf32>
    %338 = vector.shape_cast %337 : vector<16xf32> to vector<16x1xf32>
    %cst_131 = arith.constant 3.200000e+01 : f32
    %339 = vector.broadcast %cst_131 : f32 to vector<16x1xf32>
    %340 = arith.divf %338, %339 : vector<16x1xf32>
    %341 = vector.broadcast %340 : vector<16x1xf32> to vector<16x32xf32>
    %342 = arith.subf %334, %341 : vector<16x32xf32>
    %343 = arith.mulf %342, %342 : vector<16x32xf32>
    %cst_132 = arith.constant dense<0.000000e+00> : vector<16xf32>
    %344 = vector.multi_reduction <add>, %343, %cst_132 [1] : vector<16x32xf32> to vector<16xf32>
    %345 = vector.shape_cast %344 : vector<16xf32> to vector<16x1xf32>
    %cst_133 = arith.constant 0.0322580636 : f32
    %346 = vector.broadcast %cst_133 : f32 to vector<16x1xf32>
    %347 = arith.mulf %345, %346 : vector<16x1xf32>
    %348 = math.sqrt %347 : vector<16x1xf32>
    %349 = vector.broadcast %335 : vector<1x32xf32> to vector<16x32xf32>
    %350 = arith.mulf %349, %342 : vector<16x32xf32>
    %cst_134 = arith.constant 9.99999997E-7 : f32
    %351 = vector.broadcast %cst_134 : f32 to vector<16x1xf32>
    %352 = arith.addf %348, %351 : vector<16x1xf32>
    %353 = vector.broadcast %352 : vector<16x1xf32> to vector<16x32xf32>
    %354 = arith.divf %350, %353 : vector<16x32xf32>
    %355 = vector.broadcast %336 : vector<1x32xf32> to vector<16x32xf32>
    %356 = arith.addf %354, %355 : vector<16x32xf32>
    %c664 = arith.constant 664 : index
    %c0_135 = arith.constant 0 : index
    %357 = vector.load %arg0[%c664, %c0_135] : memref<1344x128xf32, #tpu.memory_space<vmem>>, vector<32x64xf32>
    %c696 = arith.constant 696 : index
    %c0_136 = arith.constant 0 : index
    %358 = vector.load %arg0[%c696, %c0_136] : memref<1344x128xf32, #tpu.memory_space<vmem>>, vector<1x64xf32>
    %c704 = arith.constant 704 : index
    %c0_137 = arith.constant 0 : index
    %359 = vector.load %arg0[%c704, %c0_137] : memref<1344x128xf32, #tpu.memory_space<vmem>>, vector<64x32xf32>
    %c768 = arith.constant 768 : index
    %c0_138 = arith.constant 0 : index
    %360 = vector.load %arg0[%c768, %c0_138] : memref<1344x128xf32, #tpu.memory_space<vmem>>, vector<1x32xf32>
    %cst_139 = arith.constant dense<0.000000e+00> : vector<16x64xf32>
    %361 = tpu.matmul %356, %357, %cst_139 {dimension_numbers = #tpu.dot_dimension_numbers<[1], [0], [0], [1], [0, 0, 1, 1], [], []>} : vector<16x32xf32>, vector<32x64xf32>, vector<16x64xf32> -> vector<16x64xf32>
    %362 = vector.broadcast %358 : vector<1x64xf32> to vector<16x64xf32>
    %363 = arith.addf %361, %362 : vector<16x64xf32>
    %cst_140 = arith.constant 0.000000e+00 : f32
    %364 = vector.broadcast %cst_140 : f32 to vector<16x64xf32>
    %365 = arith.maximumf %363, %364 : vector<16x64xf32>
    %cst_141 = arith.constant dense<0.000000e+00> : vector<16x32xf32>
    %366 = tpu.matmul %365, %359, %cst_141 {dimension_numbers = #tpu.dot_dimension_numbers<[1], [0], [0], [1], [0, 0, 1, 1], [], []>} : vector<16x64xf32>, vector<64x32xf32>, vector<16x32xf32> -> vector<16x32xf32>
    %367 = vector.broadcast %360 : vector<1x32xf32> to vector<16x32xf32>
    %368 = arith.addf %366, %367 : vector<16x32xf32>
    %369 = arith.addf %334, %368 : vector<16x32xf32>
    %c1136 = arith.constant 1136 : index
    %c0_142 = arith.constant 0 : index
    %370 = vector.load %arg0[%c1136, %c0_142] : memref<1344x128xf32, #tpu.memory_space<vmem>>, vector<1x32xf32>
    %c1144 = arith.constant 1144 : index
    %c0_143 = arith.constant 0 : index
    %371 = vector.load %arg0[%c1144, %c0_143] : memref<1344x128xf32, #tpu.memory_space<vmem>>, vector<1x32xf32>
    %cst_144 = arith.constant dense<0.000000e+00> : vector<16xf32>
    %372 = vector.multi_reduction <add>, %369, %cst_144 [1] : vector<16x32xf32> to vector<16xf32>
    %373 = vector.shape_cast %372 : vector<16xf32> to vector<16x1xf32>
    %cst_145 = arith.constant 3.200000e+01 : f32
    %374 = vector.broadcast %cst_145 : f32 to vector<16x1xf32>
    %375 = arith.divf %373, %374 : vector<16x1xf32>
    %376 = vector.broadcast %375 : vector<16x1xf32> to vector<16x32xf32>
    %377 = arith.subf %369, %376 : vector<16x32xf32>
    %378 = arith.mulf %377, %377 : vector<16x32xf32>
    %cst_146 = arith.constant dense<0.000000e+00> : vector<16xf32>
    %379 = vector.multi_reduction <add>, %378, %cst_146 [1] : vector<16x32xf32> to vector<16xf32>
    %380 = vector.shape_cast %379 : vector<16xf32> to vector<16x1xf32>
    %cst_147 = arith.constant 0.0322580636 : f32
    %381 = vector.broadcast %cst_147 : f32 to vector<16x1xf32>
    %382 = arith.mulf %380, %381 : vector<16x1xf32>
    %383 = math.sqrt %382 : vector<16x1xf32>
    %384 = vector.broadcast %370 : vector<1x32xf32> to vector<16x32xf32>
    %385 = arith.mulf %384, %377 : vector<16x32xf32>
    %cst_148 = arith.constant 9.99999997E-7 : f32
    %386 = vector.broadcast %cst_148 : f32 to vector<16x1xf32>
    %387 = arith.addf %383, %386 : vector<16x1xf32>
    %388 = vector.broadcast %387 : vector<16x1xf32> to vector<16x32xf32>
    %389 = arith.divf %385, %388 : vector<16x32xf32>
    %390 = vector.broadcast %371 : vector<1x32xf32> to vector<16x32xf32>
    %391 = arith.addf %389, %390 : vector<16x32xf32>
    %c824 = arith.constant 824 : index
    %c0_149 = arith.constant 0 : index
    %392 = vector.load %arg0[%c824, %c0_149] : memref<1344x128xf32, #tpu.memory_space<vmem>>, vector<32x96xf32>
    %c856 = arith.constant 856 : index
    %c0_150 = arith.constant 0 : index
    %393 = vector.load %arg0[%c856, %c0_150] : memref<1344x128xf32, #tpu.memory_space<vmem>>, vector<1x96xf32>
    %c864 = arith.constant 864 : index
    %c0_151 = arith.constant 0 : index
    %394 = vector.load %arg0[%c864, %c0_151] : memref<1344x128xf32, #tpu.memory_space<vmem>>, vector<32x32xf32>
    %c896 = arith.constant 896 : index
    %c0_152 = arith.constant 0 : index
    %395 = vector.load %arg0[%c896, %c0_152] : memref<1344x128xf32, #tpu.memory_space<vmem>>, vector<1x32xf32>
    %cst_153 = arith.constant dense<0.000000e+00> : vector<16x96xf32>
    %396 = tpu.matmul %391, %392, %cst_153 {dimension_numbers = #tpu.dot_dimension_numbers<[1], [0], [0], [1], [0, 0, 1, 1], [], []>} : vector<16x32xf32>, vector<32x96xf32>, vector<16x96xf32> -> vector<16x96xf32>
    %397 = vector.broadcast %393 : vector<1x96xf32> to vector<16x96xf32>
    %398 = arith.addf %396, %397 : vector<16x96xf32>
    %399 = vector.extract_strided_slice %398 {offsets = [0, 0], sizes = [16, 32], strides = [1, 1]} : vector<16x96xf32> to vector<16x32xf32>
    %400 = vector.extract_strided_slice %398 {offsets = [0, 32], sizes = [16, 32], strides = [1, 1]} : vector<16x96xf32> to vector<16x32xf32>
    %401 = vector.extract_strided_slice %398 {offsets = [0, 64], sizes = [16, 32], strides = [1, 1]} : vector<16x96xf32> to vector<16x32xf32>
    %402 = tpu.concatenate %400, %400, %400, %400 in 0 : vector<16x32xf32>, vector<16x32xf32>, vector<16x32xf32>, vector<16x32xf32> -> vector<64x32xf32>
    %403 = arith.mulf %402, %0 : vector<64x32xf32>
    %404 = tpu.concatenate %401, %401, %401, %401 in 0 : vector<16x32xf32>, vector<16x32xf32>, vector<16x32xf32>, vector<16x32xf32> -> vector<64x32xf32>
    %405 = arith.mulf %404, %0 : vector<64x32xf32>
    "tpu.trace_start"() <{level = 10 : i32, message = "rd,jd->rj"}> : () -> ()
    %cst_154 = arith.constant dense<0.000000e+00> : vector<16x64xf32>
    %406 = tpu.matmul %399, %403, %cst_154 {dimension_numbers = #tpu.dot_dimension_numbers<[1], [1], [0], [0], [0, 0, 1, 0], [], []>} : vector<16x32xf32>, vector<64x32xf32>, vector<16x64xf32> -> vector<16x64xf32>
    "tpu.trace_stop"() : () -> ()
    %cst_155 = arith.constant 0.353553385 : f32
    %407 = vector.broadcast %cst_155 : f32 to vector<16x64xf32>
    %408 = arith.mulf %406, %407 : vector<16x64xf32>
    %409 = arith.addf %408, %22 : vector<16x64xf32>
    %cst_156 = arith.constant dense<0xFF800000> : vector<16xf32>
    %410 = vector.multi_reduction <maximumf>, %409, %cst_156 [1] : vector<16x64xf32> to vector<16xf32>
    %411 = vector.shape_cast %410 : vector<16xf32> to vector<16x1xf32>
    %412 = vector.broadcast %411 : vector<16x1xf32> to vector<16x64xf32>
    %413 = arith.subf %409, %412 : vector<16x64xf32>
    %414 = math.exp %413 : vector<16x64xf32>
    %cst_157 = arith.constant dense<0.000000e+00> : vector<16x64xf32>
    %415 = tpu.matmul %414, %1, %cst_157 {dimension_numbers = #tpu.dot_dimension_numbers<[1], [0], [0], [1], [0, 0, 1, 1], [], []>} : vector<16x64xf32>, vector<64x64xf32>, vector<16x64xf32> -> vector<16x64xf32>
    %416 = tpu.reciprocal %415 {approx = true} : vector<16x64xf32> -> vector<16x64xf32>
    %417 = arith.mulf %414, %416 : vector<16x64xf32>
    %cst_158 = arith.constant dense<0.000000e+00> : vector<16x32xf32>
    %418 = tpu.matmul %417, %405, %cst_158 {dimension_numbers = #tpu.dot_dimension_numbers<[1], [0], [0], [1], [0, 0, 1, 1], [], []>} : vector<16x64xf32>, vector<64x32xf32>, vector<16x32xf32> -> vector<16x32xf32>
    %cst_159 = arith.constant dense<0.000000e+00> : vector<16x32xf32>
    %419 = tpu.matmul %418, %394, %cst_159 {dimension_numbers = #tpu.dot_dimension_numbers<[1], [0], [0], [1], [0, 0, 1, 1], [], []>} : vector<16x32xf32>, vector<32x32xf32>, vector<16x32xf32> -> vector<16x32xf32>
    %420 = vector.broadcast %395 : vector<1x32xf32> to vector<16x32xf32>
    %421 = arith.addf %419, %420 : vector<16x32xf32>
    %422 = arith.addf %369, %421 : vector<16x32xf32>
    %c1152 = arith.constant 1152 : index
    %c0_160 = arith.constant 0 : index
    %423 = vector.load %arg0[%c1152, %c0_160] : memref<1344x128xf32, #tpu.memory_space<vmem>>, vector<1x32xf32>
    %c1160 = arith.constant 1160 : index
    %c0_161 = arith.constant 0 : index
    %424 = vector.load %arg0[%c1160, %c0_161] : memref<1344x128xf32, #tpu.memory_space<vmem>>, vector<1x32xf32>
    %cst_162 = arith.constant dense<0.000000e+00> : vector<16xf32>
    %425 = vector.multi_reduction <add>, %422, %cst_162 [1] : vector<16x32xf32> to vector<16xf32>
    %426 = vector.shape_cast %425 : vector<16xf32> to vector<16x1xf32>
    %cst_163 = arith.constant 3.200000e+01 : f32
    %427 = vector.broadcast %cst_163 : f32 to vector<16x1xf32>
    %428 = arith.divf %426, %427 : vector<16x1xf32>
    %429 = vector.broadcast %428 : vector<16x1xf32> to vector<16x32xf32>
    %430 = arith.subf %422, %429 : vector<16x32xf32>
    %431 = arith.mulf %430, %430 : vector<16x32xf32>
    %cst_164 = arith.constant dense<0.000000e+00> : vector<16xf32>
    %432 = vector.multi_reduction <add>, %431, %cst_164 [1] : vector<16x32xf32> to vector<16xf32>
    %433 = vector.shape_cast %432 : vector<16xf32> to vector<16x1xf32>
    %cst_165 = arith.constant 0.0322580636 : f32
    %434 = vector.broadcast %cst_165 : f32 to vector<16x1xf32>
    %435 = arith.mulf %433, %434 : vector<16x1xf32>
    %436 = math.sqrt %435 : vector<16x1xf32>
    %437 = vector.broadcast %423 : vector<1x32xf32> to vector<16x32xf32>
    %438 = arith.mulf %437, %430 : vector<16x32xf32>
    %cst_166 = arith.constant 9.99999997E-7 : f32
    %439 = vector.broadcast %cst_166 : f32 to vector<16x1xf32>
    %440 = arith.addf %436, %439 : vector<16x1xf32>
    %441 = vector.broadcast %440 : vector<16x1xf32> to vector<16x32xf32>
    %442 = arith.divf %438, %441 : vector<16x32xf32>
    %443 = vector.broadcast %424 : vector<1x32xf32> to vector<16x32xf32>
    %444 = arith.addf %442, %443 : vector<16x32xf32>
    %c904 = arith.constant 904 : index
    %c0_167 = arith.constant 0 : index
    %445 = vector.load %arg0[%c904, %c0_167] : memref<1344x128xf32, #tpu.memory_space<vmem>>, vector<32x32xf32>
    %c936 = arith.constant 936 : index
    %c0_168 = arith.constant 0 : index
    %446 = vector.load %arg0[%c936, %c0_168] : memref<1344x128xf32, #tpu.memory_space<vmem>>, vector<1x32xf32>
    %c944 = arith.constant 944 : index
    %c0_169 = arith.constant 0 : index
    %447 = vector.load %arg0[%c944, %c0_169] : memref<1344x128xf32, #tpu.memory_space<vmem>>, vector<32x64xf32>
    %c976 = arith.constant 976 : index
    %c0_170 = arith.constant 0 : index
    %448 = vector.load %arg0[%c976, %c0_170] : memref<1344x128xf32, #tpu.memory_space<vmem>>, vector<1x64xf32>
    %c984 = arith.constant 984 : index
    %c0_171 = arith.constant 0 : index
    %449 = vector.load %arg0[%c984, %c0_171] : memref<1344x128xf32, #tpu.memory_space<vmem>>, vector<32x32xf32>
    %c1016 = arith.constant 1016 : index
    %c0_172 = arith.constant 0 : index
    %450 = vector.load %arg0[%c1016, %c0_172] : memref<1344x128xf32, #tpu.memory_space<vmem>>, vector<1x32xf32>
    %cst_173 = arith.constant dense<0.000000e+00> : vector<16x32xf32>
    %451 = tpu.matmul %444, %445, %cst_173 {dimension_numbers = #tpu.dot_dimension_numbers<[1], [0], [0], [1], [0, 0, 1, 1], [], []>} : vector<16x32xf32>, vector<32x32xf32>, vector<16x32xf32> -> vector<16x32xf32>
    %452 = vector.broadcast %446 : vector<1x32xf32> to vector<16x32xf32>
    %453 = arith.addf %451, %452 : vector<16x32xf32>
    %cst_174 = arith.constant dense<0.000000e+00> : vector<16x64xf32>
    %454 = tpu.matmul %222, %447, %cst_174 {dimension_numbers = #tpu.dot_dimension_numbers<[1], [0], [0], [1], [0, 0, 1, 1], [], []>} : vector<16x32xf32>, vector<32x64xf32>, vector<16x64xf32> -> vector<16x64xf32>
    %455 = vector.broadcast %448 : vector<1x64xf32> to vector<16x64xf32>
    %456 = arith.addf %454, %455 : vector<16x64xf32>
    %457 = vector.extract_strided_slice %456 {offsets = [0, 0], sizes = [16, 32], strides = [1, 1]} : vector<16x64xf32> to vector<16x32xf32>
    %458 = vector.extract_strided_slice %456 {offsets = [0, 32], sizes = [16, 32], strides = [1, 1]} : vector<16x64xf32> to vector<16x32xf32>
    %459 = tpu.concatenate %457, %457, %457, %457 in 0 : vector<16x32xf32>, vector<16x32xf32>, vector<16x32xf32>, vector<16x32xf32> -> vector<64x32xf32>
    %460 = arith.mulf %459, %0 : vector<64x32xf32>
    %461 = tpu.concatenate %458, %458, %458, %458 in 0 : vector<16x32xf32>, vector<16x32xf32>, vector<16x32xf32>, vector<16x32xf32> -> vector<64x32xf32>
    %462 = arith.mulf %461, %0 : vector<64x32xf32>
    "tpu.trace_start"() <{level = 10 : i32, message = "rd,jd->rj"}> : () -> ()
    %cst_175 = arith.constant dense<0.000000e+00> : vector<16x64xf32>
    %463 = tpu.matmul %453, %460, %cst_175 {dimension_numbers = #tpu.dot_dimension_numbers<[1], [1], [0], [0], [0, 0, 1, 0], [], []>} : vector<16x32xf32>, vector<64x32xf32>, vector<16x64xf32> -> vector<16x64xf32>
    "tpu.trace_stop"() : () -> ()
    %cst_176 = arith.constant 0.353553385 : f32
    %464 = vector.broadcast %cst_176 : f32 to vector<16x64xf32>
    %465 = arith.mulf %463, %464 : vector<16x64xf32>
    %466 = arith.addf %465, %15 : vector<16x64xf32>
    %cst_177 = arith.constant dense<0xFF800000> : vector<16xf32>
    %467 = vector.multi_reduction <maximumf>, %466, %cst_177 [1] : vector<16x64xf32> to vector<16xf32>
    %468 = vector.shape_cast %467 : vector<16xf32> to vector<16x1xf32>
    %469 = vector.broadcast %468 : vector<16x1xf32> to vector<16x64xf32>
    %470 = arith.subf %466, %469 : vector<16x64xf32>
    %471 = math.exp %470 : vector<16x64xf32>
    %cst_178 = arith.constant dense<0.000000e+00> : vector<16x64xf32>
    %472 = tpu.matmul %471, %1, %cst_178 {dimension_numbers = #tpu.dot_dimension_numbers<[1], [0], [0], [1], [0, 0, 1, 1], [], []>} : vector<16x64xf32>, vector<64x64xf32>, vector<16x64xf32> -> vector<16x64xf32>
    %473 = tpu.reciprocal %472 {approx = true} : vector<16x64xf32> -> vector<16x64xf32>
    %474 = arith.mulf %471, %473 : vector<16x64xf32>
    %cst_179 = arith.constant dense<0.000000e+00> : vector<16x32xf32>
    %475 = tpu.matmul %474, %462, %cst_179 {dimension_numbers = #tpu.dot_dimension_numbers<[1], [0], [0], [1], [0, 0, 1, 1], [], []>} : vector<16x64xf32>, vector<64x32xf32>, vector<16x32xf32> -> vector<16x32xf32>
    %cst_180 = arith.constant dense<0.000000e+00> : vector<16x32xf32>
    %476 = tpu.matmul %475, %449, %cst_180 {dimension_numbers = #tpu.dot_dimension_numbers<[1], [0], [0], [1], [0, 0, 1, 1], [], []>} : vector<16x32xf32>, vector<32x32xf32>, vector<16x32xf32> -> vector<16x32xf32>
    %477 = vector.broadcast %450 : vector<1x32xf32> to vector<16x32xf32>
    %478 = arith.addf %476, %477 : vector<16x32xf32>
    %479 = arith.addf %422, %478 : vector<16x32xf32>
    %c1168 = arith.constant 1168 : index
    %c0_181 = arith.constant 0 : index
    %480 = vector.load %arg0[%c1168, %c0_181] : memref<1344x128xf32, #tpu.memory_space<vmem>>, vector<1x32xf32>
    %c1176 = arith.constant 1176 : index
    %c0_182 = arith.constant 0 : index
    %481 = vector.load %arg0[%c1176, %c0_182] : memref<1344x128xf32, #tpu.memory_space<vmem>>, vector<1x32xf32>
    %cst_183 = arith.constant dense<0.000000e+00> : vector<16xf32>
    %482 = vector.multi_reduction <add>, %479, %cst_183 [1] : vector<16x32xf32> to vector<16xf32>
    %483 = vector.shape_cast %482 : vector<16xf32> to vector<16x1xf32>
    %cst_184 = arith.constant 3.200000e+01 : f32
    %484 = vector.broadcast %cst_184 : f32 to vector<16x1xf32>
    %485 = arith.divf %483, %484 : vector<16x1xf32>
    %486 = vector.broadcast %485 : vector<16x1xf32> to vector<16x32xf32>
    %487 = arith.subf %479, %486 : vector<16x32xf32>
    %488 = arith.mulf %487, %487 : vector<16x32xf32>
    %cst_185 = arith.constant dense<0.000000e+00> : vector<16xf32>
    %489 = vector.multi_reduction <add>, %488, %cst_185 [1] : vector<16x32xf32> to vector<16xf32>
    %490 = vector.shape_cast %489 : vector<16xf32> to vector<16x1xf32>
    %cst_186 = arith.constant 0.0322580636 : f32
    %491 = vector.broadcast %cst_186 : f32 to vector<16x1xf32>
    %492 = arith.mulf %490, %491 : vector<16x1xf32>
    %493 = math.sqrt %492 : vector<16x1xf32>
    %494 = vector.broadcast %480 : vector<1x32xf32> to vector<16x32xf32>
    %495 = arith.mulf %494, %487 : vector<16x32xf32>
    %cst_187 = arith.constant 9.99999997E-7 : f32
    %496 = vector.broadcast %cst_187 : f32 to vector<16x1xf32>
    %497 = arith.addf %493, %496 : vector<16x1xf32>
    %498 = vector.broadcast %497 : vector<16x1xf32> to vector<16x32xf32>
    %499 = arith.divf %495, %498 : vector<16x32xf32>
    %500 = vector.broadcast %481 : vector<1x32xf32> to vector<16x32xf32>
    %501 = arith.addf %499, %500 : vector<16x32xf32>
    %c1024 = arith.constant 1024 : index
    %c0_188 = arith.constant 0 : index
    %502 = vector.load %arg0[%c1024, %c0_188] : memref<1344x128xf32, #tpu.memory_space<vmem>>, vector<32x64xf32>
    %c1056 = arith.constant 1056 : index
    %c0_189 = arith.constant 0 : index
    %503 = vector.load %arg0[%c1056, %c0_189] : memref<1344x128xf32, #tpu.memory_space<vmem>>, vector<1x64xf32>
    %c1064 = arith.constant 1064 : index
    %c0_190 = arith.constant 0 : index
    %504 = vector.load %arg0[%c1064, %c0_190] : memref<1344x128xf32, #tpu.memory_space<vmem>>, vector<64x32xf32>
    %c1128 = arith.constant 1128 : index
    %c0_191 = arith.constant 0 : index
    %505 = vector.load %arg0[%c1128, %c0_191] : memref<1344x128xf32, #tpu.memory_space<vmem>>, vector<1x32xf32>
    %cst_192 = arith.constant dense<0.000000e+00> : vector<16x64xf32>
    %506 = tpu.matmul %501, %502, %cst_192 {dimension_numbers = #tpu.dot_dimension_numbers<[1], [0], [0], [1], [0, 0, 1, 1], [], []>} : vector<16x32xf32>, vector<32x64xf32>, vector<16x64xf32> -> vector<16x64xf32>
    %507 = vector.broadcast %503 : vector<1x64xf32> to vector<16x64xf32>
    %508 = arith.addf %506, %507 : vector<16x64xf32>
    %cst_193 = arith.constant 0.000000e+00 : f32
    %509 = vector.broadcast %cst_193 : f32 to vector<16x64xf32>
    %510 = arith.maximumf %508, %509 : vector<16x64xf32>
    %cst_194 = arith.constant dense<0.000000e+00> : vector<16x32xf32>
    %511 = tpu.matmul %510, %504, %cst_194 {dimension_numbers = #tpu.dot_dimension_numbers<[1], [0], [0], [1], [0, 0, 1, 1], [], []>} : vector<16x64xf32>, vector<64x32xf32>, vector<16x32xf32> -> vector<16x32xf32>
    %512 = vector.broadcast %505 : vector<1x32xf32> to vector<16x32xf32>
    %513 = arith.addf %511, %512 : vector<16x32xf32>
    %514 = arith.addf %479, %513 : vector<16x32xf32>
    %c1184 = arith.constant 1184 : index
    %c0_195 = arith.constant 0 : index
    %515 = vector.load %arg0[%c1184, %c0_195] : memref<1344x128xf32, #tpu.memory_space<vmem>>, vector<1x32xf32>
    %c1192 = arith.constant 1192 : index
    %c0_196 = arith.constant 0 : index
    %516 = vector.load %arg0[%c1192, %c0_196] : memref<1344x128xf32, #tpu.memory_space<vmem>>, vector<1x32xf32>
    %cst_197 = arith.constant dense<0.000000e+00> : vector<16xf32>
    %517 = vector.multi_reduction <add>, %514, %cst_197 [1] : vector<16x32xf32> to vector<16xf32>
    %518 = vector.shape_cast %517 : vector<16xf32> to vector<16x1xf32>
    %cst_198 = arith.constant 3.200000e+01 : f32
    %519 = vector.broadcast %cst_198 : f32 to vector<16x1xf32>
    %520 = arith.divf %518, %519 : vector<16x1xf32>
    %521 = vector.broadcast %520 : vector<16x1xf32> to vector<16x32xf32>
    %522 = arith.subf %514, %521 : vector<16x32xf32>
    %523 = arith.mulf %522, %522 : vector<16x32xf32>
    %cst_199 = arith.constant dense<0.000000e+00> : vector<16xf32>
    %524 = vector.multi_reduction <add>, %523, %cst_199 [1] : vector<16x32xf32> to vector<16xf32>
    %525 = vector.shape_cast %524 : vector<16xf32> to vector<16x1xf32>
    %cst_200 = arith.constant 0.0322580636 : f32
    %526 = vector.broadcast %cst_200 : f32 to vector<16x1xf32>
    %527 = arith.mulf %525, %526 : vector<16x1xf32>
    %528 = math.sqrt %527 : vector<16x1xf32>
    %529 = vector.broadcast %515 : vector<1x32xf32> to vector<16x32xf32>
    %530 = arith.mulf %529, %522 : vector<16x32xf32>
    %cst_201 = arith.constant 9.99999997E-7 : f32
    %531 = vector.broadcast %cst_201 : f32 to vector<16x1xf32>
    %532 = arith.addf %528, %531 : vector<16x1xf32>
    %533 = vector.broadcast %532 : vector<16x1xf32> to vector<16x32xf32>
    %534 = arith.divf %530, %533 : vector<16x32xf32>
    %535 = vector.broadcast %516 : vector<1x32xf32> to vector<16x32xf32>
    %536 = arith.addf %534, %535 : vector<16x32xf32>
    %c0_202 = arith.constant 0 : index
    %c0_203 = arith.constant 0 : index
    %537 = vector.load %arg5[%c0_202, %c0_203] : memref<16x32xf32, #tpu.memory_space<vmem>>, vector<16x32xf32>
    tpu.vector_store %arg5[%c0_202, %c0_203], %536 {strides = array<i32>} : memref<16x32xf32, #tpu.memory_space<vmem>>, vector<16x32xf32>,
    return
  }
}

</mosaic_0001>

<llo_original>
// kernel: encoder_decoder_forward.1
$region0: #{encoder_decoder_forward.1}
  #allocation0 [shape = 'u32[]', space=smem, size = 0x4, offset = 0x4, fixed_abs, tag = 'smem constant byte address 0x4 - core index']
  #allocation1 [shape = 'u32[144,128]{1,0:T(1,128)}', space=vmem, size = 0x12000, scoped, tag = 'internal scratch']
  %s0 = inlined_call_operand.hbm [shape: f32[1344,128], index: 0, kind: input, shape index: {}]
  %s1 = inlined_call_operand.hbm [shape: f32[2,8,32], index: 1, kind: input, shape index: {}]
  %s2 = inlined_call_operand.hbm [shape: f32[2,8,32], index: 2, kind: input, shape index: {}]
  %s3 = inlined_call_operand.vmem [shape: f32[2,1,8], index: 3, kind: input, shape index: {}]
  %s4 = inlined_call_operand.hbm [shape: f32[2,8,8], index: 4, kind: input, shape index: {}]
  %s5 = inlined_call_operand.hbm [shape: f32[16,32], index: 5, kind: output, shape index: {}]
  %s6 = sld [smem:[#allocation0]]
  $region46: #{encoder_decoder_forward.1} parent=0
    _
  %s8 = ssub.s32 1, %s6
  %s9 = scalar_select 0, %s8, %s6
  $region1: #{encoder_decoder_forward.1} parent=0
    #allocation2 [shape = 'u8[688128]{0}', space=vmem, size = 0xa8000, scoped, tag = 'input window, operand 0, single buffered']
    #allocation3 [shape = 's32[1]{0}', space=sflag, size = 0x4, scoped, tag = 'scoped memory for encoder_decoder_forward.1']
    #allocation4 [shape = 's32[1]{0}', space=sflag, size = 0x4, scoped, tag = 'scoped memory for encoder_decoder_forward.1']
    #allocation5 [shape = 'u8[8192]{0}', space=vmem, size = 0x2000, scoped, tag = 'input window, operand 1, single buffered']
    #allocation6 [shape = 's32[1]{0}', space=sflag, size = 0x4, scoped, tag = 'scoped memory for encoder_decoder_forward.1']
    #allocation7 [shape = 'u8[8192]{0}', space=vmem, size = 0x2000, scoped, tag = 'input window, operand 2, single buffered']
    #allocation8 [shape = 'u8[8192]{0}', space=vmem, size = 0x2000, scoped, tag = 'input window, operand 4, single buffered']
    #allocation9 [shape = 's32[1]{0}', space=sflag, size = 0x4, scoped, tag = 'scoped memory for encoder_decoder_forward.1']
    #allocation10 [shape = 'u8[8192]{0}', space=vmem, size = 0x2000, scoped, tag = 'output window, operand 0, single buffered']
    %10 = vsyncpa [#allocation3], 0
    %11 = vsyncpa [#allocation6], 0
    %12 = vsyncpa [#allocation9], 0
    %13 = vsyncpa [#allocation4], 0
    // Predicated region
    $region2: #{encoder_decoder_forward.1} parent=1 // pred_check
      _
    $region3: #{encoder_decoder_forward.1} parent=1 // pred_check_branch
      %15 = sbr.rel (0) target = $region5
    $region4: #{encoder_decoder_forward.1} parent=1 // pred_region
      %s17 = ssub.s32 21504, 21504
      %18 = vsyncadd [#allocation3], %s17
      %s19 = sshll.u32 [#allocation2], 4
      %s20 = int_to_ptr.vmem [resolvable:$true] %s19
      %25 = dma.hbm_to_vmem [thread:$0]  %s0, 21504, %s20, [#allocation3], 128, 128, 8
    $region5: #{encoder_decoder_forward.1} parent=1 // pred_fallthru
      _
    // Predicated region
    $region6: #{encoder_decoder_forward.1} parent=1 // pred_check
      _
    $region7: #{encoder_decoder_forward.1} parent=1 // pred_check_branch
      %27 = sbr.rel (0) target = $region9
    $region8: #{encoder_decoder_forward.1} parent=1 // pred_region
      %s29 = ssub.s32 256, 256
      %30 = vsyncadd [#allocation6], %s29
      %s31 = sshll.u32 [#allocation5], 4
      %s32 = int_to_ptr.vmem [resolvable:$true] %s31
      %37 = dma.hbm_to_vmem [thread:$0]  %s1, 256, %s32, [#allocation6], 128, 128, 8
    $region9: #{encoder_decoder_forward.1} parent=1 // pred_fallthru
      _
    // Predicated region
    $region10: #{encoder_decoder_forward.1} parent=1 // pred_check
      _
    $region11: #{encoder_decoder_forward.1} parent=1 // pred_check_branch
      %39 = sbr.rel (0) target = $region13
    $region12: #{encoder_decoder_forward.1} parent=1 // pred_region
      %s41 = ssub.s32 256, 256
      %42 = vsyncadd [#allocation6], %s41
      %s43 = sshll.u32 [#allocation7], 4
      %s44 = int_to_ptr.vmem [resolvable:$true] %s43
      %49 = dma.hbm_to_vmem [thread:$0]  %s2, 256, %s44, [#allocation6], 128, 128, 8
    $region13: #{encoder_decoder_forward.1} parent=1 // pred_fallthru
      _
    // Predicated region
    $region14: #{encoder_decoder_forward.1} parent=1 // pred_check
      _
    $region15: #{encoder_decoder_forward.1} parent=1 // pred_check_branch
      %51 = sbr.rel (0) target = $region17
    $region16: #{encoder_decoder_forward.1} parent=1 // pred_region
      _
    $region17: #{encoder_decoder_forward.1} parent=1 // pred_fallthru
      _
    // Predicated region
    $region18: #{encoder_decoder_forward.1} parent=1 // pred_check
      _
    $region19: #{encoder_decoder_forward.1} parent=1 // pred_check_branch
      %53 = sbr.rel (0) target = $region21
    $region20: #{encoder_decoder_forward.1} parent=1 // pred_region
      %s55 = ssub.s32 256, 256
      %56 = vsyncadd [#allocation9], %s55
      %s57 = sshll.u32 [#allocation8], 4
      %s58 = int_to_ptr.vmem [resolvable:$true] %s57
      %63 = dma.hbm_to_vmem [thread:$0]  %s4, 256, %s58, [#allocation9], 128, 128, 8
    $region21: #{encoder_decoder_forward.1} parent=1 // pred_fallthru
      _
    // Predicated region
    $region22: #{encoder_decoder_forward.1} parent=1 // pred_check
      _
    $region23: #{encoder_decoder_forward.1} parent=1 // pred_check_branch
      %65 = sbr.rel (0) target = $region25
    $region24: #{encoder_decoder_forward.1} parent=1 // pred_region
      %66 = dma.done [#allocation3], 21504
    $region25: #{encoder_decoder_forward.1} parent=1 // pred_fallthru
      _
    // Predicated region
    $region26: #{encoder_decoder_forward.1} parent=1 // pred_check
      _
    $region27: #{encoder_decoder_forward.1} parent=1 // pred_check_branch
      %68 = sbr.rel (0) target = $region29
    $region28: #{encoder_decoder_forward.1} parent=1 // pred_region
      %69 = dma.done [#allocation6], 256
    $region29: #{encoder_decoder_forward.1} parent=1 // pred_fallthru
      _
    // Predicated region
    $region30: #{encoder_decoder_forward.1} parent=1 // pred_check
      _
    $region31: #{encoder_decoder_forward.1} parent=1 // pred_check_branch
      %71 = sbr.rel (0) target = $region33
    $region32: #{encoder_decoder_forward.1} parent=1 // pred_region
      %72 = dma.done [#allocation6], 256
    $region33: #{encoder_decoder_forward.1} parent=1 // pred_fallthru
      _
    // Predicated region
    $region34: #{encoder_decoder_forward.1} parent=1 // pred_check
      _
    $region35: #{encoder_decoder_forward.1} parent=1 // pred_check_branch
      %74 = sbr.rel (0) target = $region37
    $region36: #{encoder_decoder_forward.1} parent=1 // pred_region
      %75 = dma.done [#allocation9], 256
    $region37: #{encoder_decoder_forward.1} parent=1 // pred_fallthru
      _
    %v76 = vld [vmem:[#allocation2 + $0x4b0] sm:$0xff]
    %v77 = vld [vmem:[#allocation2 + $0x4b8] sm:$0xff]
    %v78 = vld [vmem:[#allocation2 + $0x4c0] sm:$0xff]
    %v79 = vld [vmem:[#allocation2 + $0x4c8] sm:$0xff]
    %v80 = vld [vmem:[#allocation2 + $0x4d0] sm:$0xff]
    %v81 = vld [vmem:[#allocation2 + $0x4d8] sm:$0xff]
    %v82 = vld [vmem:[#allocation2 + $0x4e0] sm:$0xff]
    %v83 = vld [vmem:[#allocation2 + $0x4e8] sm:$0xff]
    %v84 = vld [vmem:[#allocation2 + $0x4f0] sm:$0xff]
    %v85 = vld [vmem:[#allocation2 + $0x4f8] sm:$0xff]
    %v86 = vld [vmem:[#allocation2 + $0x500] sm:$0xff]
    %v87 = vld [vmem:[#allocation2 + $0x508] sm:$0xff]
    %v88 = vld [vmem:[#allocation2 + $0x510] sm:$0xff]
    %v89 = vld [vmem:[#allocation2 + $0x518] sm:$0xff]
    %v90 = vld [vmem:[#allocation2 + $0x520] sm:$0xff]
    %v91 = vld [vmem:[#allocation2 + $0x528] sm:$0xff]
    %v92 = vld [vmem:[#allocation2 + $0x530] sm:$0xff]
    %v93 = vld [vmem:[#allocation2 + $0x538] sm:$0xff]
    %v94 = vld [vmem:[%s3] sm:$0x1]
    %v95 = vld [vmem:[%s3 + $0x1] sm:$0x1]
    %v98 = vlaneseq
    %v99 = vshrl.u32 %v98, 7
    %v100 = vsub.s32 0, %v99
    %v101 = vrot.slane %v94, %v100
    %v102 = vlaneseq
    %v103 = vshrl.u32 %v102, 7
    %v104 = vsub.s32 0, %v103
    %v105 = vrot.slane %v95, %v104
    %v108 = vld [vmem:[#allocation8] sm:$0xff]
    %v109 = vld [vmem:[#allocation8 + $0x8] sm:$0xff]
    %110 = vrot.lane.b32.xlu0 %v101, 8
    %v111 = vpop.permute.xlu0 %110
    %112 = vrot.lane.b32.xlu0 %v105, 8
    %v113 = vpop.permute.xlu0 %112
    %vm116 = vcmask 64512
    %v117 = vsel %vm116, %v101, %v111
    %v118 = vsel %vm116, %v105, %v113
    %v119 = vmul.f32 %v117, %v92
    %v120 = vmul.f32 %v118, %v93
    %v121 = vsub.f32 %v119, 1.0
    %v122 = vsub.f32 %v120, 1.0
    %v123 = vmul.f32 %v121, 1e+09
    %v124 = vmul.f32 %v122, 1e+09
    %127 = vrot.lane.b32.xlu0 %v123, 16
    %v128 = vpop.permute.xlu0 %127
    %129 = vrot.lane.b32.xlu0 %v124, 16
    %v130 = vpop.permute.xlu0 %129
    %133 = vrot.lane.b32.xlu0 %v123, 32
    %v134 = vpop.permute.xlu0 %133
    %135 = vrot.lane.b32.xlu0 %v124, 32
    %v136 = vpop.permute.xlu0 %135
    %139 = vrot.lane.b32.xlu0 %v123, 48
    %v140 = vpop.permute.xlu0 %139
    %141 = vrot.lane.b32.xlu0 %v124, 48
    %v142 = vpop.permute.xlu0 %141
    %vm145 = vcmask 130048
    %v146 = vsel %vm145, %v123, %v128
    %v147 = vsel %vm145, %v124, %v130
    %vm148 = vcmask 261120
    %v149 = vsel %vm148, %v146, %v134
    %v150 = vsel %vm148, %v147, %v136
    %vm151 = vcmask 392192
    %v152 = vsel %vm151, %v149, %v140
    %v153 = vsel %vm151, %v150, %v142
    %156 = vrot.lane.b32.xlu0 %v108, 8
    %v157 = vpop.permute.xlu0 %156
    %158 = vrot.lane.b32.xlu0 %v109, 8
    %v159 = vpop.permute.xlu0 %158
    %v162 = vsel %vm116, %v108, %v157
    %v163 = vsel %vm116, %v109, %v159
    %v164 = vmul.f32 %v162, %v92
    %v165 = vmul.f32 %v163, %v93
    %v166 = vsub.f32 %v164, 1.0
    %v167 = vsub.f32 %v165, 1.0
    %v168 = vmul.f32 %v166, 1e+09
    %v169 = vmul.f32 %v167, 1e+09
    %172 = vrot.lane.b32.xlu0 %v168, 16
    %v173 = vpop.permute.xlu0 %172
    %174 = vrot.lane.b32.xlu0 %v169, 16
    %v175 = vpop.permute.xlu0 %174
    %178 = vrot.lane.b32.xlu0 %v168, 32
    %v179 = vpop.permute.xlu0 %178
    %180 = vrot.lane.b32.xlu0 %v169, 32
    %v181 = vpop.permute.xlu0 %180
    %184 = vrot.lane.b32.xlu0 %v168, 48
    %v185 = vpop.permute.xlu0 %184
    %186 = vrot.lane.b32.xlu0 %v169, 48
    %v187 = vpop.permute.xlu0 %186
    %v190 = vsel %vm145, %v168, %v173
    %v191 = vsel %vm145, %v169, %v175
    %v192 = vsel %vm148, %v190, %v179
    %v193 = vsel %vm148, %v191, %v181
    %v194 = vsel %vm151, %v192, %v185
    %v195 = vsel %vm151, %v193, %v187
    %v196 = vld [vmem:[#allocation5] sm:$0xff]
    %v197 = vld [vmem:[#allocation5 + $0x8] sm:$0xff]
    %v198 = vld [vmem:[#allocation2 + $0xc0] sm:$0x1]
    %v199 = vld [vmem:[#allocation2 + $0xc8] sm:$0x1]
    %v200 = vsel %vm148, %v196, 0.0
    %201 = vadd.xlane.f32.xlu0 %v200
    %v202 = vpop.xlane.xlu0 %201
    %v203 = vsel %vm148, %v197, 0.0
    %204 = vadd.xlane.f32.xlu0 %v203
    %v205 = vpop.xlane.xlu0 %204
    %v206 = vrcp.pop 32.0
    %v207 = vmul.f32 %v202, %v206
    %v208 = vmul.f32 %v205, %v206
    %v209 = vsub.f32 %v196, %v207
    %v210 = vsub.f32 %v197, %v208
    %v211 = vmul.f32 %v209, %v209
    %v212 = vmul.f32 %v210, %v210
    %v213 = vsel %vm148, %v211, 0.0
    %214 = vadd.xlane.f32.xlu0 %v213
    %v215 = vpop.xlane.xlu0 %214
    %v216 = vsel %vm148, %v212, 0.0
    %217 = vadd.xlane.f32.xlu0 %v216
    %v218 = vpop.xlane.xlu0 %217
    %v219 = vmul.f32 %v215, 0.032258064
    %v220 = vmul.f32 %v218, 0.032258064
    %v221 = vrsqrt.pop %v219
    %v222 = vmul.f32 %v219, %v221
    %vm223 = vcmp.eq.f32.partialorder %v219, inf
    %v224 = vsel %vm223, %v219, %v222
    %vm225 = vcmp.eq.f32.partialorder %v219, 0.0
    %v226 = vand.u32 %v219, 2147483648
    %v227 = vsel %vm225, %v226, %v224
    %v228 = vrsqrt.pop %v220
    %v229 = vmul.f32 %v220, %v228
    %vm230 = vcmp.eq.f32.partialorder %v220, inf
    %v231 = vsel %vm230, %v220, %v229
    %vm232 = vcmp.eq.f32.partialorder %v220, 0.0
    %v233 = vand.u32 %v220, 2147483648
    %v234 = vsel %vm232, %v233, %v231
    %v235 = vlaneseq
    %v236 = vshrl.u32 %v235, 7
    %v237 = vsub.s32 0, %v236
    %v238 = vrot.slane %v198, %v237
    %v239 = vmul.f32 %v238, %v209
    %v240 = vmul.f32 %v238, %v210
    %v241 = vadd.f32 %v227, 1e-06
    %v242 = vadd.f32 %v234, 1e-06
    %v243 = vrcp.pop %v241
    %v244 = vmul.f32 %v239, %v243
    %v245 = vrcp.pop %v242
    %v246 = vmul.f32 %v240, %v245
    %v247 = vlaneseq
    %v248 = vshrl.u32 %v247, 7
    %v249 = vsub.s32 0, %v248
    %v250 = vrot.slane %v199, %v249
    %v251 = vadd.f32 %v244, %v250
    %v252 = vadd.f32 %v246, %v250
    %v253 = vld [vmem:[#allocation2] sm:$0xff]
    %v254 = vld [vmem:[#allocation2 + $0x8] sm:$0xff]
    %v255 = vld [vmem:[#allocation2 + $0x10] sm:$0xff]
    %v256 = vld [vmem:[#allocation2 + $0x18] sm:$0xff]
    %v257 = vld [vmem:[#allocation2 + $0x20] sm:$0x1]
    %v258 = vld [vmem:[#allocation2 + $0x28] sm:$0xff]
    %v259 = vld [vmem:[#allocation2 + $0x30] sm:$0xff]
    %v260 = vld [vmem:[#allocation2 + $0x38] sm:$0xff]
    %v261 = vld [vmem:[#allocation2 + $0x40] sm:$0xff]
    %v262 = vld [vmem:[#allocation2 + $0x48] sm:$0x1]
    %v263 = vlaneseq
    %v264 = vshrl.u32 %v263, 7
    %v265 = vsub.s32 0, %v264
    %v266 = vrot.slane %v257, %v265
    %v268 = vsel %vm148, %v251, 0
    %v271 = vsel %vm148, %v252, 0
    %273 = vmatprep.subr.mxu0 0.0
    %274 = vmatpush1.msra.mxu0 %v253
    %275 = vmatprep.subr.mxu0 0.0
    %276 = vmatpush1.msra.mxu0 %v254
    %277 = vmatprep.subr.mxu0 0.0
    %278 = vmatpush1.msra.mxu0 %v255
    %279 = vmatprep.subr.mxu0 0.0
    %280 = vmatpush1.msra.mxu0 %v256
    %281 = vmatprep.subr.mxu0 0.0
    %282 = vmatpush1.msra.mxu0 0.0
    %283 = vmatprep.subr.mxu0 0.0
    %284 = vmatpush1.msra.mxu0 0.0
    %285 = vmatprep.subr.mxu0 0.0
    %286 = vmatpush1.msra.mxu0 0.0
    %287 = vmatprep.subr.mxu0 0.0
    %288 = vmatpush1.msra.mxu0 0.0
    %289 = vmatprep.subr.mxu0 0.0
    %290 = vmatpush1.msra.mxu0 0.0
    %291 = vmatprep.subr.mxu0 0.0
    %292 = vmatpush1.msra.mxu0 0.0
    %293 = vmatprep.subr.mxu0 0.0
    %294 = vmatpush1.msra.mxu0 0.0
    %295 = vmatprep.subr.mxu0 0.0
    %296 = vmatpush1.msra.mxu0 0.0
    %297 = vmatprep.subr.mxu0 0.0
    %298 = vmatpush1.msra.mxu0 0.0
    %299 = vmatprep.subr.mxu0 0.0
    %300 = vmatpush1.msra.mxu0 0.0
    %301 = vmatprep.subr.mxu0 0.0
    %302 = vmatpush1.msra.mxu0 0.0
    %303 = vmatprep.subr.mxu0 0.0
    %304 = vmatpush1.msra.mxu0 0.0
    %305 = vmatprep.subr.mxu0 0.0
    %306 = vmatpush1.msra.mxu0 0.0
    %307 = vmatprep.subr.mxu0 0.0
    %308 = vmatpush1.msra.mxu0 0.0
    %309 = vmatprep.subr.mxu0 0.0
    %310 = vmatpush1.msra.mxu0 0.0
    %311 = vmatprep.subr.mxu0 0.0
    %312 = vmatpush1.msra.mxu0 0.0
    %313 = vmatprep.subr.mxu0 0.0
    %314 = vmatpush1.msra.mxu0 0.0
    %315 = vmatprep.subr.mxu0 0.0
    %316 = vmatpush1.msra.mxu0 0.0
    %317 = vmatprep.subr.mxu0 0.0
    %318 = vmatpush1.msra.mxu0 0.0
    %319 = vmatprep.subr.mxu0 0.0
    %320 = vmatpush1.msra.mxu0 0.0
    %321 = vmatprep.subr.mxu0 0.0
    %322 = vmatpush1.msra.mxu0 0.0
    %323 = vmatprep.subr.mxu0 0.0
    %324 = vmatpush1.msra.mxu0 0.0
    %325 = vmatprep.subr.mxu0 0.0
    %326 = vmatpush1.msra.mxu0 0.0
    %327 = vmatprep.subr.mxu0 0.0
    %328 = vmatpush1.msra.mxu0 0.0
    %329 = vmatprep.subr.mxu0 0.0
    %330 = vmatpush1.msra.mxu0 0.0
    %331 = vmatprep.subr.mxu0 0.0
    %332 = vmatpush1.msra.mxu0 0.0
    %333 = vmatprep.subr.mxu0 0.0
    %334 = vmatpush1.msra.mxu0 0.0
    %335 = vmatprep.subr.mxu0 0.0
    %336 = vmatpush1.msra.mxu0 0.0
    %337 = vmatprep.mubr.f32.mxu0 0.0
    %338 = vmatmul.mubr.f32.gmra.mrb[0].mxu0 %v268
    %v339 = vpop.f32.mrb[0].mxu0
    %v340 = vadd.f32 %v266, %v339
    %v341 = vpop.f32.mrb[0].mxu0
    %342 = vmatprep.mubr.f32.mxu0 0.0
    %343 = vmatmul.mubr.f32.gmra.mrb[0].mxu0 %v271
    %v344 = vpop.f32.mrb[0].mxu0
    %v345 = vadd.f32 %v266, %v344
    %v346 = vpop.f32.mrb[0].mxu0
    %347 = vdwg.mxu0
    %356 = vrot.lane.b32.xlu0 %v76, 32
    %v357 = vpop.permute.xlu0 %356
    %358 = vrot.lane.b32.xlu0 %v77, 32
    %v359 = vpop.permute.xlu0 %358
    %360 = vrot.lane.b32.xlu0 %v78, 32
    %v361 = vpop.permute.xlu0 %360
    %362 = vrot.lane.b32.xlu0 %v79, 32
    %v363 = vpop.permute.xlu0 %362
    %364 = vrot.lane.b32.xlu0 %v80, 32
    %v365 = vpop.permute.xlu0 %364
    %366 = vrot.lane.b32.xlu0 %v81, 32
    %v367 = vpop.permute.xlu0 %366
    %368 = vrot.lane.b32.xlu0 %v82, 32
    %v369 = vpop.permute.xlu0 %368
    %370 = vrot.lane.b32.xlu0 %v83, 32
    %v371 = vpop.permute.xlu0 %370
    %v380 = vmul.f32 %v340, %v357
    %v381 = vmul.f32 %v345, %v359
    %v382 = vmul.f32 %v340, %v361
    %v383 = vmul.f32 %v345, %v363
    %v384 = vmul.f32 %v340, %v365
    %v385 = vmul.f32 %v345, %v367
    %v386 = vmul.f32 %v340, %v369
    %v387 = vmul.f32 %v345, %v371
    %388 = vrot.lane.b32.xlu0 %v76, 64
    %v389 = vpop.permute.xlu0 %388
    %390 = vrot.lane.b32.xlu0 %v77, 64
    %v391 = vpop.permute.xlu0 %390
    %392 = vrot.lane.b32.xlu0 %v78, 64
    %v393 = vpop.permute.xlu0 %392
    %394 = vrot.lane.b32.xlu0 %v79, 64
    %v395 = vpop.permute.xlu0 %394
    %396 = vrot.lane.b32.xlu0 %v80, 64
    %v397 = vpop.permute.xlu0 %396
    %398 = vrot.lane.b32.xlu0 %v81, 64
    %v399 = vpop.permute.xlu0 %398
    %400 = vrot.lane.b32.xlu0 %v82, 64
    %v401 = vpop.permute.xlu0 %400
    %402 = vrot.lane.b32.xlu0 %v83, 64
    %v403 = vpop.permute.xlu0 %402
    %v412 = vmul.f32 %v340, %v389
    %v413 = vmul.f32 %v345, %v391
    %v414 = vmul.f32 %v340, %v393
    %v415 = vmul.f32 %v345, %v395
    %v416 = vmul.f32 %v340, %v397
    %v417 = vmul.f32 %v345, %v399
    %v418 = vmul.f32 %v340, %v401
    %v419 = vmul.f32 %v345, %v403
    %428 = vrot.lane.b32.xlu0 %v380, 96
    %v429 = vpop.permute.xlu0 %428
    %430 = vrot.lane.b32.xlu0 %v381, 96
    %v431 = vpop.permute.xlu0 %430
    %432 = vrot.lane.b32.xlu0 %v382, 96
    %v433 = vpop.permute.xlu0 %432
    %434 = vrot.lane.b32.xlu0 %v383, 96
    %v435 = vpop.permute.xlu0 %434
    %436 = vrot.lane.b32.xlu0 %v384, 96
    %v437 = vpop.permute.xlu0 %436
    %438 = vrot.lane.b32.xlu0 %v385, 96
    %v439 = vpop.permute.xlu0 %438
    %440 = vrot.lane.b32.xlu0 %v386, 96
    %v441 = vpop.permute.xlu0 %440
    %442 = vrot.lane.b32.xlu0 %v387, 96
    %v443 = vpop.permute.xlu0 %442
    %v445 = vsel %vm148, %v340, 0
    %v448 = vsel %vm148, %v345, 0
    %v450 = vsel %vm148, %v429, 0
    %v452 = vsel %vm148, %v431, 0
    %v454 = vsel %vm148, %v433, 0
    %v456 = vsel %vm148, %v435, 0
    %v458 = vsel %vm148, %v437, 0
    %v460 = vsel %vm148, %v439, 0
    %v462 = vsel %vm148, %v441, 0
    %v464 = vsel %vm148, %v443, 0
    %466 = vmatprep.subr.mxu0 0.0
    %467 = vmatpush1.xpose.msra.mxu0 %v450
    %468 = vmatprep.subr.mxu0 0.0
    %469 = vmatpush1.xpose.msra.mxu0 %v452
    %470 = vmatprep.subr.mxu0 0.0
    %471 = vmatpush1.xpose.msra.mxu0 %v454
    %472 = vmatprep.subr.mxu0 0.0
    %473 = vmatpush1.xpose.msra.mxu0 %v456
    %474 = vmatprep.subr.mxu0 0.0
    %475 = vmatpush1.xpose.msra.mxu0 %v458
    %476 = vmatprep.subr.mxu0 0.0
    %477 = vmatpush1.xpose.msra.mxu0 %v460
    %478 = vmatprep.subr.mxu0 0.0
    %479 = vmatpush1.xpose.msra.mxu0 %v462
    %480 = vmatprep.subr.mxu0 0.0
    %481 = vmatpush1.xpose.msra.mxu0 %v464
    %482 = vmatprep.subr.mxu0 0.0
    %483 = vmatpush1.xpose.msra.mxu0 0.0
    %484 = vmatprep.subr.mxu0 0.0
    %485 = vmatpush1.xpose.msra.mxu0 0.0
    %486 = vmatprep.subr.mxu0 0.0
    %487 = vmatpush1.xpose.msra.mxu0 0.0
    %488 = vmatprep.subr.mxu0 0.0
    %489 = vmatpush1.xpose.msra.mxu0 0.0
    %490 = vmatprep.subr.mxu0 0.0
    %491 = vmatpush1.xpose.msra.mxu0 0.0
    %492 = vmatprep.subr.mxu0 0.0
    %493 = vmatpush1.xpose.msra.mxu0 0.0
    %494 = vmatprep.subr.mxu0 0.0
    %495 = vmatpush1.xpose.msra.mxu0 0.0
    %496 = vmatprep.subr.mxu0 0.0
    %497 = vmatpush1.xpose.msra.mxu0 0.0
    %498 = vmatprep.subr.mxu0 0.0
    %499 = vmatpush1.xpose.msra.mxu0 0.0
    %500 = vmatprep.subr.mxu0 0.0
    %501 = vmatpush1.xpose.msra.mxu0 0.0
    %502 = vmatprep.subr.mxu0 0.0
    %503 = vmatpush1.xpose.msra.mxu0 0.0
    %504 = vmatprep.subr.mxu0 0.0
    %505 = vmatpush1.xpose.msra.mxu0 0.0
    %506 = vmatprep.subr.mxu0 0.0
    %507 = vmatpush1.xpose.msra.mxu0 0.0
    %508 = vmatprep.subr.mxu0 0.0
    %509 = vmatpush1.xpose.msra.mxu0 0.0
    %510 = vmatprep.subr.mxu0 0.0
    %511 = vmatpush1.xpose.msra.mxu0 0.0
    %512 = vmatprep.subr.mxu0 0.0
    %513 = vmatpush1.xpose.msra.mxu0 0.0
    %514 = vmatprep.subr.mxu0 0.0
    %515 = vmatpush1.xpose.msra.mxu0 0.0
    %516 = vmatprep.subr.mxu0 0.0
    %517 = vmatpush1.xpose.msra.mxu0 0.0
    %518 = vmatprep.subr.mxu0 0.0
    %519 = vmatpush1.xpose.msra.mxu0 0.0
    %520 = vmatprep.subr.mxu0 0.0
    %521 = vmatpush1.xpose.msra.mxu0 0.0
    %522 = vmatprep.subr.mxu0 0.0
    %523 = vmatpush1.xpose.msra.mxu0 0.0
    %524 = vmatprep.subr.mxu0 0.0
    %525 = vmatpush1.xpose.msra.mxu0 0.0
    %526 = vmatprep.subr.mxu0 0.0
    %527 = vmatpush1.xpose.msra.mxu0 0.0
    %528 = vmatprep.subr.mxu0 0.0
    %529 = vmatpush1.xpose.msra.mxu0 0.0
    %530 = vmatprep.mubr.f32.mxu0 0.0
    %531 = vmatmul.mubr.f32.gmra.mrb[0].mxu0 %v445
    %v532 = vpop.f32.mrb[0].mxu0
    %v533 = vadd.f32 0.0, %v532
    %v534 = vpop.f32.mrb[0].mxu0
    %535 = vmatprep.mubr.f32.mxu0 0.0
    %536 = vmatmul.mubr.f32.gmra.mrb[0].mxu0 %v448
    %v537 = vpop.f32.mrb[0].mxu0
    %v538 = vadd.f32 0.0, %v537
    %v539 = vpop.f32.mrb[0].mxu0
    %540 = vdwg.mxu0
    %v541 = vmul.f32 %v533, 0.35355338
    %v542 = vmul.f32 %v538, 0.35355338
    %v543 = vadd.f32 %v541, %v152
    %v544 = vadd.f32 %v542, %v153
    %vm545 = vcmask 523264
    %v546 = vsel %vm545, %v543, -inf
    %547 = vmax.xlane.f32.xlu0 %v546
    %v548 = vpop.xlane.xlu0 %547
    %v549 = vsel %vm545, %v544, -inf
    %550 = vmax.xlane.f32.xlu0 %v549
    %v551 = vpop.xlane.xlu0 %550
    %v552 = vsub.f32 %v543, %v548
    %v553 = vsub.f32 %v544, %v551
    %v554 = vmul.f32 %v552, 1.442695
    %v555 = vpow.pop %v554
    %v556 = vmul.f32 %v553, 1.442695
    %v557 = vpow.pop %v556
    %v559 = vsel %vm545, %v555, 0
    %v562 = vsel %vm545, %v557, 0
    %564 = vmatprep.subr.mxu0 0.0
    %565 = vmatpush1.msra.mxu0 %v84
    %566 = vmatprep.subr.mxu0 0.0
    %567 = vmatpush1.msra.mxu0 %v85
    %568 = vmatprep.subr.mxu0 0.0
    %569 = vmatpush1.msra.mxu0 %v86
    %570 = vmatprep.subr.mxu0 0.0
    %571 = vmatpush1.msra.mxu0 %v87
    %572 = vmatprep.subr.mxu0 0.0
    %573 = vmatpush1.msra.mxu0 %v88
    %574 = vmatprep.subr.mxu0 0.0
    %575 = vmatpush1.msra.mxu0 %v89
    %576 = vmatprep.subr.mxu0 0.0
    %577 = vmatpush1.msra.mxu0 %v90
    %578 = vmatprep.subr.mxu0 0.0
    %579 = vmatpush1.msra.mxu0 %v91
    %580 = vmatprep.subr.mxu0 0.0
    %581 = vmatpush1.msra.mxu0 0.0
    %582 = vmatprep.subr.mxu0 0.0
    %583 = vmatpush1.msra.mxu0 0.0
    %584 = vmatprep.subr.mxu0 0.0
    %585 = vmatpush1.msra.mxu0 0.0
    %586 = vmatprep.subr.mxu0 0.0
    %587 = vmatpush1.msra.mxu0 0.0
    %588 = vmatprep.subr.mxu0 0.0
    %589 = vmatpush1.msra.mxu0 0.0
    %590 = vmatprep.subr.mxu0 0.0
    %591 = vmatpush1.msra.mxu0 0.0
    %592 = vmatprep.subr.mxu0 0.0
    %593 = vmatpush1.msra.mxu0 0.0
    %594 = vmatprep.subr.mxu0 0.0
    %595 = vmatpush1.msra.mxu0 0.0
    %596 = vmatprep.subr.mxu0 0.0
    %597 = vmatpush1.msra.mxu0 0.0
    %598 = vmatprep.subr.mxu0 0.0
    %599 = vmatpush1.msra.mxu0 0.0
    %600 = vmatprep.subr.mxu0 0.0
    %601 = vmatpush1.msra.mxu0 0.0
    %602 = vmatprep.subr.mxu0 0.0
    %603 = vmatpush1.msra.mxu0 0.0
    %604 = vmatprep.subr.mxu0 0.0
    %605 = vmatpush1.msra.mxu0 0.0
    %606 = vmatprep.subr.mxu0 0.0
    %607 = vmatpush1.msra.mxu0 0.0
    %608 = vmatprep.subr.mxu0 0.0
    %609 = vmatpush1.msra.mxu0 0.0
    %610 = vmatprep.subr.mxu0 0.0
    %611 = vmatpush1.msra.mxu0 0.0
    %612 = vmatprep.subr.mxu0 0.0
    %613 = vmatpush1.msra.mxu0 0.0
    %614 = vmatprep.subr.mxu0 0.0
    %615 = vmatpush1.msra.mxu0 0.0
    %616 = vmatprep.subr.mxu0 0.0
    %617 = vmatpush1.msra.mxu0 0.0
    %618 = vmatprep.subr.mxu0 0.0
    %619 = vmatpush1.msra.mxu0 0.0
    %620 = vmatprep.subr.mxu0 0.0
    %621 = vmatpush1.msra.mxu0 0.0
    %622 = vmatprep.subr.mxu0 0.0
    %623 = vmatpush1.msra.mxu0 0.0
    %624 = vmatprep.subr.mxu0 0.0
    %625 = vmatpush1.msra.mxu0 0.0
    %626 = vmatprep.subr.mxu0 0.0
    %627 = vmatpush1.msra.mxu0 0.0
    %628 = vmatprep.mubr.f32.mxu0 0.0
    %629 = vmatmul.mubr.f32.gmra.mrb[0].mxu0 %v559
    %v630 = vpop.f32.mrb[0].mxu0
    %v631 = vadd.f32 0.0, %v630
    %v632 = vpop.f32.mrb[0].mxu0
    %633 = vmatprep.mubr.f32.mxu0 0.0
    %634 = vmatmul.mubr.f32.gmra.mrb[0].mxu0 %v562
    %v635 = vpop.f32.mrb[0].mxu0
    %v636 = vadd.f32 0.0, %v635
    %v637 = vpop.f32.mrb[0].mxu0
    %638 = vdwg.mxu0
    %v639 = vrcp.pop %v631
    %v640 = vrcp.pop %v636
    %v641 = vmul.f32 %v555, %v639
    %v642 = vmul.f32 %v557, %v640
    %651 = vrot.lane.b32.xlu0 %v412, 64
    %v652 = vpop.permute.xlu0 %651
    %653 = vrot.lane.b32.xlu0 %v413, 64
    %v654 = vpop.permute.xlu0 %653
    %655 = vrot.lane.b32.xlu0 %v414, 64
    %v656 = vpop.permute.xlu0 %655
    %657 = vrot.lane.b32.xlu0 %v415, 64
    %v658 = vpop.permute.xlu0 %657
    %659 = vrot.lane.b32.xlu0 %v416, 64
    %v660 = vpop.permute.xlu0 %659
    %661 = vrot.lane.b32.xlu0 %v417, 64
    %v662 = vpop.permute.xlu0 %661
    %663 = vrot.lane.b32.xlu0 %v418, 64
    %v664 = vpop.permute.xlu0 %663
    %665 = vrot.lane.b32.xlu0 %v419, 64
    %v666 = vpop.permute.xlu0 %665
    %v676 = vsel %vm545, %v641, 0
    %v679 = vsel %vm545, %v642, 0
    %681 = vmatprep.subr.mxu0 0.0
    %682 = vmatpush1.msra.mxu0 %v652
    %683 = vmatprep.subr.mxu0 0.0
    %684 = vmatpush1.msra.mxu0 %v654
    %685 = vmatprep.subr.mxu0 0.0
    %686 = vmatpush1.msra.mxu0 %v656
    %687 = vmatprep.subr.mxu0 0.0
    %688 = vmatpush1.msra.mxu0 %v658
    %689 = vmatprep.subr.mxu0 0.0
    %690 = vmatpush1.msra.mxu0 %v660
    %691 = vmatprep.subr.mxu0 0.0
    %692 = vmatpush1.msra.mxu0 %v662
    %693 = vmatprep.subr.mxu0 0.0
    %694 = vmatpush1.msra.mxu0 %v664
    %695 = vmatprep.subr.mxu0 0.0
    %696 = vmatpush1.msra.mxu0 %v666
    %697 = vmatprep.subr.mxu0 0.0
    %698 = vmatpush1.msra.mxu0 0.0
    %699 = vmatprep.subr.mxu0 0.0
    %700 = vmatpush1.msra.mxu0 0.0
    %701 = vmatprep.subr.mxu0 0.0
    %702 = vmatpush1.msra.mxu0 0.0
    %703 = vmatprep.subr.mxu0 0.0
    %704 = vmatpush1.msra.mxu0 0.0
    %705 = vmatprep.subr.mxu0 0.0
    %706 = vmatpush1.msra.mxu0 0.0
    %707 = vmatprep.subr.mxu0 0.0
    %708 = vmatpush1.msra.mxu0 0.0
    %709 = vmatprep.subr.mxu0 0.0
    %710 = vmatpush1.msra.mxu0 0.0
    %711 = vmatprep.subr.mxu0 0.0
    %712 = vmatpush1.msra.mxu0 0.0
    %713 = vmatprep.subr.mxu0 0.0
    %714 = vmatpush1.msra.mxu0 0.0
    %715 = vmatprep.subr.mxu0 0.0
    %716 = vmatpush1.msra.mxu0 0.0
    %717 = vmatprep.subr.mxu0 0.0
    %718 = vmatpush1.msra.mxu0 0.0
    %719 = vmatprep.subr.mxu0 0.0
    %720 = vmatpush1.msra.mxu0 0.0
    %721 = vmatprep.subr.mxu0 0.0
    %722 = vmatpush1.msra.mxu0 0.0
    %723 = vmatprep.subr.mxu0 0.0
    %724 = vmatpush1.msra.mxu0 0.0
    %725 = vmatprep.subr.mxu0 0.0
    %726 = vmatpush1.msra.mxu0 0.0
    %727 = vmatprep.subr.mxu0 0.0
    %728 = vmatpush1.msra.mxu0 0.0
    %729 = vmatprep.subr.mxu0 0.0
    %730 = vmatpush1.msra.mxu0 0.0
    %731 = vmatprep.subr.mxu0 0.0
    %732 = vmatpush1.msra.mxu0 0.0
    %733 = vmatprep.subr.mxu0 0.0
    %734 = vmatpush1.msra.mxu0 0.0
    %735 = vmatprep.subr.mxu0 0.0
    %736 = vmatpush1.msra.mxu0 0.0
    %737 = vmatprep.subr.mxu0 0.0
    %738 = vmatpush1.msra.mxu0 0.0
    %739 = vmatprep.subr.mxu0 0.0
    %740 = vmatpush1.msra.mxu0 0.0
    %741 = vmatprep.subr.mxu0 0.0
    %742 = vmatpush1.msra.mxu0 0.0
    %743 = vmatprep.subr.mxu0 0.0
    %744 = vmatpush1.msra.mxu0 0.0
    %745 = vmatprep.mubr.f32.mxu0 0.0
    %746 = vmatmul.mubr.f32.gmra.mrb[0].mxu0 %v676
    %v747 = vpop.f32.mrb[0].mxu0
    %v748 = vadd.f32 0.0, %v747
    %v749 = vpop.f32.mrb[0].mxu0
    %750 = vmatprep.mubr.f32.mxu0 0.0
    %751 = vmatmul.mubr.f32.gmra.mrb[0].mxu0 %v679
    %v752 = vpop.f32.mrb[0].mxu0
    %v753 = vadd.f32 0.0, %v752
    %v754 = vpop.f32.mrb[0].mxu0
    %755 = vdwg.mxu0
    %v756 = vlaneseq
    %v757 = vshrl.u32 %v756, 7
    %v758 = vsub.s32 0, %v757
    %v759 = vrot.slane %v262, %v758
    %v761 = vsel %vm148, %v748, 0
    %v764 = vsel %vm148, %v753, 0
    %766 = vmatprep.subr.mxu0 0.0
    %767 = vmatpush1.msra.mxu0 %v258
    %768 = vmatprep.subr.mxu0 0.0
    %769 = vmatpush1.msra.mxu0 %v259
    %770 = vmatprep.subr.mxu0 0.0
    %771 = vmatpush1.msra.mxu0 %v260
    %772 = vmatprep.subr.mxu0 0.0
    %773 = vmatpush1.msra.mxu0 %v261
    %774 = vmatprep.subr.mxu0 0.0
    %775 = vmatpush1.msra.mxu0 0.0
    %776 = vmatprep.subr.mxu0 0.0
    %777 = vmatpush1.msra.mxu0 0.0
    %778 = vmatprep.subr.mxu0 0.0
    %779 = vmatpush1.msra.mxu0 0.0
    %780 = vmatprep.subr.mxu0 0.0
    %781 = vmatpush1.msra.mxu0 0.0
    %782 = vmatprep.subr.mxu0 0.0
    %783 = vmatpush1.msra.mxu0 0.0
    %784 = vmatprep.subr.mxu0 0.0
    %785 = vmatpush1.msra.mxu0 0.0
    %786 = vmatprep.subr.mxu0 0.0
    %787 = vmatpush1.msra.mxu0 0.0
    %788 = vmatprep.subr.mxu0 0.0
    %789 = vmatpush1.msra.mxu0 0.0
    %790 = vmatprep.subr.mxu0 0.0
    %791 = vmatpush1.msra.mxu0 0.0
    %792 = vmatprep.subr.mxu0 0.0
    %793 = vmatpush1.msra.mxu0 0.0
    %794 = vmatprep.subr.mxu0 0.0
    %795 = vmatpush1.msra.mxu0 0.0
    %796 = vmatprep.subr.mxu0 0.0
    %797 = vmatpush1.msra.mxu0 0.0
    %798 = vmatprep.subr.mxu0 0.0
    %799 = vmatpush1.msra.mxu0 0.0
    %800 = vmatprep.subr.mxu0 0.0
    %801 = vmatpush1.msra.mxu0 0.0
    %802 = vmatprep.subr.mxu0 0.0
    %803 = vmatpush1.msra.mxu0 0.0
    %804 = vmatprep.subr.mxu0 0.0
    %805 = vmatpush1.msra.mxu0 0.0
    %806 = vmatprep.subr.mxu0 0.0
    %807 = vmatpush1.msra.mxu0 0.0
    %808 = vmatprep.subr.mxu0 0.0
    %809 = vmatpush1.msra.mxu0 0.0
    %810 = vmatprep.subr.mxu0 0.0
    %811 = vmatpush1.msra.mxu0 0.0
    %812 = vmatprep.subr.mxu0 0.0
    %813 = vmatpush1.msra.mxu0 0.0
    %814 = vmatprep.subr.mxu0 0.0
    %815 = vmatpush1.msra.mxu0 0.0
    %816 = vmatprep.subr.mxu0 0.0
    %817 = vmatpush1.msra.mxu0 0.0
    %818 = vmatprep.subr.mxu0 0.0
    %819 = vmatpush1.msra.mxu0 0.0
    %820 = vmatprep.subr.mxu0 0.0
    %821 = vmatpush1.msra.mxu0 0.0
    %822 = vmatprep.subr.mxu0 0.0
    %823 = vmatpush1.msra.mxu0 0.0
    %824 = vmatprep.subr.mxu0 0.0
    %825 = vmatpush1.msra.mxu0 0.0
    %826 = vmatprep.subr.mxu0 0.0
    %827 = vmatpush1.msra.mxu0 0.0
    %828 = vmatprep.subr.mxu0 0.0
    %829 = vmatpush1.msra.mxu0 0.0
    %830 = vmatprep.mubr.f32.mxu0 0.0
    %831 = vmatmul.mubr.f32.gmra.mrb[0].mxu0 %v761
    %v832 = vpop.f32.mrb[0].mxu0
    %v833 = vadd.f32 %v759, %v832
    %v834 = vpop.f32.mrb[0].mxu0
    %835 = vmatprep.mubr.f32.mxu0 0.0
    %836 = vmatmul.mubr.f32.gmra.mrb[0].mxu0 %v764
    %v837 = vpop.f32.mrb[0].mxu0
    %v838 = vadd.f32 %v759, %v837
    %v839 = vpop.f32.mrb[0].mxu0
    %840 = vdwg.mxu0
    %v841 = vadd.f32 %v196, %v833
    %v842 = vadd.f32 %v197, %v838
    %v843 = vld [vmem:[#allocation2 + $0xd0] sm:$0x1]
    %v844 = vld [vmem:[#allocation2 + $0xd8] sm:$0x1]
    %v845 = vsel %vm148, %v841, 0.0
    %846 = vadd.xlane.f32.xlu0 %v845
    %v847 = vpop.xlane.xlu0 %846
    %v848 = vsel %vm148, %v842, 0.0
    %849 = vadd.xlane.f32.xlu0 %v848
    %v850 = vpop.xlane.xlu0 %849
    %v851 = vmul.f32 %v847, %v206
    %v852 = vmul.f32 %v850, %v206
    %v853 = vsub.f32 %v841, %v851
    %v854 = vsub.f32 %v842, %v852
    %v855 = vmul.f32 %v853, %v853
    %v856 = vmul.f32 %v854, %v854
    %v857 = vsel %vm148, %v855, 0.0
    %858 = vadd.xlane.f32.xlu0 %v857
    %v859 = vpop.xlane.xlu0 %858
    %v860 = vsel %vm148, %v856, 0.0
    %861 = vadd.xlane.f32.xlu0 %v860
    %v862 = vpop.xlane.xlu0 %861
    %v863 = vmul.f32 %v859, 0.032258064
    %v864 = vmul.f32 %v862, 0.032258064
    %v865 = vrsqrt.pop %v863
    %v866 = vmul.f32 %v863, %v865
    %vm867 = vcmp.eq.f32.partialorder %v863, inf
    %v868 = vsel %vm867, %v863, %v866
    %vm869 = vcmp.eq.f32.partialorder %v863, 0.0
    %v870 = vand.u32 %v863, 2147483648
    %v871 = vsel %vm869, %v870, %v868
    %v872 = vrsqrt.pop %v864
    %v873 = vmul.f32 %v864, %v872
    %vm874 = vcmp.eq.f32.partialorder %v864, inf
    %v875 = vsel %vm874, %v864, %v873
    %vm876 = vcmp.eq.f32.partialorder %v864, 0.0
    %v877 = vand.u32 %v864, 2147483648
    %v878 = vsel %vm876, %v877, %v875
    %v879 = vlaneseq
    %v880 = vshrl.u32 %v879, 7
    %v881 = vsub.s32 0, %v880
    %v882 = vrot.slane %v843, %v881
    %v883 = vmul.f32 %v882, %v853
    %v884 = vmul.f32 %v882, %v854
    %v885 = vadd.f32 %v871, 1e-06
    %v886 = vadd.f32 %v878, 1e-06
    %v887 = vrcp.pop %v885
    %v888 = vmul.f32 %v883, %v887
    %v889 = vrcp.pop %v886
    %v890 = vmul.f32 %v884, %v889
    %v891 = vlaneseq
    %v892 = vshrl.u32 %v891, 7
    %v893 = vsub.s32 0, %v892
    %v894 = vrot.slane %v844, %v893
    %v895 = vadd.f32 %v888, %v894
    %v896 = vadd.f32 %v890, %v894
    %v897 = vld [vmem:[#allocation2 + $0x50] sm:$0xff]
    %v898 = vld [vmem:[#allocation2 + $0x58] sm:$0xff]
    %v899 = vld [vmem:[#allocation2 + $0x60] sm:$0xff]
    %v900 = vld [vmem:[#allocation2 + $0x68] sm:$0xff]
    %v901 = vld [vmem:[#allocation2 + $0x70] sm:$0x1]
    %v902 = vld [vmem:[#allocation2 + $0x78] sm:$0xff]
    %v903 = vld [vmem:[#allocation2 + $0x80] sm:$0xff]
    %v904 = vld [vmem:[#allocation2 + $0x88] sm:$0xff]
    %v905 = vld [vmem:[#allocation2 + $0x90] sm:$0xff]
    %v906 = vld [vmem:[#allocation2 + $0x98] sm:$0xff]
    %v907 = vld [vmem:[#allocation2 + $0xa0] sm:$0xff]
    %v908 = vld [vmem:[#allocation2 + $0xa8] sm:$0xff]
    %v909 = vld [vmem:[#allocation2 + $0xb0] sm:$0xff]
    %v910 = vld [vmem:[#allocation2 + $0xb8] sm:$0x1]
    %v911 = vlaneseq
    %v912 = vshrl.u32 %v911, 7
    %v913 = vsub.s32 0, %v912
    %v914 = vrot.slane %v901, %v913
    %v916 = vsel %vm148, %v895, 0
    %v919 = vsel %vm148, %v896, 0
    %921 = vmatprep.subr.mxu0 0.0
    %922 = vmatpush1.msra.mxu0 %v897
    %923 = vmatprep.subr.mxu0 0.0
    %924 = vmatpush1.msra.mxu0 %v898
    %925 = vmatprep.subr.mxu0 0.0
    %926 = vmatpush1.msra.mxu0 %v899
    %927 = vmatprep.subr.mxu0 0.0
    %928 = vmatpush1.msra.mxu0 %v900
    %929 = vmatprep.subr.mxu0 0.0
    %930 = vmatpush1.msra.mxu0 0.0
    %931 = vmatprep.subr.mxu0 0.0
    %932 = vmatpush1.msra.mxu0 0.0
    %933 = vmatprep.subr.mxu0 0.0
    %934 = vmatpush1.msra.mxu0 0.0
    %935 = vmatprep.subr.mxu0 0.0
    %936 = vmatpush1.msra.mxu0 0.0
    %937 = vmatprep.subr.mxu0 0.0
    %938 = vmatpush1.msra.mxu0 0.0
    %939 = vmatprep.subr.mxu0 0.0
    %940 = vmatpush1.msra.mxu0 0.0
    %941 = vmatprep.subr.mxu0 0.0
    %942 = vmatpush1.msra.mxu0 0.0
    %943 = vmatprep.subr.mxu0 0.0
    %944 = vmatpush1.msra.mxu0 0.0
    %945 = vmatprep.subr.mxu0 0.0
    %946 = vmatpush1.msra.mxu0 0.0
    %947 = vmatprep.subr.mxu0 0.0
    %948 = vmatpush1.msra.mxu0 0.0
    %949 = vmatprep.subr.mxu0 0.0
    %950 = vmatpush1.msra.mxu0 0.0
    %951 = vmatprep.subr.mxu0 0.0
    %952 = vmatpush1.msra.mxu0 0.0
    %953 = vmatprep.subr.mxu0 0.0
    %954 = vmatpush1.msra.mxu0 0.0
    %955 = vmatprep.subr.mxu0 0.0
    %956 = vmatpush1.msra.mxu0 0.0
    %957 = vmatprep.subr.mxu0 0.0
    %958 = vmatpush1.msra.mxu0 0.0
    %959 = vmatprep.subr.mxu0 0.0
    %960 = vmatpush1.msra.mxu0 0.0
    %961 = vmatprep.subr.mxu0 0.0
    %962 = vmatpush1.msra.mxu0 0.0
    %963 = vmatprep.subr.mxu0 0.0
    %964 = vmatpush1.msra.mxu0 0.0
    %965 = vmatprep.subr.mxu0 0.0
    %966 = vmatpush1.msra.mxu0 0.0
    %967 = vmatprep.subr.mxu0 0.0
    %968 = vmatpush1.msra.mxu0 0.0
    %969 = vmatprep.subr.mxu0 0.0
    %970 = vmatpush1.msra.mxu0 0.0
    %971 = vmatprep.subr.mxu0 0.0
    %972 = vmatpush1.msra.mxu0 0.0
    %973 = vmatprep.subr.mxu0 0.0
    %974 = vmatpush1.msra.mxu0 0.0
    %975 = vmatprep.subr.mxu0 0.0
    %976 = vmatpush1.msra.mxu0 0.0
    %977 = vmatprep.subr.mxu0 0.0
    %978 = vmatpush1.msra.mxu0 0.0
    %979 = vmatprep.subr.mxu0 0.0
    %980 = vmatpush1.msra.mxu0 0.0
    %981 = vmatprep.subr.mxu0 0.0
    %982 = vmatpush1.msra.mxu0 0.0
    %983 = vmatprep.subr.mxu0 0.0
    %984 = vmatpush1.msra.mxu0 0.0
    %985 = vmatprep.mubr.f32.mxu0 0.0
    %986 = vmatmul.mubr.f32.gmra.mrb[0].mxu0 %v916
    %v987 = vpop.f32.mrb[0].mxu0
    %v988 = vadd.f32 %v914, %v987
    %v989 = vpop.f32.mrb[0].mxu0
    %990 = vmatprep.mubr.f32.mxu0 0.0
    %991 = vmatmul.mubr.f32.gmra.mrb[0].mxu0 %v919
    %v992 = vpop.f32.mrb[0].mxu0
    %v993 = vadd.f32 %v914, %v992
    %v994 = vpop.f32.mrb[0].mxu0
    %995 = vdwg.mxu0
    %v996 = vmax.f32 %v988, 0.0
    %v997 = vmax.f32 %v993, 0.0
    %v998 = vlaneseq
    %v999 = vshrl.u32 %v998, 7
    %v1000 = vsub.s32 0, %v999
    %v1001 = vrot.slane %v910, %v1000
    %v1003 = vsel %vm545, %v996, 0
    %v1006 = vsel %vm545, %v997, 0
    %1008 = vmatprep.subr.mxu0 0.0
    %1009 = vmatpush1.msra.mxu0 %v902
    %1010 = vmatprep.subr.mxu0 0.0
    %1011 = vmatpush1.msra.mxu0 %v903
    %1012 = vmatprep.subr.mxu0 0.0
    %1013 = vmatpush1.msra.mxu0 %v904
    %1014 = vmatprep.subr.mxu0 0.0
    %1015 = vmatpush1.msra.mxu0 %v905
    %1016 = vmatprep.subr.mxu0 0.0
    %1017 = vmatpush1.msra.mxu0 %v906
    %1018 = vmatprep.subr.mxu0 0.0
    %1019 = vmatpush1.msra.mxu0 %v907
    %1020 = vmatprep.subr.mxu0 0.0
    %1021 = vmatpush1.msra.mxu0 %v908
    %1022 = vmatprep.subr.mxu0 0.0
    %1023 = vmatpush1.msra.mxu0 %v909
    %1024 = vmatprep.subr.mxu0 0.0
    %1025 = vmatpush1.msra.mxu0 0.0
    %1026 = vmatprep.subr.mxu0 0.0
    %1027 = vmatpush1.msra.mxu0 0.0
    %1028 = vmatprep.subr.mxu0 0.0
    %1029 = vmatpush1.msra.mxu0 0.0
    %1030 = vmatprep.subr.mxu0 0.0
    %1031 = vmatpush1.msra.mxu0 0.0
    %1032 = vmatprep.subr.mxu0 0.0
    %1033 = vmatpush1.msra.mxu0 0.0
    %1034 = vmatprep.subr.mxu0 0.0
    %1035 = vmatpush1.msra.mxu0 0.0
    %1036 = vmatprep.subr.mxu0 0.0
    %1037 = vmatpush1.msra.mxu0 0.0
    %1038 = vmatprep.subr.mxu0 0.0
    %1039 = vmatpush1.msra.mxu0 0.0
    %1040 = vmatprep.subr.mxu0 0.0
    %1041 = vmatpush1.msra.mxu0 0.0
    %1042 = vmatprep.subr.mxu0 0.0
    %1043 = vmatpush1.msra.mxu0 0.0
    %1044 = vmatprep.subr.mxu0 0.0
    %1045 = vmatpush1.msra.mxu0 0.0
    %1046 = vmatprep.subr.mxu0 0.0
    %1047 = vmatpush1.msra.mxu0 0.0
    %1048 = vmatprep.subr.mxu0 0.0
    %1049 = vmatpush1.msra.mxu0 0.0
    %1050 = vmatprep.subr.mxu0 0.0
    %1051 = vmatpush1.msra.mxu0 0.0
    %1052 = vmatprep.subr.mxu0 0.0
    %1053 = vmatpush1.msra.mxu0 0.0
    %1054 = vmatprep.subr.mxu0 0.0
    %1055 = vmatpush1.msra.mxu0 0.0
    %1056 = vmatprep.subr.mxu0 0.0
    %1057 = vmatpush1.msra.mxu0 0.0
    %1058 = vmatprep.subr.mxu0 0.0
    %1059 = vmatpush1.msra.mxu0 0.0
    %1060 = vmatprep.subr.mxu0 0.0
    %1061 = vmatpush1.msra.mxu0 0.0
    %1062 = vmatprep.subr.mxu0 0.0
    %1063 = vmatpush1.msra.mxu0 0.0
    %1064 = vmatprep.subr.mxu0 0.0
    %1065 = vmatpush1.msra.mxu0 0.0
    %1066 = vmatprep.subr.mxu0 0.0
    %1067 = vmatpush1.msra.mxu0 0.0
    %1068 = vmatprep.subr.mxu0 0.0
    %1069 = vmatpush1.msra.mxu0 0.0
    %1070 = vmatprep.subr.mxu0 0.0
    %1071 = vmatpush1.msra.mxu0 0.0
    %1072 = vmatprep.mubr.f32.mxu0 0.0
    %1073 = vmatmul.mubr.f32.gmra.mrb[0].mxu0 %v1003
    %v1074 = vpop.f32.mrb[0].mxu0
    %v1075 = vadd.f32 %v1001, %v1074
    %v1076 = vpop.f32.mrb[0].mxu0
    %1077 = vmatprep.mubr.f32.mxu0 0.0
    %1078 = vmatmul.mubr.f32.gmra.mrb[0].mxu0 %v1006
    %v1079 = vpop.f32.mrb[0].mxu0
    %v1080 = vadd.f32 %v1001, %v1079
    %v1081 = vpop.f32.mrb[0].mxu0
    %1082 = vdwg.mxu0
    %v1083 = vadd.f32 %v841, %v1075
    %v1084 = vadd.f32 %v842, %v1080
    %v1085 = vld [vmem:[#allocation2 + $0x1a0] sm:$0x1]
    %v1086 = vld [vmem:[#allocation2 + $0x1a8] sm:$0x1]
    %v1087 = vsel %vm148, %v1083, 0.0
    %1088 = vadd.xlane.f32.xlu0 %v1087
    %v1089 = vpop.xlane.xlu0 %1088
    %v1090 = vsel %vm148, %v1084, 0.0
    %1091 = vadd.xlane.f32.xlu0 %v1090
    %v1092 = vpop.xlane.xlu0 %1091
    %v1093 = vmul.f32 %v1089, %v206
    %v1094 = vmul.f32 %v1092, %v206
    %v1095 = vsub.f32 %v1083, %v1093
    %v1096 = vsub.f32 %v1084, %v1094
    %v1097 = vmul.f32 %v1095, %v1095
    %v1098 = vmul.f32 %v1096, %v1096
    %v1099 = vsel %vm148, %v1097, 0.0
    %1100 = vadd.xlane.f32.xlu0 %v1099
    %v1101 = vpop.xlane.xlu0 %1100
    %v1102 = vsel %vm148, %v1098, 0.0
    %1103 = vadd.xlane.f32.xlu0 %v1102
    %v1104 = vpop.xlane.xlu0 %1103
    %v1105 = vmul.f32 %v1101, 0.032258064
    %v1106 = vmul.f32 %v1104, 0.032258064
    %v1107 = vrsqrt.pop %v1105
    %v1108 = vmul.f32 %v1105, %v1107
    %vm1109 = vcmp.eq.f32.partialorder %v1105, inf
    %v1110 = vsel %vm1109, %v1105, %v1108
    %vm1111 = vcmp.eq.f32.partialorder %v1105, 0.0
    %v1112 = vand.u32 %v1105, 2147483648
    %v1113 = vsel %vm1111, %v1112, %v1110
    %v1114 = vrsqrt.pop %v1106
    %v1115 = vmul.f32 %v1106, %v1114
    %vm1116 = vcmp.eq.f32.partialorder %v1106, inf
    %v1117 = vsel %vm1116, %v1106, %v1115
    %vm1118 = vcmp.eq.f32.partialorder %v1106, 0.0
    %v1119 = vand.u32 %v1106, 2147483648
    %v1120 = vsel %vm1118, %v1119, %v1117
    %v1121 = vlaneseq
    %v1122 = vshrl.u32 %v1121, 7
    %v1123 = vsub.s32 0, %v1122
    %v1124 = vrot.slane %v1085, %v1123
    %v1125 = vmul.f32 %v1124, %v1095
    %v1126 = vmul.f32 %v1124, %v1096
    %v1127 = vadd.f32 %v1113, 1e-06
    %v1128 = vadd.f32 %v1120, 1e-06
    %v1129 = vrcp.pop %v1127
    %v1130 = vmul.f32 %v1125, %v1129
    %v1131 = vrcp.pop %v1128
    %v1132 = vmul.f32 %v1126, %v1131
    %v1133 = vlaneseq
    %v1134 = vshrl.u32 %v1133, 7
    %v1135 = vsub.s32 0, %v1134
    %v1136 = vrot.slane %v1086, %v1135
    %v1137 = vadd.f32 %v1130, %v1136
    %v1138 = vadd.f32 %v1132, %v1136
    %v1139 = vld [vmem:[#allocation2 + $0xe0] sm:$0xff]
    %v1140 = vld [vmem:[#allocation2 + $0xe8] sm:$0xff]
    %v1141 = vld [vmem:[#allocation2 + $0xf0] sm:$0xff]
    %v1142 = vld [vmem:[#allocation2 + $0xf8] sm:$0xff]
    %v1143 = vld [vmem:[#allocation2 + $0x100] sm:$0x1]
    %v1144 = vld [vmem:[#allocation2 + $0x108] sm:$0xff]
    %v1145 = vld [vmem:[#allocation2 + $0x110] sm:$0xff]
    %v1146 = vld [vmem:[#allocation2 + $0x118] sm:$0xff]
    %v1147 = vld [vmem:[#allocation2 + $0x120] sm:$0xff]
    %v1148 = vld [vmem:[#allocation2 + $0x128] sm:$0x1]
    %v1149 = vlaneseq
    %v1150 = vshrl.u32 %v1149, 7
    %v1151 = vsub.s32 0, %v1150
    %v1152 = vrot.slane %v1143, %v1151
    %v1154 = vsel %vm148, %v1137, 0
    %v1157 = vsel %vm148, %v1138, 0
    %1159 = vmatprep.subr.mxu0 0.0
    %1160 = vmatpush1.msra.mxu0 %v1139
    %1161 = vmatprep.subr.mxu0 0.0
    %1162 = vmatpush1.msra.mxu0 %v1140
    %1163 = vmatprep.subr.mxu0 0.0
    %1164 = vmatpush1.msra.mxu0 %v1141
    %1165 = vmatprep.subr.mxu0 0.0
    %1166 = vmatpush1.msra.mxu0 %v1142
    %1167 = vmatprep.subr.mxu0 0.0
    %1168 = vmatpush1.msra.mxu0 0.0
    %1169 = vmatprep.subr.mxu0 0.0
    %1170 = vmatpush1.msra.mxu0 0.0
    %1171 = vmatprep.subr.mxu0 0.0
    %1172 = vmatpush1.msra.mxu0 0.0
    %1173 = vmatprep.subr.mxu0 0.0
    %1174 = vmatpush1.msra.mxu0 0.0
    %1175 = vmatprep.subr.mxu0 0.0
    %1176 = vmatpush1.msra.mxu0 0.0
    %1177 = vmatprep.subr.mxu0 0.0
    %1178 = vmatpush1.msra.mxu0 0.0
    %1179 = vmatprep.subr.mxu0 0.0
    %1180 = vmatpush1.msra.mxu0 0.0
    %1181 = vmatprep.subr.mxu0 0.0
    %1182 = vmatpush1.msra.mxu0 0.0
    %1183 = vmatprep.subr.mxu0 0.0
    %1184 = vmatpush1.msra.mxu0 0.0
    %1185 = vmatprep.subr.mxu0 0.0
    %1186 = vmatpush1.msra.mxu0 0.0
    %1187 = vmatprep.subr.mxu0 0.0
    %1188 = vmatpush1.msra.mxu0 0.0
    %1189 = vmatprep.subr.mxu0 0.0
    %1190 = vmatpush1.msra.mxu0 0.0
    %1191 = vmatprep.subr.mxu0 0.0
    %1192 = vmatpush1.msra.mxu0 0.0
    %1193 = vmatprep.subr.mxu0 0.0
    %1194 = vmatpush1.msra.mxu0 0.0
    %1195 = vmatprep.subr.mxu0 0.0
    %1196 = vmatpush1.msra.mxu0 0.0
    %1197 = vmatprep.subr.mxu0 0.0
    %1198 = vmatpush1.msra.mxu0 0.0
    %1199 = vmatprep.subr.mxu0 0.0
    %1200 = vmatpush1.msra.mxu0 0.0
    %1201 = vmatprep.subr.mxu0 0.0
    %1202 = vmatpush1.msra.mxu0 0.0
    %1203 = vmatprep.subr.mxu0 0.0
    %1204 = vmatpush1.msra.mxu0 0.0
    %1205 = vmatprep.subr.mxu0 0.0
    %1206 = vmatpush1.msra.mxu0 0.0
    %1207 = vmatprep.subr.mxu0 0.0
    %1208 = vmatpush1.msra.mxu0 0.0
    %1209 = vmatprep.subr.mxu0 0.0
    %1210 = vmatpush1.msra.mxu0 0.0
    %1211 = vmatprep.subr.mxu0 0.0
    %1212 = vmatpush1.msra.mxu0 0.0
    %1213 = vmatprep.subr.mxu0 0.0
    %1214 = vmatpush1.msra.mxu0 0.0
    %1215 = vmatprep.subr.mxu0 0.0
    %1216 = vmatpush1.msra.mxu0 0.0
    %1217 = vmatprep.subr.mxu0 0.0
    %1218 = vmatpush1.msra.mxu0 0.0
    %1219 = vmatprep.subr.mxu0 0.0
    %1220 = vmatpush1.msra.mxu0 0.0
    %1221 = vmatprep.subr.mxu0 0.0
    %1222 = vmatpush1.msra.mxu0 0.0
    %1223 = vmatprep.mubr.f32.mxu0 0.0
    %1224 = vmatmul.mubr.f32.gmra.mrb[0].mxu0 %v1154
    %v1225 = vpop.f32.mrb[0].mxu0
    %v1226 = vadd.f32 %v1152, %v1225
    %v1227 = vpop.f32.mrb[0].mxu0
    %1228 = vmatprep.mubr.f32.mxu0 0.0
    %1229 = vmatmul.mubr.f32.gmra.mrb[0].mxu0 %v1157
    %v1230 = vpop.f32.mrb[0].mxu0
    %v1231 = vadd.f32 %v1152, %v1230
    %v1232 = vpop.f32.mrb[0].mxu0
    %1233 = vdwg.mxu0
    %v1234 = vmul.f32 %v1226, %v357
    %v1235 = vmul.f32 %v1231, %v359
    %v1236 = vmul.f32 %v1226, %v361
    %v1237 = vmul.f32 %v1231, %v363
    %v1238 = vmul.f32 %v1226, %v365
    %v1239 = vmul.f32 %v1231, %v367
    %v1240 = vmul.f32 %v1226, %v369
    %v1241 = vmul.f32 %v1231, %v371
    %v1242 = vmul.f32 %v1226, %v389
    %v1243 = vmul.f32 %v1231, %v391
    %v1244 = vmul.f32 %v1226, %v393
    %v1245 = vmul.f32 %v1231, %v395
    %v1246 = vmul.f32 %v1226, %v397
    %v1247 = vmul.f32 %v1231, %v399
    %v1248 = vmul.f32 %v1226, %v401
    %v1249 = vmul.f32 %v1231, %v403
    %1258 = vrot.lane.b32.xlu0 %v1234, 96
    %v1259 = vpop.permute.xlu0 %1258
    %1260 = vrot.lane.b32.xlu0 %v1235, 96
    %v1261 = vpop.permute.xlu0 %1260
    %1262 = vrot.lane.b32.xlu0 %v1236, 96
    %v1263 = vpop.permute.xlu0 %1262
    %1264 = vrot.lane.b32.xlu0 %v1237, 96
    %v1265 = vpop.permute.xlu0 %1264
    %1266 = vrot.lane.b32.xlu0 %v1238, 96
    %v1267 = vpop.permute.xlu0 %1266
    %1268 = vrot.lane.b32.xlu0 %v1239, 96
    %v1269 = vpop.permute.xlu0 %1268
    %1270 = vrot.lane.b32.xlu0 %v1240, 96
    %v1271 = vpop.permute.xlu0 %1270
    %1272 = vrot.lane.b32.xlu0 %v1241, 96
    %v1273 = vpop.permute.xlu0 %1272
    %v1275 = vsel %vm148, %v1226, 0
    %v1278 = vsel %vm148, %v1231, 0
    %v1280 = vsel %vm148, %v1259, 0
    %v1282 = vsel %vm148, %v1261, 0
    %v1284 = vsel %vm148, %v1263, 0
    %v1286 = vsel %vm148, %v1265, 0
    %v1288 = vsel %vm148, %v1267, 0
    %v1290 = vsel %vm148, %v1269, 0
    %v1292 = vsel %vm148, %v1271, 0
    %v1294 = vsel %vm148, %v1273, 0
    %1296 = vmatprep.subr.mxu0 0.0
    %1297 = vmatpush1.xpose.msra.mxu0 %v1280
    %1298 = vmatprep.subr.mxu0 0.0
    %1299 = vmatpush1.xpose.msra.mxu0 %v1282
    %1300 = vmatprep.subr.mxu0 0.0
    %1301 = vmatpush1.xpose.msra.mxu0 %v1284
    %1302 = vmatprep.subr.mxu0 0.0
    %1303 = vmatpush1.xpose.msra.mxu0 %v1286
    %1304 = vmatprep.subr.mxu0 0.0
    %1305 = vmatpush1.xpose.msra.mxu0 %v1288
    %1306 = vmatprep.subr.mxu0 0.0
    %1307 = vmatpush1.xpose.msra.mxu0 %v1290
    %1308 = vmatprep.subr.mxu0 0.0
    %1309 = vmatpush1.xpose.msra.mxu0 %v1292
    %1310 = vmatprep.subr.mxu0 0.0
    %1311 = vmatpush1.xpose.msra.mxu0 %v1294
    %1312 = vmatprep.subr.mxu0 0.0
    %1313 = vmatpush1.xpose.msra.mxu0 0.0
    %1314 = vmatprep.subr.mxu0 0.0
    %1315 = vmatpush1.xpose.msra.mxu0 0.0
    %1316 = vmatprep.subr.mxu0 0.0
    %1317 = vmatpush1.xpose.msra.mxu0 0.0
    %1318 = vmatprep.subr.mxu0 0.0
    %1319 = vmatpush1.xpose.msra.mxu0 0.0
    %1320 = vmatprep.subr.mxu0 0.0
    %1321 = vmatpush1.xpose.msra.mxu0 0.0
    %1322 = vmatprep.subr.mxu0 0.0
    %1323 = vmatpush1.xpose.msra.mxu0 0.0
    %1324 = vmatprep.subr.mxu0 0.0
    %1325 = vmatpush1.xpose.msra.mxu0 0.0
    %1326 = vmatprep.subr.mxu0 0.0
    %1327 = vmatpush1.xpose.msra.mxu0 0.0
    %1328 = vmatprep.subr.mxu0 0.0
    %1329 = vmatpush1.xpose.msra.mxu0 0.0
    %1330 = vmatprep.subr.mxu0 0.0
    %1331 = vmatpush1.xpose.msra.mxu0 0.0
    %1332 = vmatprep.subr.mxu0 0.0
    %1333 = vmatpush1.xpose.msra.mxu0 0.0
    %1334 = vmatprep.subr.mxu0 0.0
    %1335 = vmatpush1.xpose.msra.mxu0 0.0
    %1336 = vmatprep.subr.mxu0 0.0
    %1337 = vmatpush1.xpose.msra.mxu0 0.0
    %1338 = vmatprep.subr.mxu0 0.0
    %1339 = vmatpush1.xpose.msra.mxu0 0.0
    %1340 = vmatprep.subr.mxu0 0.0
    %1341 = vmatpush1.xpose.msra.mxu0 0.0
    %1342 = vmatprep.subr.mxu0 0.0
    %1343 = vmatpush1.xpose.msra.mxu0 0.0
    %1344 = vmatprep.subr.mxu0 0.0
    %1345 = vmatpush1.xpose.msra.mxu0 0.0
    %1346 = vmatprep.subr.mxu0 0.0
    %1347 = vmatpush1.xpose.msra.mxu0 0.0
    %1348 = vmatprep.subr.mxu0 0.0
    %1349 = vmatpush1.xpose.msra.mxu0 0.0
    %1350 = vmatprep.subr.mxu0 0.0
    %1351 = vmatpush1.xpose.msra.mxu0 0.0
    %1352 = vmatprep.subr.mxu0 0.0
    %1353 = vmatpush1.xpose.msra.mxu0 0.0
    %1354 = vmatprep.subr.mxu0 0.0
    %1355 = vmatpush1.xpose.msra.mxu0 0.0
    %1356 = vmatprep.subr.mxu0 0.0
    %1357 = vmatpush1.xpose.msra.mxu0 0.0
    %1358 = vmatprep.subr.mxu0 0.0
    %1359 = vmatpush1.xpose.msra.mxu0 0.0
    %1360 = vmatprep.mubr.f32.mxu0 0.0
    %1361 = vmatmul.mubr.f32.gmra.mrb[0].mxu0 %v1275
    %v1362 = vpop.f32.mrb[0].mxu0
    %v1363 = vadd.f32 0.0, %v1362
    %v1364 = vpop.f32.mrb[0].mxu0
    %1365 = vmatprep.mubr.f32.mxu0 0.0
    %1366 = vmatmul.mubr.f32.gmra.mrb[0].mxu0 %v1278
    %v1367 = vpop.f32.mrb[0].mxu0
    %v1368 = vadd.f32 0.0, %v1367
    %v1369 = vpop.f32.mrb[0].mxu0
    %1370 = vdwg.mxu0
    %v1371 = vmul.f32 %v1363, 0.35355338
    %v1372 = vmul.f32 %v1368, 0.35355338
    %v1373 = vadd.f32 %v1371, %v152
    %v1374 = vadd.f32 %v1372, %v153
    %v1375 = vsel %vm545, %v1373, -inf
    %1376 = vmax.xlane.f32.xlu0 %v1375
    %v1377 = vpop.xlane.xlu0 %1376
    %v1378 = vsel %vm545, %v1374, -inf
    %1379 = vmax.xlane.f32.xlu0 %v1378
    %v1380 = vpop.xlane.xlu0 %1379
    %v1381 = vsub.f32 %v1373, %v1377
    %v1382 = vsub.f32 %v1374, %v1380
    %v1383 = vmul.f32 %v1381, 1.442695
    %v1384 = vpow.pop %v1383
    %v1385 = vmul.f32 %v1382, 1.442695
    %v1386 = vpow.pop %v1385
    %v1388 = vsel %vm545, %v1384, 0
    %v1391 = vsel %vm545, %v1386, 0
    %1393 = vmatprep.subr.mxu0 0.0
    %1394 = vmatpush1.msra.mxu0 %v84
    %1395 = vmatprep.subr.mxu0 0.0
    %1396 = vmatpush1.msra.mxu0 %v85
    %1397 = vmatprep.subr.mxu0 0.0
    %1398 = vmatpush1.msra.mxu0 %v86
    %1399 = vmatprep.subr.mxu0 0.0
    %1400 = vmatpush1.msra.mxu0 %v87
    %1401 = vmatprep.subr.mxu0 0.0
    %1402 = vmatpush1.msra.mxu0 %v88
    %1403 = vmatprep.subr.mxu0 0.0
    %1404 = vmatpush1.msra.mxu0 %v89
    %1405 = vmatprep.subr.mxu0 0.0
    %1406 = vmatpush1.msra.mxu0 %v90
    %1407 = vmatprep.subr.mxu0 0.0
    %1408 = vmatpush1.msra.mxu0 %v91
    %1409 = vmatprep.subr.mxu0 0.0
    %1410 = vmatpush1.msra.mxu0 0.0
    %1411 = vmatprep.subr.mxu0 0.0
    %1412 = vmatpush1.msra.mxu0 0.0
    %1413 = vmatprep.subr.mxu0 0.0
    %1414 = vmatpush1.msra.mxu0 0.0
    %1415 = vmatprep.subr.mxu0 0.0
    %1416 = vmatpush1.msra.mxu0 0.0
    %1417 = vmatprep.subr.mxu0 0.0
    %1418 = vmatpush1.msra.mxu0 0.0
    %1419 = vmatprep.subr.mxu0 0.0
    %1420 = vmatpush1.msra.mxu0 0.0
    %1421 = vmatprep.subr.mxu0 0.0
    %1422 = vmatpush1.msra.mxu0 0.0
    %1423 = vmatprep.subr.mxu0 0.0
    %1424 = vmatpush1.msra.mxu0 0.0
    %1425 = vmatprep.subr.mxu0 0.0
    %1426 = vmatpush1.msra.mxu0 0.0
    %1427 = vmatprep.subr.mxu0 0.0
    %1428 = vmatpush1.msra.mxu0 0.0
    %1429 = vmatprep.subr.mxu0 0.0
    %1430 = vmatpush1.msra.mxu0 0.0
    %1431 = vmatprep.subr.mxu0 0.0
    %1432 = vmatpush1.msra.mxu0 0.0
    %1433 = vmatprep.subr.mxu0 0.0
    %1434 = vmatpush1.msra.mxu0 0.0
    %1435 = vmatprep.subr.mxu0 0.0
    %1436 = vmatpush1.msra.mxu0 0.0
    %1437 = vmatprep.subr.mxu0 0.0
    %1438 = vmatpush1.msra.mxu0 0.0
    %1439 = vmatprep.subr.mxu0 0.0
    %1440 = vmatpush1.msra.mxu0 0.0
    %1441 = vmatprep.subr.mxu0 0.0
    %1442 = vmatpush1.msra.mxu0 0.0
    %1443 = vmatprep.subr.mxu0 0.0
    %1444 = vmatpush1.msra.mxu0 0.0
    %1445 = vmatprep.subr.mxu0 0.0
    %1446 = vmatpush1.msra.mxu0 0.0
    %1447 = vmatprep.subr.mxu0 0.0
    %1448 = vmatpush1.msra.mxu0 0.0
    %1449 = vmatprep.subr.mxu0 0.0
    %1450 = vmatpush1.msra.mxu0 0.0
    %1451 = vmatprep.subr.mxu0 0.0
    %1452 = vmatpush1.msra.mxu0 0.0
    %1453 = vmatprep.subr.mxu0 0.0
    %1454 = vmatpush1.msra.mxu0 0.0
    %1455 = vmatprep.subr.mxu0 0.0
    %1456 = vmatpush1.msra.mxu0 0.0
    %1457 = vmatprep.mubr.f32.mxu0 0.0
    %1458 = vmatmul.mubr.f32.gmra.mrb[0].mxu0 %v1388
    %v1459 = vpop.f32.mrb[0].mxu0
    %v1460 = vadd.f32 0.0, %v1459
    %v1461 = vpop.f32.mrb[0].mxu0
    %1462 = vmatprep.mubr.f32.mxu0 0.0
    %1463 = vmatmul.mubr.f32.gmra.mrb[0].mxu0 %v1391
    %v1464 = vpop.f32.mrb[0].mxu0
    %v1465 = vadd.f32 0.0, %v1464
    %v1466 = vpop.f32.mrb[0].mxu0
    %1467 = vdwg.mxu0
    %v1468 = vrcp.pop %v1460
    %v1469 = vrcp.pop %v1465
    %v1470 = vmul.f32 %v1384, %v1468
    %v1471 = vmul.f32 %v1386, %v1469
    %1480 = vrot.lane.b32.xlu0 %v1242, 64
    %v1481 = vpop.permute.xlu0 %1480
    %1482 = vrot.lane.b32.xlu0 %v1243, 64
    %v1483 = vpop.permute.xlu0 %1482
    %1484 = vrot.lane.b32.xlu0 %v1244, 64
    %v1485 = vpop.permute.xlu0 %1484
    %1486 = vrot.lane.b32.xlu0 %v1245, 64
    %v1487 = vpop.permute.xlu0 %1486
    %1488 = vrot.lane.b32.xlu0 %v1246, 64
    %v1489 = vpop.permute.xlu0 %1488
    %1490 = vrot.lane.b32.xlu0 %v1247, 64
    %v1491 = vpop.permute.xlu0 %1490
    %1492 = vrot.lane.b32.xlu0 %v1248, 64
    %v1493 = vpop.permute.xlu0 %1492
    %1494 = vrot.lane.b32.xlu0 %v1249, 64
    %v1495 = vpop.permute.xlu0 %1494
    %v1505 = vsel %vm545, %v1470, 0
    %v1508 = vsel %vm545, %v1471, 0
    %1510 = vmatprep.subr.mxu0 0.0
    %1511 = vmatpush1.msra.mxu0 %v1481
    %1512 = vmatprep.subr.mxu0 0.0
    %1513 = vmatpush1.msra.mxu0 %v1483
    %1514 = vmatprep.subr.mxu0 0.0
    %1515 = vmatpush1.msra.mxu0 %v1485
    %1516 = vmatprep.subr.mxu0 0.0
    %1517 = vmatpush1.msra.mxu0 %v1487
    %1518 = vmatprep.subr.mxu0 0.0
    %1519 = vmatpush1.msra.mxu0 %v1489
    %1520 = vmatprep.subr.mxu0 0.0
    %1521 = vmatpush1.msra.mxu0 %v1491
    %1522 = vmatprep.subr.mxu0 0.0
    %1523 = vmatpush1.msra.mxu0 %v1493
    %1524 = vmatprep.subr.mxu0 0.0
    %1525 = vmatpush1.msra.mxu0 %v1495
    %1526 = vmatprep.subr.mxu0 0.0
    %1527 = vmatpush1.msra.mxu0 0.0
    %1528 = vmatprep.subr.mxu0 0.0
    %1529 = vmatpush1.msra.mxu0 0.0
    %1530 = vmatprep.subr.mxu0 0.0
    %1531 = vmatpush1.msra.mxu0 0.0
    %1532 = vmatprep.subr.mxu0 0.0
    %1533 = vmatpush1.msra.mxu0 0.0
    %1534 = vmatprep.subr.mxu0 0.0
    %1535 = vmatpush1.msra.mxu0 0.0
    %1536 = vmatprep.subr.mxu0 0.0
    %1537 = vmatpush1.msra.mxu0 0.0
    %1538 = vmatprep.subr.mxu0 0.0
    %1539 = vmatpush1.msra.mxu0 0.0
    %1540 = vmatprep.subr.mxu0 0.0
    %1541 = vmatpush1.msra.mxu0 0.0
    %1542 = vmatprep.subr.mxu0 0.0
    %1543 = vmatpush1.msra.mxu0 0.0
    %1544 = vmatprep.subr.mxu0 0.0
    %1545 = vmatpush1.msra.mxu0 0.0
    %1546 = vmatprep.subr.mxu0 0.0
    %1547 = vmatpush1.msra.mxu0 0.0
    %1548 = vmatprep.subr.mxu0 0.0
    %1549 = vmatpush1.msra.mxu0 0.0
    %1550 = vmatprep.subr.mxu0 0.0
    %1551 = vmatpush1.msra.mxu0 0.0
    %1552 = vmatprep.subr.mxu0 0.0
    %1553 = vmatpush1.msra.mxu0 0.0
    %1554 = vmatprep.subr.mxu0 0.0
    %1555 = vmatpush1.msra.mxu0 0.0
    %1556 = vmatprep.subr.mxu0 0.0
    %1557 = vmatpush1.msra.mxu0 0.0
    %1558 = vmatprep.subr.mxu0 0.0
    %1559 = vmatpush1.msra.mxu0 0.0
    %1560 = vmatprep.subr.mxu0 0.0
    %1561 = vmatpush1.msra.mxu0 0.0
    %1562 = vmatprep.subr.mxu0 0.0
    %1563 = vmatpush1.msra.mxu0 0.0
    %1564 = vmatprep.subr.mxu0 0.0
    %1565 = vmatpush1.msra.mxu0 0.0
    %1566 = vmatprep.subr.mxu0 0.0
    %1567 = vmatpush1.msra.mxu0 0.0
    %1568 = vmatprep.subr.mxu0 0.0
    %1569 = vmatpush1.msra.mxu0 0.0
    %1570 = vmatprep.subr.mxu0 0.0
    %1571 = vmatpush1.msra.mxu0 0.0
    %1572 = vmatprep.subr.mxu0 0.0
    %1573 = vmatpush1.msra.mxu0 0.0
    %1574 = vmatprep.mubr.f32.mxu0 0.0
    %1575 = vmatmul.mubr.f32.gmra.mrb[0].mxu0 %v1505
    %v1576 = vpop.f32.mrb[0].mxu0
    %v1577 = vadd.f32 0.0, %v1576
    %v1578 = vpop.f32.mrb[0].mxu0
    %1579 = vmatprep.mubr.f32.mxu0 0.0
    %1580 = vmatmul.mubr.f32.gmra.mrb[0].mxu0 %v1508
    %v1581 = vpop.f32.mrb[0].mxu0
    %v1582 = vadd.f32 0.0, %v1581
    %v1583 = vpop.f32.mrb[0].mxu0
    %1584 = vdwg.mxu0
    %v1585 = vlaneseq
    %v1586 = vshrl.u32 %v1585, 7
    %v1587 = vsub.s32 0, %v1586
    %v1588 = vrot.slane %v1148, %v1587
    %v1590 = vsel %vm148, %v1577, 0
    %v1593 = vsel %vm148, %v1582, 0
    %1595 = vmatprep.subr.mxu0 0.0
    %1596 = vmatpush1.msra.mxu0 %v1144
    %1597 = vmatprep.subr.mxu0 0.0
    %1598 = vmatpush1.msra.mxu0 %v1145
    %1599 = vmatprep.subr.mxu0 0.0
    %1600 = vmatpush1.msra.mxu0 %v1146
    %1601 = vmatprep.subr.mxu0 0.0
    %1602 = vmatpush1.msra.mxu0 %v1147
    %1603 = vmatprep.subr.mxu0 0.0
    %1604 = vmatpush1.msra.mxu0 0.0
    %1605 = vmatprep.subr.mxu0 0.0
    %1606 = vmatpush1.msra.mxu0 0.0
    %1607 = vmatprep.subr.mxu0 0.0
    %1608 = vmatpush1.msra.mxu0 0.0
    %1609 = vmatprep.subr.mxu0 0.0
    %1610 = vmatpush1.msra.mxu0 0.0
    %1611 = vmatprep.subr.mxu0 0.0
    %1612 = vmatpush1.msra.mxu0 0.0
    %1613 = vmatprep.subr.mxu0 0.0
    %1614 = vmatpush1.msra.mxu0 0.0
    %1615 = vmatprep.subr.mxu0 0.0
    %1616 = vmatpush1.msra.mxu0 0.0
    %1617 = vmatprep.subr.mxu0 0.0
    %1618 = vmatpush1.msra.mxu0 0.0
    %1619 = vmatprep.subr.mxu0 0.0
    %1620 = vmatpush1.msra.mxu0 0.0
    %1621 = vmatprep.subr.mxu0 0.0
    %1622 = vmatpush1.msra.mxu0 0.0
    %1623 = vmatprep.subr.mxu0 0.0
    %1624 = vmatpush1.msra.mxu0 0.0
    %1625 = vmatprep.subr.mxu0 0.0
    %1626 = vmatpush1.msra.mxu0 0.0
    %1627 = vmatprep.subr.mxu0 0.0
    %1628 = vmatpush1.msra.mxu0 0.0
    %1629 = vmatprep.subr.mxu0 0.0
    %1630 = vmatpush1.msra.mxu0 0.0
    %1631 = vmatprep.subr.mxu0 0.0
    %1632 = vmatpush1.msra.mxu0 0.0
    %1633 = vmatprep.subr.mxu0 0.0
    %1634 = vmatpush1.msra.mxu0 0.0
    %1635 = vmatprep.subr.mxu0 0.0
    %1636 = vmatpush1.msra.mxu0 0.0
    %1637 = vmatprep.subr.mxu0 0.0
    %1638 = vmatpush1.msra.mxu0 0.0
    %1639 = vmatprep.subr.mxu0 0.0
    %1640 = vmatpush1.msra.mxu0 0.0
    %1641 = vmatprep.subr.mxu0 0.0
    %1642 = vmatpush1.msra.mxu0 0.0
    %1643 = vmatprep.subr.mxu0 0.0
    %1644 = vmatpush1.msra.mxu0 0.0
    %1645 = vmatprep.subr.mxu0 0.0
    %1646 = vmatpush1.msra.mxu0 0.0
    %1647 = vmatprep.subr.mxu0 0.0
    %1648 = vmatpush1.msra.mxu0 0.0
    %1649 = vmatprep.subr.mxu0 0.0
    %1650 = vmatpush1.msra.mxu0 0.0
    %1651 = vmatprep.subr.mxu0 0.0
    %1652 = vmatpush1.msra.mxu0 0.0
    %1653 = vmatprep.subr.mxu0 0.0
    %1654 = vmatpush1.msra.mxu0 0.0
    %1655 = vmatprep.subr.mxu0 0.0
    %1656 = vmatpush1.msra.mxu0 0.0
    %1657 = vmatprep.subr.mxu0 0.0
    %1658 = vmatpush1.msra.mxu0 0.0
    %1659 = vmatprep.mubr.f32.mxu0 0.0
    %1660 = vmatmul.mubr.f32.gmra.mrb[0].mxu0 %v1590
    %v1661 = vpop.f32.mrb[0].mxu0
    %v1662 = vadd.f32 %v1588, %v1661
    %v1663 = vpop.f32.mrb[0].mxu0
    %1664 = vmatprep.mubr.f32.mxu0 0.0
    %1665 = vmatmul.mubr.f32.gmra.mrb[0].mxu0 %v1593
    %v1666 = vpop.f32.mrb[0].mxu0
    %v1667 = vadd.f32 %v1588, %v1666
    %v1668 = vpop.f32.mrb[0].mxu0
    %1669 = vdwg.mxu0
    %v1670 = vadd.f32 %v1083, %v1662
    %v1671 = vadd.f32 %v1084, %v1667
    %v1672 = vld [vmem:[#allocation2 + $0x1b0] sm:$0x1]
    %v1673 = vld [vmem:[#allocation2 + $0x1b8] sm:$0x1]
    %v1674 = vsel %vm148, %v1670, 0.0
    %1675 = vadd.xlane.f32.xlu0 %v1674
    %v1676 = vpop.xlane.xlu0 %1675
    %v1677 = vsel %vm148, %v1671, 0.0
    %1678 = vadd.xlane.f32.xlu0 %v1677
    %v1679 = vpop.xlane.xlu0 %1678
    %v1680 = vmul.f32 %v1676, %v206
    %v1681 = vmul.f32 %v1679, %v206
    %v1682 = vsub.f32 %v1670, %v1680
    %v1683 = vsub.f32 %v1671, %v1681
    %v1684 = vmul.f32 %v1682, %v1682
    %v1685 = vmul.f32 %v1683, %v1683
    %v1686 = vsel %vm148, %v1684, 0.0
    %1687 = vadd.xlane.f32.xlu0 %v1686
    %v1688 = vpop.xlane.xlu0 %1687
    %v1689 = vsel %vm148, %v1685, 0.0
    %1690 = vadd.xlane.f32.xlu0 %v1689
    %v1691 = vpop.xlane.xlu0 %1690
    %v1692 = vmul.f32 %v1688, 0.032258064
    %v1693 = vmul.f32 %v1691, 0.032258064
    %v1694 = vrsqrt.pop %v1692
    %v1695 = vmul.f32 %v1692, %v1694
    %vm1696 = vcmp.eq.f32.partialorder %v1692, inf
    %v1697 = vsel %vm1696, %v1692, %v1695
    %vm1698 = vcmp.eq.f32.partialorder %v1692, 0.0
    %v1699 = vand.u32 %v1692, 2147483648
    %v1700 = vsel %vm1698, %v1699, %v1697
    %v1701 = vrsqrt.pop %v1693
    %v1702 = vmul.f32 %v1693, %v1701
    %vm1703 = vcmp.eq.f32.partialorder %v1693, inf
    %v1704 = vsel %vm1703, %v1693, %v1702
    %vm1705 = vcmp.eq.f32.partialorder %v1693, 0.0
    %v1706 = vand.u32 %v1693, 2147483648
    %v1707 = vsel %vm1705, %v1706, %v1704
    %v1708 = vlaneseq
    %v1709 = vshrl.u32 %v1708, 7
    %v1710 = vsub.s32 0, %v1709
    %v1711 = vrot.slane %v1672, %v1710
    %v1712 = vmul.f32 %v1711, %v1682
    %v1713 = vmul.f32 %v1711, %v1683
    %v1714 = vadd.f32 %v1700, 1e-06
    %v1715 = vadd.f32 %v1707, 1e-06
    %v1716 = vrcp.pop %v1714
    %v1717 = vmul.f32 %v1712, %v1716
    %v1718 = vrcp.pop %v1715
    %v1719 = vmul.f32 %v1713, %v1718
    %v1720 = vlaneseq
    %v1721 = vshrl.u32 %v1720, 7
    %v1722 = vsub.s32 0, %v1721
    %v1723 = vrot.slane %v1673, %v1722
    %v1724 = vadd.f32 %v1717, %v1723
    %v1725 = vadd.f32 %v1719, %v1723
    %v1726 = vld [vmem:[#allocation2 + $0x130] sm:$0xff]
    %v1727 = vld [vmem:[#allocation2 + $0x138] sm:$0xff]
    %v1728 = vld [vmem:[#allocation2 + $0x140] sm:$0xff]
    %v1729 = vld [vmem:[#allocation2 + $0x148] sm:$0xff]
    %v1730 = vld [vmem:[#allocation2 + $0x150] sm:$0x1]
    %v1731 = vld [vmem:[#allocation2 + $0x158] sm:$0xff]
    %v1732 = vld [vmem:[#allocation2 + $0x160] sm:$0xff]
    %v1733 = vld [vmem:[#allocation2 + $0x168] sm:$0xff]
    %v1734 = vld [vmem:[#allocation2 + $0x170] sm:$0xff]
    %v1735 = vld [vmem:[#allocation2 + $0x178] sm:$0xff]
    %v1736 = vld [vmem:[#allocation2 + $0x180] sm:$0xff]
    %v1737 = vld [vmem:[#allocation2 + $0x188] sm:$0xff]
    %v1738 = vld [vmem:[#allocation2 + $0x190] sm:$0xff]
    %v1739 = vld [vmem:[#allocation2 + $0x198] sm:$0x1]
    %v1740 = vlaneseq
    %v1741 = vshrl.u32 %v1740, 7
    %v1742 = vsub.s32 0, %v1741
    %v1743 = vrot.slane %v1730, %v1742
    %v1745 = vsel %vm148, %v1724, 0
    %v1748 = vsel %vm148, %v1725, 0
    %1750 = vmatprep.subr.mxu0 0.0
    %1751 = vmatpush1.msra.mxu0 %v1726
    %1752 = vmatprep.subr.mxu0 0.0
    %1753 = vmatpush1.msra.mxu0 %v1727
    %1754 = vmatprep.subr.mxu0 0.0
    %1755 = vmatpush1.msra.mxu0 %v1728
    %1756 = vmatprep.subr.mxu0 0.0
    %1757 = vmatpush1.msra.mxu0 %v1729
    %1758 = vmatprep.subr.mxu0 0.0
    %1759 = vmatpush1.msra.mxu0 0.0
    %1760 = vmatprep.subr.mxu0 0.0
    %1761 = vmatpush1.msra.mxu0 0.0
    %1762 = vmatprep.subr.mxu0 0.0
    %1763 = vmatpush1.msra.mxu0 0.0
    %1764 = vmatprep.subr.mxu0 0.0
    %1765 = vmatpush1.msra.mxu0 0.0
    %1766 = vmatprep.subr.mxu0 0.0
    %1767 = vmatpush1.msra.mxu0 0.0
    %1768 = vmatprep.subr.mxu0 0.0
    %1769 = vmatpush1.msra.mxu0 0.0
    %1770 = vmatprep.subr.mxu0 0.0
    %1771 = vmatpush1.msra.mxu0 0.0
    %1772 = vmatprep.subr.mxu0 0.0
    %1773 = vmatpush1.msra.mxu0 0.0
    %1774 = vmatprep.subr.mxu0 0.0
    %1775 = vmatpush1.msra.mxu0 0.0
    %1776 = vmatprep.subr.mxu0 0.0
    %1777 = vmatpush1.msra.mxu0 0.0
    %1778 = vmatprep.subr.mxu0 0.0
    %1779 = vmatpush1.msra.mxu0 0.0
    %1780 = vmatprep.subr.mxu0 0.0
    %1781 = vmatpush1.msra.mxu0 0.0
    %1782 = vmatprep.subr.mxu0 0.0
    %1783 = vmatpush1.msra.mxu0 0.0
    %1784 = vmatprep.subr.mxu0 0.0
    %1785 = vmatpush1.msra.mxu0 0.0
    %1786 = vmatprep.subr.mxu0 0.0
    %1787 = vmatpush1.msra.mxu0 0.0
    %1788 = vmatprep.subr.mxu0 0.0
    %1789 = vmatpush1.msra.mxu0 0.0
    %1790 = vmatprep.subr.mxu0 0.0
    %1791 = vmatpush1.msra.mxu0 0.0
    %1792 = vmatprep.subr.mxu0 0.0
    %1793 = vmatpush1.msra.mxu0 0.0
    %1794 = vmatprep.subr.mxu0 0.0
    %1795 = vmatpush1.msra.mxu0 0.0
    %1796 = vmatprep.subr.mxu0 0.0
    %1797 = vmatpush1.msra.mxu0 0.0
    %1798 = vmatprep.subr.mxu0 0.0
    %1799 = vmatpush1.msra.mxu0 0.0
    %1800 = vmatprep.subr.mxu0 0.0
    %1801 = vmatpush1.msra.mxu0 0.0
    %1802 = vmatprep.subr.mxu0 0.0
    %1803 = vmatpush1.msra.mxu0 0.0
    %1804 = vmatprep.subr.mxu0 0.0
    %1805 = vmatpush1.msra.mxu0 0.0
    %1806 = vmatprep.subr.mxu0 0.0
    %1807 = vmatpush1.msra.mxu0 0.0
    %1808 = vmatprep.subr.mxu0 0.0
    %1809 = vmatpush1.msra.mxu0 0.0
    %1810 = vmatprep.subr.mxu0 0.0
    %1811 = vmatpush1.msra.mxu0 0.0
    %1812 = vmatprep.subr.mxu0 0.0
    %1813 = vmatpush1.msra.mxu0 0.0
    %1814 = vmatprep.mubr.f32.mxu0 0.0
    %1815 = vmatmul.mubr.f32.gmra.mrb[0].mxu0 %v1745
    %v1816 = vpop.f32.mrb[0].mxu0
    %v1817 = vadd.f32 %v1743, %v1816
    %v1818 = vpop.f32.mrb[0].mxu0
    %1819 = vmatprep.mubr.f32.mxu0 0.0
    %1820 = vmatmul.mubr.f32.gmra.mrb[0].mxu0 %v1748
    %v1821 = vpop.f32.mrb[0].mxu0
    %v1822 = vadd.f32 %v1743, %v1821
    %v1823 = vpop.f32.mrb[0].mxu0
    %1824 = vdwg.mxu0
    %v1825 = vmax.f32 %v1817, 0.0
    %v1826 = vmax.f32 %v1822, 0.0
    %v1827 = vlaneseq
    %v1828 = vshrl.u32 %v1827, 7
    %v1829 = vsub.s32 0, %v1828
    %v1830 = vrot.slane %v1739, %v1829
    %v1832 = vsel %vm545, %v1825, 0
    %v1835 = vsel %vm545, %v1826, 0
    %1837 = vmatprep.subr.mxu0 0.0
    %1838 = vmatpush1.msra.mxu0 %v1731
    %1839 = vmatprep.subr.mxu0 0.0
    %1840 = vmatpush1.msra.mxu0 %v1732
    %1841 = vmatprep.subr.mxu0 0.0
    %1842 = vmatpush1.msra.mxu0 %v1733
    %1843 = vmatprep.subr.mxu0 0.0
    %1844 = vmatpush1.msra.mxu0 %v1734
    %1845 = vmatprep.subr.mxu0 0.0
    %1846 = vmatpush1.msra.mxu0 %v1735
    %1847 = vmatprep.subr.mxu0 0.0
    %1848 = vmatpush1.msra.mxu0 %v1736
    %1849 = vmatprep.subr.mxu0 0.0
    %1850 = vmatpush1.msra.mxu0 %v1737
    %1851 = vmatprep.subr.mxu0 0.0
    %1852 = vmatpush1.msra.mxu0 %v1738
    %1853 = vmatprep.subr.mxu0 0.0
    %1854 = vmatpush1.msra.mxu0 0.0
    %1855 = vmatprep.subr.mxu0 0.0
    %1856 = vmatpush1.msra.mxu0 0.0
    %1857 = vmatprep.subr.mxu0 0.0
    %1858 = vmatpush1.msra.mxu0 0.0
    %1859 = vmatprep.subr.mxu0 0.0
    %1860 = vmatpush1.msra.mxu0 0.0
    %1861 = vmatprep.subr.mxu0 0.0
    %1862 = vmatpush1.msra.mxu0 0.0
    %1863 = vmatprep.subr.mxu0 0.0
    %1864 = vmatpush1.msra.mxu0 0.0
    %1865 = vmatprep.subr.mxu0 0.0
    %1866 = vmatpush1.msra.mxu0 0.0
    %1867 = vmatprep.subr.mxu0 0.0
    %1868 = vmatpush1.msra.mxu0 0.0
    %1869 = vmatprep.subr.mxu0 0.0
    %1870 = vmatpush1.msra.mxu0 0.0
    %1871 = vmatprep.subr.mxu0 0.0
    %1872 = vmatpush1.msra.mxu0 0.0
    %1873 = vmatprep.subr.mxu0 0.0
    %1874 = vmatpush1.msra.mxu0 0.0
    %1875 = vmatprep.subr.mxu0 0.0
    %1876 = vmatpush1.msra.mxu0 0.0
    %1877 = vmatprep.subr.mxu0 0.0
    %1878 = vmatpush1.msra.mxu0 0.0
    %1879 = vmatprep.subr.mxu0 0.0
    %1880 = vmatpush1.msra.mxu0 0.0
    %1881 = vmatprep.subr.mxu0 0.0
    %1882 = vmatpush1.msra.mxu0 0.0
    %1883 = vmatprep.subr.mxu0 0.0
    %1884 = vmatpush1.msra.mxu0 0.0
    %1885 = vmatprep.subr.mxu0 0.0
    %1886 = vmatpush1.msra.mxu0 0.0
    %1887 = vmatprep.subr.mxu0 0.0
    %1888 = vmatpush1.msra.mxu0 0.0
    %1889 = vmatprep.subr.mxu0 0.0
    %1890 = vmatpush1.msra.mxu0 0.0
    %1891 = vmatprep.subr.mxu0 0.0
    %1892 = vmatpush1.msra.mxu0 0.0
    %1893 = vmatprep.subr.mxu0 0.0
    %1894 = vmatpush1.msra.mxu0 0.0
    %1895 = vmatprep.subr.mxu0 0.0
    %1896 = vmatpush1.msra.mxu0 0.0
    %1897 = vmatprep.subr.mxu0 0.0
    %1898 = vmatpush1.msra.mxu0 0.0
    %1899 = vmatprep.subr.mxu0 0.0
    %1900 = vmatpush1.msra.mxu0 0.0
    %1901 = vmatprep.mubr.f32.mxu0 0.0
    %1902 = vmatmul.mubr.f32.gmra.mrb[0].mxu0 %v1832
    %v1903 = vpop.f32.mrb[0].mxu0
    %v1904 = vadd.f32 %v1830, %v1903
    %v1905 = vpop.f32.mrb[0].mxu0
    %1906 = vmatprep.mubr.f32.mxu0 0.0
    %1907 = vmatmul.mubr.f32.gmra.mrb[0].mxu0 %v1835
    %v1908 = vpop.f32.mrb[0].mxu0
    %v1909 = vadd.f32 %v1830, %v1908
    %v1910 = vpop.f32.mrb[0].mxu0
    %1911 = vdwg.mxu0
    %v1912 = vadd.f32 %v1670, %v1904
    %v1913 = vadd.f32 %v1671, %v1909
    %v1914 = vld [vmem:[#allocation2 + $0x1c0] sm:$0x1]
    %v1915 = vld [vmem:[#allocation2 + $0x1c8] sm:$0x1]
    %v1916 = vsel %vm148, %v1912, 0.0
    %1917 = vadd.xlane.f32.xlu0 %v1916
    %v1918 = vpop.xlane.xlu0 %1917
    %v1919 = vsel %vm148, %v1913, 0.0
    %1920 = vadd.xlane.f32.xlu0 %v1919
    %v1921 = vpop.xlane.xlu0 %1920
    %v1922 = vmul.f32 %v1918, %v206
    %v1923 = vmul.f32 %v1921, %v206
    %v1924 = vsub.f32 %v1912, %v1922
    %v1925 = vsub.f32 %v1913, %v1923
    %v1926 = vmul.f32 %v1924, %v1924
    %v1927 = vmul.f32 %v1925, %v1925
    %v1928 = vsel %vm148, %v1926, 0.0
    %1929 = vadd.xlane.f32.xlu0 %v1928
    %v1930 = vpop.xlane.xlu0 %1929
    %v1931 = vsel %vm148, %v1927, 0.0
    %1932 = vadd.xlane.f32.xlu0 %v1931
    %v1933 = vpop.xlane.xlu0 %1932
    %v1934 = vmul.f32 %v1930, 0.032258064
    %v1935 = vmul.f32 %v1933, 0.032258064
    %v1936 = vrsqrt.pop %v1934
    %v1937 = vmul.f32 %v1934, %v1936
    %vm1938 = vcmp.eq.f32.partialorder %v1934, inf
    %v1939 = vsel %vm1938, %v1934, %v1937
    %vm1940 = vcmp.eq.f32.partialorder %v1934, 0.0
    %v1941 = vand.u32 %v1934, 2147483648
    %v1942 = vsel %vm1940, %v1941, %v1939
    %v1943 = vrsqrt.pop %v1935
    %v1944 = vmul.f32 %v1935, %v1943
    %vm1945 = vcmp.eq.f32.partialorder %v1935, inf
    %v1946 = vsel %vm1945, %v1935, %v1944
    %vm1947 = vcmp.eq.f32.partialorder %v1935, 0.0
    %v1948 = vand.u32 %v1935, 2147483648
    %v1949 = vsel %vm1947, %v1948, %v1946
    %v1950 = vlaneseq
    %v1951 = vshrl.u32 %v1950, 7
    %v1952 = vsub.s32 0, %v1951
    %v1953 = vrot.slane %v1914, %v1952
    %v1954 = vmul.f32 %v1953, %v1924
    %v1955 = vmul.f32 %v1953, %v1925
    %v1956 = vadd.f32 %v1942, 1e-06
    %v1957 = vadd.f32 %v1949, 1e-06
    %v1958 = vrcp.pop %v1956
    %v1959 = vmul.f32 %v1954, %v1958
    %v1960 = vrcp.pop %v1957
    %v1961 = vmul.f32 %v1955, %v1960
    %v1962 = vlaneseq
    %v1963 = vshrl.u32 %v1962, 7
    %v1964 = vsub.s32 0, %v1963
    %v1965 = vrot.slane %v1915, %v1964
    %v1966 = vadd.f32 %v1959, %v1965
    %v1967 = vadd.f32 %v1961, %v1965
    %v1968 = vld [vmem:[#allocation7] sm:$0xff]
    %v1969 = vld [vmem:[#allocation7 + $0x8] sm:$0xff]
    %v1970 = vld [vmem:[#allocation2 + $0x308] sm:$0x1]
    %v1971 = vld [vmem:[#allocation2 + $0x310] sm:$0x1]
    %v1972 = vsel %vm148, %v1968, 0.0
    %1973 = vadd.xlane.f32.xlu0 %v1972
    %v1974 = vpop.xlane.xlu0 %1973
    %v1975 = vsel %vm148, %v1969, 0.0
    %1976 = vadd.xlane.f32.xlu0 %v1975
    %v1977 = vpop.xlane.xlu0 %1976
    %v1978 = vmul.f32 %v1974, %v206
    %v1979 = vmul.f32 %v1977, %v206
    %v1980 = vsub.f32 %v1968, %v1978
    %v1981 = vsub.f32 %v1969, %v1979
    %v1982 = vmul.f32 %v1980, %v1980
    %v1983 = vmul.f32 %v1981, %v1981
    %v1984 = vsel %vm148, %v1982, 0.0
    %1985 = vadd.xlane.f32.xlu0 %v1984
    %v1986 = vpop.xlane.xlu0 %1985
    %v1987 = vsel %vm148, %v1983, 0.0
    %1988 = vadd.xlane.f32.xlu0 %v1987
    %v1989 = vpop.xlane.xlu0 %1988
    %v1990 = vmul.f32 %v1986, 0.032258064
    %v1991 = vmul.f32 %v1989, 0.032258064
    %v1992 = vrsqrt.pop %v1990
    %v1993 = vmul.f32 %v1990, %v1992
    %vm1994 = vcmp.eq.f32.partialorder %v1990, inf
    %v1995 = vsel %vm1994, %v1990, %v1993
    %vm1996 = vcmp.eq.f32.partialorder %v1990, 0.0
    %v1997 = vand.u32 %v1990, 2147483648
    %v1998 = vsel %vm1996, %v1997, %v1995
    %v1999 = vrsqrt.pop %v1991
    %v2000 = vmul.f32 %v1991, %v1999
    %vm2001 = vcmp.eq.f32.partialorder %v1991, inf
    %v2002 = vsel %vm2001, %v1991, %v2000
    %vm2003 = vcmp.eq.f32.partialorder %v1991, 0.0
    %v2004 = vand.u32 %v1991, 2147483648
    %v2005 = vsel %vm2003, %v2004, %v2002
    %v2006 = vlaneseq
    %v2007 = vshrl.u32 %v2006, 7
    %v2008 = vsub.s32 0, %v2007
    %v2009 = vrot.slane %v1970, %v2008
    %v2010 = vmul.f32 %v2009, %v1980
    %v2011 = vmul.f32 %v2009, %v1981
    %v2012 = vadd.f32 %v1998, 1e-06
    %v2013 = vadd.f32 %v2005, 1e-06
    %v2014 = vrcp.pop %v2012
    %v2015 = vmul.f32 %v2010, %v2014
    %v2016 = vrcp.pop %v2013
    %v2017 = vmul.f32 %v2011, %v2016
    %v2018 = vlaneseq
    %v2019 = vshrl.u32 %v2018, 7
    %v2020 = vsub.s32 0, %v2019
    %v2021 = vrot.slane %v1971, %v2020
    %v2022 = vadd.f32 %v2015, %v2021
    %v2023 = vadd.f32 %v2017, %v2021
    %v2024 = vld [vmem:[#allocation2 + $0x1d0] sm:$0xff]
    %v2025 = vld [vmem:[#allocation2 + $0x1d8] sm:$0xff]
    %v2026 = vld [vmem:[#allocation2 + $0x1e0] sm:$0xff]
    %v2027 = vld [vmem:[#allocation2 + $0x1e8] sm:$0xff]
    %v2028 = vld [vmem:[#allocation2 + $0x1f0] sm:$0x1]
    %v2029 = vld [vmem:[#allocation2 + $0x1f8] sm:$0xff]
    %v2030 = vld [vmem:[#allocation2 + $0x200] sm:$0xff]
    %v2031 = vld [vmem:[#allocation2 + $0x208] sm:$0xff]
    %v2032 = vld [vmem:[#allocation2 + $0x210] sm:$0xff]
    %v2033 = vld [vmem:[#allocation2 + $0x218] sm:$0x1]
    %v2034 = vlaneseq
    %v2035 = vshrl.u32 %v2034, 7
    %v2036 = vsub.s32 0, %v2035
    %v2037 = vrot.slane %v2028, %v2036
    %v2039 = vsel %vm148, %v2022, 0
    %v2042 = vsel %vm148, %v2023, 0
    %2044 = vmatprep.subr.mxu0 0.0
    %2045 = vmatpush1.msra.mxu0 %v2024
    %2046 = vmatprep.subr.mxu0 0.0
    %2047 = vmatpush1.msra.mxu0 %v2025
    %2048 = vmatprep.subr.mxu0 0.0
    %2049 = vmatpush1.msra.mxu0 %v2026
    %2050 = vmatprep.subr.mxu0 0.0
    %2051 = vmatpush1.msra.mxu0 %v2027
    %2052 = vmatprep.subr.mxu0 0.0
    %2053 = vmatpush1.msra.mxu0 0.0
    %2054 = vmatprep.subr.mxu0 0.0
    %2055 = vmatpush1.msra.mxu0 0.0
    %2056 = vmatprep.subr.mxu0 0.0
    %2057 = vmatpush1.msra.mxu0 0.0
    %2058 = vmatprep.subr.mxu0 0.0
    %2059 = vmatpush1.msra.mxu0 0.0
    %2060 = vmatprep.subr.mxu0 0.0
    %2061 = vmatpush1.msra.mxu0 0.0
    %2062 = vmatprep.subr.mxu0 0.0
    %2063 = vmatpush1.msra.mxu0 0.0
    %2064 = vmatprep.subr.mxu0 0.0
    %2065 = vmatpush1.msra.mxu0 0.0
    %2066 = vmatprep.subr.mxu0 0.0
    %2067 = vmatpush1.msra.mxu0 0.0
    %2068 = vmatprep.subr.mxu0 0.0
    %2069 = vmatpush1.msra.mxu0 0.0
    %2070 = vmatprep.subr.mxu0 0.0
    %2071 = vmatpush1.msra.mxu0 0.0
    %2072 = vmatprep.subr.mxu0 0.0
    %2073 = vmatpush1.msra.mxu0 0.0
    %2074 = vmatprep.subr.mxu0 0.0
    %2075 = vmatpush1.msra.mxu0 0.0
    %2076 = vmatprep.subr.mxu0 0.0
    %2077 = vmatpush1.msra.mxu0 0.0
    %2078 = vmatprep.subr.mxu0 0.0
    %2079 = vmatpush1.msra.mxu0 0.0
    %2080 = vmatprep.subr.mxu0 0.0
    %2081 = vmatpush1.msra.mxu0 0.0
    %2082 = vmatprep.subr.mxu0 0.0
    %2083 = vmatpush1.msra.mxu0 0.0
    %2084 = vmatprep.subr.mxu0 0.0
    %2085 = vmatpush1.msra.mxu0 0.0
    %2086 = vmatprep.subr.mxu0 0.0
    %2087 = vmatpush1.msra.mxu0 0.0
    %2088 = vmatprep.subr.mxu0 0.0
    %2089 = vmatpush1.msra.mxu0 0.0
    %2090 = vmatprep.subr.mxu0 0.0
    %2091 = vmatpush1.msra.mxu0 0.0
    %2092 = vmatprep.subr.mxu0 0.0
    %2093 = vmatpush1.msra.mxu0 0.0
    %2094 = vmatprep.subr.mxu0 0.0
    %2095 = vmatpush1.msra.mxu0 0.0
    %2096 = vmatprep.subr.mxu0 0.0
    %2097 = vmatpush1.msra.mxu0 0.0
    %2098 = vmatprep.subr.mxu0 0.0
    %2099 = vmatpush1.msra.mxu0 0.0
    %2100 = vmatprep.subr.mxu0 0.0
    %2101 = vmatpush1.msra.mxu0 0.0
    %2102 = vmatprep.subr.mxu0 0.0
    %2103 = vmatpush1.msra.mxu0 0.0
    %2104 = vmatprep.subr.mxu0 0.0
    %2105 = vmatpush1.msra.mxu0 0.0
    %2106 = vmatprep.subr.mxu0 0.0
    %2107 = vmatpush1.msra.mxu0 0.0
    %2108 = vmatprep.mubr.f32.mxu0 0.0
    %2109 = vmatmul.mubr.f32.gmra.mrb[0].mxu0 %v2039
    %v2110 = vpop.f32.mrb[0].mxu0
    %v2111 = vadd.f32 %v2037, %v2110
    %v2112 = vpop.f32.mrb[0].mxu0
    %2113 = vmatprep.mubr.f32.mxu0 0.0
    %2114 = vmatmul.mubr.f32.gmra.mrb[0].mxu0 %v2042
    %v2115 = vpop.f32.mrb[0].mxu0
    %v2116 = vadd.f32 %v2037, %v2115
    %v2117 = vpop.f32.mrb[0].mxu0
    %2118 = vdwg.mxu0
    %v2119 = vmul.f32 %v2111, %v357
    %v2120 = vmul.f32 %v2116, %v359
    %v2121 = vmul.f32 %v2111, %v361
    %v2122 = vmul.f32 %v2116, %v363
    %v2123 = vmul.f32 %v2111, %v365
    %v2124 = vmul.f32 %v2116, %v367
    %v2125 = vmul.f32 %v2111, %v369
    %v2126 = vmul.f32 %v2116, %v371
    %v2127 = vmul.f32 %v2111, %v389
    %v2128 = vmul.f32 %v2116, %v391
    %v2129 = vmul.f32 %v2111, %v393
    %v2130 = vmul.f32 %v2116, %v395
    %v2131 = vmul.f32 %v2111, %v397
    %v2132 = vmul.f32 %v2116, %v399
    %v2133 = vmul.f32 %v2111, %v401
    %v2134 = vmul.f32 %v2116, %v403
    %2143 = vrot.lane.b32.xlu0 %v2119, 96
    %v2144 = vpop.permute.xlu0 %2143
    %2145 = vrot.lane.b32.xlu0 %v2120, 96
    %v2146 = vpop.permute.xlu0 %2145
    %2147 = vrot.lane.b32.xlu0 %v2121, 96
    %v2148 = vpop.permute.xlu0 %2147
    %2149 = vrot.lane.b32.xlu0 %v2122, 96
    %v2150 = vpop.permute.xlu0 %2149
    %2151 = vrot.lane.b32.xlu0 %v2123, 96
    %v2152 = vpop.permute.xlu0 %2151
    %2153 = vrot.lane.b32.xlu0 %v2124, 96
    %v2154 = vpop.permute.xlu0 %2153
    %2155 = vrot.lane.b32.xlu0 %v2125, 96
    %v2156 = vpop.permute.xlu0 %2155
    %2157 = vrot.lane.b32.xlu0 %v2126, 96
    %v2158 = vpop.permute.xlu0 %2157
    %v2160 = vsel %vm148, %v2111, 0
    %v2163 = vsel %vm148, %v2116, 0
    %v2165 = vsel %vm148, %v2144, 0
    %v2167 = vsel %vm148, %v2146, 0
    %v2169 = vsel %vm148, %v2148, 0
    %v2171 = vsel %vm148, %v2150, 0
    %v2173 = vsel %vm148, %v2152, 0
    %v2175 = vsel %vm148, %v2154, 0
    %v2177 = vsel %vm148, %v2156, 0
    %v2179 = vsel %vm148, %v2158, 0
    %2181 = vmatprep.subr.mxu0 0.0
    %2182 = vmatpush1.xpose.msra.mxu0 %v2165
    %2183 = vmatprep.subr.mxu0 0.0
    %2184 = vmatpush1.xpose.msra.mxu0 %v2167
    %2185 = vmatprep.subr.mxu0 0.0
    %2186 = vmatpush1.xpose.msra.mxu0 %v2169
    %2187 = vmatprep.subr.mxu0 0.0
    %2188 = vmatpush1.xpose.msra.mxu0 %v2171
    %2189 = vmatprep.subr.mxu0 0.0
    %2190 = vmatpush1.xpose.msra.mxu0 %v2173
    %2191 = vmatprep.subr.mxu0 0.0
    %2192 = vmatpush1.xpose.msra.mxu0 %v2175
    %2193 = vmatprep.subr.mxu0 0.0
    %2194 = vmatpush1.xpose.msra.mxu0 %v2177
    %2195 = vmatprep.subr.mxu0 0.0
    %2196 = vmatpush1.xpose.msra.mxu0 %v2179
    %2197 = vmatprep.subr.mxu0 0.0
    %2198 = vmatpush1.xpose.msra.mxu0 0.0
    %2199 = vmatprep.subr.mxu0 0.0
    %2200 = vmatpush1.xpose.msra.mxu0 0.0
    %2201 = vmatprep.subr.mxu0 0.0
    %2202 = vmatpush1.xpose.msra.mxu0 0.0
    %2203 = vmatprep.subr.mxu0 0.0
    %2204 = vmatpush1.xpose.msra.mxu0 0.0
    %2205 = vmatprep.subr.mxu0 0.0
    %2206 = vmatpush1.xpose.msra.mxu0 0.0
    %2207 = vmatprep.subr.mxu0 0.0
    %2208 = vmatpush1.xpose.msra.mxu0 0.0
    %2209 = vmatprep.subr.mxu0 0.0
    %2210 = vmatpush1.xpose.msra.mxu0 0.0
    %2211 = vmatprep.subr.mxu0 0.0
    %2212 = vmatpush1.xpose.msra.mxu0 0.0
    %2213 = vmatprep.subr.mxu0 0.0
    %2214 = vmatpush1.xpose.msra.mxu0 0.0
    %2215 = vmatprep.subr.mxu0 0.0
    %2216 = vmatpush1.xpose.msra.mxu0 0.0
    %2217 = vmatprep.subr.mxu0 0.0
    %2218 = vmatpush1.xpose.msra.mxu0 0.0
    %2219 = vmatprep.subr.mxu0 0.0
    %2220 = vmatpush1.xpose.msra.mxu0 0.0
    %2221 = vmatprep.subr.mxu0 0.0
    %2222 = vmatpush1.xpose.msra.mxu0 0.0
    %2223 = vmatprep.subr.mxu0 0.0
    %2224 = vmatpush1.xpose.msra.mxu0 0.0
    %2225 = vmatprep.subr.mxu0 0.0
    %2226 = vmatpush1.xpose.msra.mxu0 0.0
    %2227 = vmatprep.subr.mxu0 0.0
    %2228 = vmatpush1.xpose.msra.mxu0 0.0
    %2229 = vmatprep.subr.mxu0 0.0
    %2230 = vmatpush1.xpose.msra.mxu0 0.0
    %2231 = vmatprep.subr.mxu0 0.0
    %2232 = vmatpush1.xpose.msra.mxu0 0.0
    %2233 = vmatprep.subr.mxu0 0.0
    %2234 = vmatpush1.xpose.msra.mxu0 0.0
    %2235 = vmatprep.subr.mxu0 0.0
    %2236 = vmatpush1.xpose.msra.mxu0 0.0
    %2237 = vmatprep.subr.mxu0 0.0
    %2238 = vmatpush1.xpose.msra.mxu0 0.0
    %2239 = vmatprep.subr.mxu0 0.0
    %2240 = vmatpush1.xpose.msra.mxu0 0.0
    %2241 = vmatprep.subr.mxu0 0.0
    %2242 = vmatpush1.xpose.msra.mxu0 0.0
    %2243 = vmatprep.subr.mxu0 0.0
    %2244 = vmatpush1.xpose.msra.mxu0 0.0
    %2245 = vmatprep.mubr.f32.mxu0 0.0
    %2246 = vmatmul.mubr.f32.gmra.mrb[0].mxu0 %v2160
    %v2247 = vpop.f32.mrb[0].mxu0
    %v2248 = vadd.f32 0.0, %v2247
    %v2249 = vpop.f32.mrb[0].mxu0
    %2250 = vmatprep.mubr.f32.mxu0 0.0
    %2251 = vmatmul.mubr.f32.gmra.mrb[0].mxu0 %v2163
    %v2252 = vpop.f32.mrb[0].mxu0
    %v2253 = vadd.f32 0.0, %v2252
    %v2254 = vpop.f32.mrb[0].mxu0
    %2255 = vdwg.mxu0
    %v2256 = vmul.f32 %v2248, 0.35355338
    %v2257 = vmul.f32 %v2253, 0.35355338
    %v2258 = vadd.f32 %v2256, %v194
    %v2259 = vadd.f32 %v2257, %v195
    %v2260 = vsel %vm545, %v2258, -inf
    %2261 = vmax.xlane.f32.xlu0 %v2260
    %v2262 = vpop.xlane.xlu0 %2261
    %v2263 = vsel %vm545, %v2259, -inf
    %2264 = vmax.xlane.f32.xlu0 %v2263
    %v2265 = vpop.xlane.xlu0 %2264
    %v2266 = vsub.f32 %v2258, %v2262
    %v2267 = vsub.f32 %v2259, %v2265
    %v2268 = vmul.f32 %v2266, 1.442695
    %v2269 = vpow.pop %v2268
    %v2270 = vmul.f32 %v2267, 1.442695
    %v2271 = vpow.pop %v2270
    %v2273 = vsel %vm545, %v2269, 0
    %v2276 = vsel %vm545, %v2271, 0
    %2278 = vmatprep.subr.mxu0 0.0
    %2279 = vmatpush1.msra.mxu0 %v84
    %2280 = vmatprep.subr.mxu0 0.0
    %2281 = vmatpush1.msra.mxu0 %v85
    %2282 = vmatprep.subr.mxu0 0.0
    %2283 = vmatpush1.msra.mxu0 %v86
    %2284 = vmatprep.subr.mxu0 0.0
    %2285 = vmatpush1.msra.mxu0 %v87
    %2286 = vmatprep.subr.mxu0 0.0
    %2287 = vmatpush1.msra.mxu0 %v88
    %2288 = vmatprep.subr.mxu0 0.0
    %2289 = vmatpush1.msra.mxu0 %v89
    %2290 = vmatprep.subr.mxu0 0.0
    %2291 = vmatpush1.msra.mxu0 %v90
    %2292 = vmatprep.subr.mxu0 0.0
    %2293 = vmatpush1.msra.mxu0 %v91
    %2294 = vmatprep.subr.mxu0 0.0
    %2295 = vmatpush1.msra.mxu0 0.0
    %2296 = vmatprep.subr.mxu0 0.0
    %2297 = vmatpush1.msra.mxu0 0.0
    %2298 = vmatprep.subr.mxu0 0.0
    %2299 = vmatpush1.msra.mxu0 0.0
    %2300 = vmatprep.subr.mxu0 0.0
    %2301 = vmatpush1.msra.mxu0 0.0
    %2302 = vmatprep.subr.mxu0 0.0
    %2303 = vmatpush1.msra.mxu0 0.0
    %2304 = vmatprep.subr.mxu0 0.0
    %2305 = vmatpush1.msra.mxu0 0.0
    %2306 = vmatprep.subr.mxu0 0.0
    %2307 = vmatpush1.msra.mxu0 0.0
    %2308 = vmatprep.subr.mxu0 0.0
    %2309 = vmatpush1.msra.mxu0 0.0
    %2310 = vmatprep.subr.mxu0 0.0
    %2311 = vmatpush1.msra.mxu0 0.0
    %2312 = vmatprep.subr.mxu0 0.0
    %2313 = vmatpush1.msra.mxu0 0.0
    %2314 = vmatprep.subr.mxu0 0.0
    %2315 = vmatpush1.msra.mxu0 0.0
    %2316 = vmatprep.subr.mxu0 0.0
    %2317 = vmatpush1.msra.mxu0 0.0
    %2318 = vmatprep.subr.mxu0 0.0
    %2319 = vmatpush1.msra.mxu0 0.0
    %2320 = vmatprep.subr.mxu0 0.0
    %2321 = vmatpush1.msra.mxu0 0.0
    %2322 = vmatprep.subr.mxu0 0.0
    %2323 = vmatpush1.msra.mxu0 0.0
    %2324 = vmatprep.subr.mxu0 0.0
    %2325 = vmatpush1.msra.mxu0 0.0
    %2326 = vmatprep.subr.mxu0 0.0
    %2327 = vmatpush1.msra.mxu0 0.0
    %2328 = vmatprep.subr.mxu0 0.0
    %2329 = vmatpush1.msra.mxu0 0.0
    %2330 = vmatprep.subr.mxu0 0.0
    %2331 = vmatpush1.msra.mxu0 0.0
    %2332 = vmatprep.subr.mxu0 0.0
    %2333 = vmatpush1.msra.mxu0 0.0
    %2334 = vmatprep.subr.mxu0 0.0
    %2335 = vmatpush1.msra.mxu0 0.0
    %2336 = vmatprep.subr.mxu0 0.0
    %2337 = vmatpush1.msra.mxu0 0.0
    %2338 = vmatprep.subr.mxu0 0.0
    %2339 = vmatpush1.msra.mxu0 0.0
    %2340 = vmatprep.subr.mxu0 0.0
    %2341 = vmatpush1.msra.mxu0 0.0
    %2342 = vmatprep.mubr.f32.mxu0 0.0
    %2343 = vmatmul.mubr.f32.gmra.mrb[0].mxu0 %v2273
    %v2344 = vpop.f32.mrb[0].mxu0
    %v2345 = vadd.f32 0.0, %v2344
    %v2346 = vpop.f32.mrb[0].mxu0
    %2347 = vmatprep.mubr.f32.mxu0 0.0
    %2348 = vmatmul.mubr.f32.gmra.mrb[0].mxu0 %v2276
    %v2349 = vpop.f32.mrb[0].mxu0
    %v2350 = vadd.f32 0.0, %v2349
    %v2351 = vpop.f32.mrb[0].mxu0
    %2352 = vdwg.mxu0
    %v2353 = vrcp.pop %v2345
    %v2354 = vrcp.pop %v2350
    %v2355 = vmul.f32 %v2269, %v2353
    %v2356 = vmul.f32 %v2271, %v2354
    %2365 = vrot.lane.b32.xlu0 %v2127, 64
    %v2366 = vpop.permute.xlu0 %2365
    %2367 = vrot.lane.b32.xlu0 %v2128, 64
    %v2368 = vpop.permute.xlu0 %2367
    %2369 = vrot.lane.b32.xlu0 %v2129, 64
    %v2370 = vpop.permute.xlu0 %2369
    %2371 = vrot.lane.b32.xlu0 %v2130, 64
    %v2372 = vpop.permute.xlu0 %2371
    %2373 = vrot.lane.b32.xlu0 %v2131, 64
    %v2374 = vpop.permute.xlu0 %2373
    %2375 = vrot.lane.b32.xlu0 %v2132, 64
    %v2376 = vpop.permute.xlu0 %2375
    %2377 = vrot.lane.b32.xlu0 %v2133, 64
    %v2378 = vpop.permute.xlu0 %2377
    %2379 = vrot.lane.b32.xlu0 %v2134, 64
    %v2380 = vpop.permute.xlu0 %2379
    %v2390 = vsel %vm545, %v2355, 0
    %v2393 = vsel %vm545, %v2356, 0
    %2395 = vmatprep.subr.mxu0 0.0
    %2396 = vmatpush1.msra.mxu0 %v2366
    %2397 = vmatprep.subr.mxu0 0.0
    %2398 = vmatpush1.msra.mxu0 %v2368
    %2399 = vmatprep.subr.mxu0 0.0
    %2400 = vmatpush1.msra.mxu0 %v2370
    %2401 = vmatprep.subr.mxu0 0.0
    %2402 = vmatpush1.msra.mxu0 %v2372
    %2403 = vmatprep.subr.mxu0 0.0
    %2404 = vmatpush1.msra.mxu0 %v2374
    %2405 = vmatprep.subr.mxu0 0.0
    %2406 = vmatpush1.msra.mxu0 %v2376
    %2407 = vmatprep.subr.mxu0 0.0
    %2408 = vmatpush1.msra.mxu0 %v2378
    %2409 = vmatprep.subr.mxu0 0.0
    %2410 = vmatpush1.msra.mxu0 %v2380
    %2411 = vmatprep.subr.mxu0 0.0
    %2412 = vmatpush1.msra.mxu0 0.0
    %2413 = vmatprep.subr.mxu0 0.0
    %2414 = vmatpush1.msra.mxu0 0.0
    %2415 = vmatprep.subr.mxu0 0.0
    %2416 = vmatpush1.msra.mxu0 0.0
    %2417 = vmatprep.subr.mxu0 0.0
    %2418 = vmatpush1.msra.mxu0 0.0
    %2419 = vmatprep.subr.mxu0 0.0
    %2420 = vmatpush1.msra.mxu0 0.0
    %2421 = vmatprep.subr.mxu0 0.0
    %2422 = vmatpush1.msra.mxu0 0.0
    %2423 = vmatprep.subr.mxu0 0.0
    %2424 = vmatpush1.msra.mxu0 0.0
    %2425 = vmatprep.subr.mxu0 0.0
    %2426 = vmatpush1.msra.mxu0 0.0
    %2427 = vmatprep.subr.mxu0 0.0
    %2428 = vmatpush1.msra.mxu0 0.0
    %2429 = vmatprep.subr.mxu0 0.0
    %2430 = vmatpush1.msra.mxu0 0.0
    %2431 = vmatprep.subr.mxu0 0.0
    %2432 = vmatpush1.msra.mxu0 0.0
    %2433 = vmatprep.subr.mxu0 0.0
    %2434 = vmatpush1.msra.mxu0 0.0
    %2435 = vmatprep.subr.mxu0 0.0
    %2436 = vmatpush1.msra.mxu0 0.0
    %2437 = vmatprep.subr.mxu0 0.0
    %2438 = vmatpush1.msra.mxu0 0.0
    %2439 = vmatprep.subr.mxu0 0.0
    %2440 = vmatpush1.msra.mxu0 0.0
    %2441 = vmatprep.subr.mxu0 0.0
    %2442 = vmatpush1.msra.mxu0 0.0
    %2443 = vmatprep.subr.mxu0 0.0
    %2444 = vmatpush1.msra.mxu0 0.0
    %2445 = vmatprep.subr.mxu0 0.0
    %2446 = vmatpush1.msra.mxu0 0.0
    %2447 = vmatprep.subr.mxu0 0.0
    %2448 = vmatpush1.msra.mxu0 0.0
    %2449 = vmatprep.subr.mxu0 0.0
    %2450 = vmatpush1.msra.mxu0 0.0
    %2451 = vmatprep.subr.mxu0 0.0
    %2452 = vmatpush1.msra.mxu0 0.0
    %2453 = vmatprep.subr.mxu0 0.0
    %2454 = vmatpush1.msra.mxu0 0.0
    %2455 = vmatprep.subr.mxu0 0.0
    %2456 = vmatpush1.msra.mxu0 0.0
    %2457 = vmatprep.subr.mxu0 0.0
    %2458 = vmatpush1.msra.mxu0 0.0
    %2459 = vmatprep.mubr.f32.mxu0 0.0
    %2460 = vmatmul.mubr.f32.gmra.mrb[0].mxu0 %v2390
    %v2461 = vpop.f32.mrb[0].mxu0
    %v2462 = vadd.f32 0.0, %v2461
    %v2463 = vpop.f32.mrb[0].mxu0
    %2464 = vmatprep.mubr.f32.mxu0 0.0
    %2465 = vmatmul.mubr.f32.gmra.mrb[0].mxu0 %v2393
    %v2466 = vpop.f32.mrb[0].mxu0
    %v2467 = vadd.f32 0.0, %v2466
    %v2468 = vpop.f32.mrb[0].mxu0
    %2469 = vdwg.mxu0
    %v2470 = vlaneseq
    %v2471 = vshrl.u32 %v2470, 7
    %v2472 = vsub.s32 0, %v2471
    %v2473 = vrot.slane %v2033, %v2472
    %v2475 = vsel %vm148, %v2462, 0
    %v2478 = vsel %vm148, %v2467, 0
    %2480 = vmatprep.subr.mxu0 0.0
    %2481 = vmatpush1.msra.mxu0 %v2029
    %2482 = vmatprep.subr.mxu0 0.0
    %2483 = vmatpush1.msra.mxu0 %v2030
    %2484 = vmatprep.subr.mxu0 0.0
    %2485 = vmatpush1.msra.mxu0 %v2031
    %2486 = vmatprep.subr.mxu0 0.0
    %2487 = vmatpush1.msra.mxu0 %v2032
    %2488 = vmatprep.subr.mxu0 0.0
    %2489 = vmatpush1.msra.mxu0 0.0
    %2490 = vmatprep.subr.mxu0 0.0
    %2491 = vmatpush1.msra.mxu0 0.0
    %2492 = vmatprep.subr.mxu0 0.0
    %2493 = vmatpush1.msra.mxu0 0.0
    %2494 = vmatprep.subr.mxu0 0.0
    %2495 = vmatpush1.msra.mxu0 0.0
    %2496 = vmatprep.subr.mxu0 0.0
    %2497 = vmatpush1.msra.mxu0 0.0
    %2498 = vmatprep.subr.mxu0 0.0
    %2499 = vmatpush1.msra.mxu0 0.0
    %2500 = vmatprep.subr.mxu0 0.0
    %2501 = vmatpush1.msra.mxu0 0.0
    %2502 = vmatprep.subr.mxu0 0.0
    %2503 = vmatpush1.msra.mxu0 0.0
    %2504 = vmatprep.subr.mxu0 0.0
    %2505 = vmatpush1.msra.mxu0 0.0
    %2506 = vmatprep.subr.mxu0 0.0
    %2507 = vmatpush1.msra.mxu0 0.0
    %2508 = vmatprep.subr.mxu0 0.0
    %2509 = vmatpush1.msra.mxu0 0.0
    %2510 = vmatprep.subr.mxu0 0.0
    %2511 = vmatpush1.msra.mxu0 0.0
    %2512 = vmatprep.subr.mxu0 0.0
    %2513 = vmatpush1.msra.mxu0 0.0
    %2514 = vmatprep.subr.mxu0 0.0
    %2515 = vmatpush1.msra.mxu0 0.0
    %2516 = vmatprep.subr.mxu0 0.0
    %2517 = vmatpush1.msra.mxu0 0.0
    %2518 = vmatprep.subr.mxu0 0.0
    %2519 = vmatpush1.msra.mxu0 0.0
    %2520 = vmatprep.subr.mxu0 0.0
    %2521 = vmatpush1.msra.mxu0 0.0
    %2522 = vmatprep.subr.mxu0 0.0
    %2523 = vmatpush1.msra.mxu0 0.0
    %2524 = vmatprep.subr.mxu0 0.0
    %2525 = vmatpush1.msra.mxu0 0.0
    %2526 = vmatprep.subr.mxu0 0.0
    %2527 = vmatpush1.msra.mxu0 0.0
    %2528 = vmatprep.subr.mxu0 0.0
    %2529 = vmatpush1.msra.mxu0 0.0
    %2530 = vmatprep.subr.mxu0 0.0
    %2531 = vmatpush1.msra.mxu0 0.0
    %2532 = vmatprep.subr.mxu0 0.0
    %2533 = vmatpush1.msra.mxu0 0.0
    %2534 = vmatprep.subr.mxu0 0.0
    %2535 = vmatpush1.msra.mxu0 0.0
    %2536 = vmatprep.subr.mxu0 0.0
    %2537 = vmatpush1.msra.mxu0 0.0
    %2538 = vmatprep.subr.mxu0 0.0
    %2539 = vmatpush1.msra.mxu0 0.0
    %2540 = vmatprep.subr.mxu0 0.0
    %2541 = vmatpush1.msra.mxu0 0.0
    %2542 = vmatprep.subr.mxu0 0.0
    %2543 = vmatpush1.msra.mxu0 0.0
    %2544 = vmatprep.mubr.f32.mxu0 0.0
    %2545 = vmatmul.mubr.f32.gmra.mrb[0].mxu0 %v2475
    %v2546 = vpop.f32.mrb[0].mxu0
    %v2547 = vadd.f32 %v2473, %v2546
    %v2548 = vpop.f32.mrb[0].mxu0
    %2549 = vmatprep.mubr.f32.mxu0 0.0
    %2550 = vmatmul.mubr.f32.gmra.mrb[0].mxu0 %v2478
    %v2551 = vpop.f32.mrb[0].mxu0
    %v2552 = vadd.f32 %v2473, %v2551
    %v2553 = vpop.f32.mrb[0].mxu0
    %2554 = vdwg.mxu0
    %v2555 = vadd.f32 %v1968, %v2547
    %v2556 = vadd.f32 %v1969, %v2552
    %v2557 = vld [vmem:[#allocation2 + $0x318] sm:$0x1]
    %v2558 = vld [vmem:[#allocation2 + $0x320] sm:$0x1]
    %v2559 = vsel %vm148, %v2555, 0.0
    %2560 = vadd.xlane.f32.xlu0 %v2559
    %v2561 = vpop.xlane.xlu0 %2560
    %v2562 = vsel %vm148, %v2556, 0.0
    %2563 = vadd.xlane.f32.xlu0 %v2562
    %v2564 = vpop.xlane.xlu0 %2563
    %v2565 = vmul.f32 %v2561, %v206
    %v2566 = vmul.f32 %v2564, %v206
    %v2567 = vsub.f32 %v2555, %v2565
    %v2568 = vsub.f32 %v2556, %v2566
    %v2569 = vmul.f32 %v2567, %v2567
    %v2570 = vmul.f32 %v2568, %v2568
    %v2571 = vsel %vm148, %v2569, 0.0
    %2572 = vadd.xlane.f32.xlu0 %v2571
    %v2573 = vpop.xlane.xlu0 %2572
    %v2574 = vsel %vm148, %v2570, 0.0
    %2575 = vadd.xlane.f32.xlu0 %v2574
    %v2576 = vpop.xlane.xlu0 %2575
    %v2577 = vmul.f32 %v2573, 0.032258064
    %v2578 = vmul.f32 %v2576, 0.032258064
    %v2579 = vrsqrt.pop %v2577
    %v2580 = vmul.f32 %v2577, %v2579
    %vm2581 = vcmp.eq.f32.partialorder %v2577, inf
    %v2582 = vsel %vm2581, %v2577, %v2580
    %vm2583 = vcmp.eq.f32.partialorder %v2577, 0.0
    %v2584 = vand.u32 %v2577, 2147483648
    %v2585 = vsel %vm2583, %v2584, %v2582
    %v2586 = vrsqrt.pop %v2578
    %v2587 = vmul.f32 %v2578, %v2586
    %vm2588 = vcmp.eq.f32.partialorder %v2578, inf
    %v2589 = vsel %vm2588, %v2578, %v2587
    %vm2590 = vcmp.eq.f32.partialorder %v2578, 0.0
    %v2591 = vand.u32 %v2578, 2147483648
    %v2592 = vsel %vm2590, %v2591, %v2589
    %v2593 = vlaneseq
    %v2594 = vshrl.u32 %v2593, 7
    %v2595 = vsub.s32 0, %v2594
    %v2596 = vrot.slane %v2557, %v2595
    %v2597 = vmul.f32 %v2596, %v2567
    %v2598 = vmul.f32 %v2596, %v2568
    %v2599 = vadd.f32 %v2585, 1e-06
    %v2600 = vadd.f32 %v2592, 1e-06
    %v2601 = vrcp.pop %v2599
    %v2602 = vmul.f32 %v2597, %v2601
    %v2603 = vrcp.pop %v2600
    %v2604 = vmul.f32 %v2598, %v2603
    %v2605 = vlaneseq
    %v2606 = vshrl.u32 %v2605, 7
    %v2607 = vsub.s32 0, %v2606
    %v2608 = vrot.slane %v2558, %v2607
    %v2609 = vadd.f32 %v2602, %v2608
    %v2610 = vadd.f32 %v2604, %v2608
    %v2611 = vld [vmem:[#allocation2 + $0x220] sm:$0xff]
    %v2612 = vld [vmem:[#allocation2 + $0x228] sm:$0xff]
    %v2613 = vld [vmem:[#allocation2 + $0x230] sm:$0xff]
    %v2614 = vld [vmem:[#allocation2 + $0x238] sm:$0xff]
    %v2615 = vld [vmem:[#allocation2 + $0x240] sm:$0x1]
    %v2616 = vld [vmem:[#allocation2 + $0x248] sm:$0xff]
    %v2617 = vld [vmem:[#allocation2 + $0x250] sm:$0xff]
    %v2618 = vld [vmem:[#allocation2 + $0x258] sm:$0xff]
    %v2619 = vld [vmem:[#allocation2 + $0x260] sm:$0xff]
    %v2620 = vld [vmem:[#allocation2 + $0x268] sm:$0x1]
    %v2621 = vld [vmem:[#allocation2 + $0x270] sm:$0xff]
    %v2622 = vld [vmem:[#allocation2 + $0x278] sm:$0xff]
    %v2623 = vld [vmem:[#allocation2 + $0x280] sm:$0xff]
    %v2624 = vld [vmem:[#allocation2 + $0x288] sm:$0xff]
    %v2625 = vld [vmem:[#allocation2 + $0x290] sm:$0x1]
    %v2626 = vlaneseq
    %v2627 = vshrl.u32 %v2626, 7
    %v2628 = vsub.s32 0, %v2627
    %v2629 = vrot.slane %v2615, %v2628
    %v2631 = vsel %vm148, %v2609, 0
    %v2634 = vsel %vm148, %v2610, 0
    %2636 = vmatprep.subr.mxu0 0.0
    %2637 = vmatpush1.msra.mxu0 %v2611
    %2638 = vmatprep.subr.mxu0 0.0
    %2639 = vmatpush1.msra.mxu0 %v2612
    %2640 = vmatprep.subr.mxu0 0.0
    %2641 = vmatpush1.msra.mxu0 %v2613
    %2642 = vmatprep.subr.mxu0 0.0
    %2643 = vmatpush1.msra.mxu0 %v2614
    %2644 = vmatprep.subr.mxu0 0.0
    %2645 = vmatpush1.msra.mxu0 0.0
    %2646 = vmatprep.subr.mxu0 0.0
    %2647 = vmatpush1.msra.mxu0 0.0
    %2648 = vmatprep.subr.mxu0 0.0
    %2649 = vmatpush1.msra.mxu0 0.0
    %2650 = vmatprep.subr.mxu0 0.0
    %2651 = vmatpush1.msra.mxu0 0.0
    %2652 = vmatprep.subr.mxu0 0.0
    %2653 = vmatpush1.msra.mxu0 0.0
    %2654 = vmatprep.subr.mxu0 0.0
    %2655 = vmatpush1.msra.mxu0 0.0
    %2656 = vmatprep.subr.mxu0 0.0
    %2657 = vmatpush1.msra.mxu0 0.0
    %2658 = vmatprep.subr.mxu0 0.0
    %2659 = vmatpush1.msra.mxu0 0.0
    %2660 = vmatprep.subr.mxu0 0.0
    %2661 = vmatpush1.msra.mxu0 0.0
    %2662 = vmatprep.subr.mxu0 0.0
    %2663 = vmatpush1.msra.mxu0 0.0
    %2664 = vmatprep.subr.mxu0 0.0
    %2665 = vmatpush1.msra.mxu0 0.0
    %2666 = vmatprep.subr.mxu0 0.0
    %2667 = vmatpush1.msra.mxu0 0.0
    %2668 = vmatprep.subr.mxu0 0.0
    %2669 = vmatpush1.msra.mxu0 0.0
    %2670 = vmatprep.subr.mxu0 0.0
    %2671 = vmatpush1.msra.mxu0 0.0
    %2672 = vmatprep.subr.mxu0 0.0
    %2673 = vmatpush1.msra.mxu0 0.0
    %2674 = vmatprep.subr.mxu0 0.0
    %2675 = vmatpush1.msra.mxu0 0.0
    %2676 = vmatprep.subr.mxu0 0.0
    %2677 = vmatpush1.msra.mxu0 0.0
    %2678 = vmatprep.subr.mxu0 0.0
    %2679 = vmatpush1.msra.mxu0 0.0
    %2680 = vmatprep.subr.mxu0 0.0
    %2681 = vmatpush1.msra.mxu0 0.0
    %2682 = vmatprep.subr.mxu0 0.0
    %2683 = vmatpush1.msra.mxu0 0.0
    %2684 = vmatprep.subr.mxu0 0.0
    %2685 = vmatpush1.msra.mxu0 0.0
    %2686 = vmatprep.subr.mxu0 0.0
    %2687 = vmatpush1.msra.mxu0 0.0
    %2688 = vmatprep.subr.mxu0 0.0
    %2689 = vmatpush1.msra.mxu0 0.0
    %2690 = vmatprep.subr.mxu0 0.0
    %2691 = vmatpush1.msra.mxu0 0.0
    %2692 = vmatprep.subr.mxu0 0.0
    %2693 = vmatpush1.msra.mxu0 0.0
    %2694 = vmatprep.subr.mxu0 0.0
    %2695 = vmatpush1.msra.mxu0 0.0
    %2696 = vmatprep.subr.mxu0 0.0
    %2697 = vmatpush1.msra.mxu0 0.0
    %2698 = vmatprep.subr.mxu0 0.0
    %2699 = vmatpush1.msra.mxu0 0.0
    %2700 = vmatprep.mubr.f32.mxu0 0.0
    %2701 = vmatmul.mubr.f32.gmra.mrb[0].mxu0 %v2631
    %v2702 = vpop.f32.mrb[0].mxu0
    %v2703 = vadd.f32 %v2629, %v2702
    %v2704 = vpop.f32.mrb[0].mxu0
    %2705 = vmatprep.mubr.f32.mxu0 0.0
    %2706 = vmatmul.mubr.f32.gmra.mrb[0].mxu0 %v2634
    %v2707 = vpop.f32.mrb[0].mxu0
    %v2708 = vadd.f32 %v2629, %v2707
    %v2709 = vpop.f32.mrb[0].mxu0
    %2710 = vdwg.mxu0
    %v2711 = vlaneseq
    %v2712 = vshrl.u32 %v2711, 7
    %v2713 = vsub.s32 0, %v2712
    %v2714 = vrot.slane %v2620, %v2713
    %v2716 = vsel %vm148, %v1966, 0
    %v2719 = vsel %vm148, %v1967, 0
    %2721 = vmatprep.subr.mxu0 0.0
    %2722 = vmatpush1.msra.mxu0 %v2616
    %2723 = vmatprep.subr.mxu0 0.0
    %2724 = vmatpush1.msra.mxu0 %v2617
    %2725 = vmatprep.subr.mxu0 0.0
    %2726 = vmatpush1.msra.mxu0 %v2618
    %2727 = vmatprep.subr.mxu0 0.0
    %2728 = vmatpush1.msra.mxu0 %v2619
    %2729 = vmatprep.subr.mxu0 0.0
    %2730 = vmatpush1.msra.mxu0 0.0
    %2731 = vmatprep.subr.mxu0 0.0
    %2732 = vmatpush1.msra.mxu0 0.0
    %2733 = vmatprep.subr.mxu0 0.0
    %2734 = vmatpush1.msra.mxu0 0.0
    %2735 = vmatprep.subr.mxu0 0.0
    %2736 = vmatpush1.msra.mxu0 0.0
    %2737 = vmatprep.subr.mxu0 0.0
    %2738 = vmatpush1.msra.mxu0 0.0
    %2739 = vmatprep.subr.mxu0 0.0
    %2740 = vmatpush1.msra.mxu0 0.0
    %2741 = vmatprep.subr.mxu0 0.0
    %2742 = vmatpush1.msra.mxu0 0.0
    %2743 = vmatprep.subr.mxu0 0.0
    %2744 = vmatpush1.msra.mxu0 0.0
    %2745 = vmatprep.subr.mxu0 0.0
    %2746 = vmatpush1.msra.mxu0 0.0
    %2747 = vmatprep.subr.mxu0 0.0
    %2748 = vmatpush1.msra.mxu0 0.0
    %2749 = vmatprep.subr.mxu0 0.0
    %2750 = vmatpush1.msra.mxu0 0.0
    %2751 = vmatprep.subr.mxu0 0.0
    %2752 = vmatpush1.msra.mxu0 0.0
    %2753 = vmatprep.subr.mxu0 0.0
    %2754 = vmatpush1.msra.mxu0 0.0
    %2755 = vmatprep.subr.mxu0 0.0
    %2756 = vmatpush1.msra.mxu0 0.0
    %2757 = vmatprep.subr.mxu0 0.0
    %2758 = vmatpush1.msra.mxu0 0.0
    %2759 = vmatprep.subr.mxu0 0.0
    %2760 = vmatpush1.msra.mxu0 0.0
    %2761 = vmatprep.subr.mxu0 0.0
    %2762 = vmatpush1.msra.mxu0 0.0
    %2763 = vmatprep.subr.mxu0 0.0
    %2764 = vmatpush1.msra.mxu0 0.0
    %2765 = vmatprep.subr.mxu0 0.0
    %2766 = vmatpush1.msra.mxu0 0.0
    %2767 = vmatprep.subr.mxu0 0.0
    %2768 = vmatpush1.msra.mxu0 0.0
    %2769 = vmatprep.subr.mxu0 0.0
    %2770 = vmatpush1.msra.mxu0 0.0
    %2771 = vmatprep.subr.mxu0 0.0
    %2772 = vmatpush1.msra.mxu0 0.0
    %2773 = vmatprep.subr.mxu0 0.0
    %2774 = vmatpush1.msra.mxu0 0.0
    %2775 = vmatprep.subr.mxu0 0.0
    %2776 = vmatpush1.msra.mxu0 0.0
    %2777 = vmatprep.subr.mxu0 0.0
    %2778 = vmatpush1.msra.mxu0 0.0
    %2779 = vmatprep.subr.mxu0 0.0
    %2780 = vmatpush1.msra.mxu0 0.0
    %2781 = vmatprep.subr.mxu0 0.0
    %2782 = vmatpush1.msra.mxu0 0.0
    %2783 = vmatprep.subr.mxu0 0.0
    %2784 = vmatpush1.msra.mxu0 0.0
    %2785 = vmatprep.mubr.f32.mxu0 0.0
    %2786 = vmatmul.mubr.f32.gmra.mrb[0].mxu0 %v2716
    %v2787 = vpop.f32.mrb[0].mxu0
    %v2788 = vadd.f32 %v2714, %v2787
    %v2789 = vpop.f32.mrb[0].mxu0
    %2790 = vmatprep.mubr.f32.mxu0 0.0
    %2791 = vmatmul.mubr.f32.gmra.mrb[0].mxu0 %v2719
    %v2792 = vpop.f32.mrb[0].mxu0
    %v2793 = vadd.f32 %v2714, %v2792
    %v2794 = vpop.f32.mrb[0].mxu0
    %2795 = vdwg.mxu0
    %v2796 = vmul.f32 %v2788, %v76
    %v2797 = vmul.f32 %v2793, %v77
    %v2798 = vmul.f32 %v2788, %v78
    %v2799 = vmul.f32 %v2793, %v79
    %v2800 = vmul.f32 %v2788, %v80
    %v2801 = vmul.f32 %v2793, %v81
    %v2802 = vmul.f32 %v2788, %v82
    %v2803 = vmul.f32 %v2793, %v83
    %v2804 = vmul.f32 %v2788, %v357
    %v2805 = vmul.f32 %v2793, %v359
    %v2806 = vmul.f32 %v2788, %v361
    %v2807 = vmul.f32 %v2793, %v363
    %v2808 = vmul.f32 %v2788, %v365
    %v2809 = vmul.f32 %v2793, %v367
    %v2810 = vmul.f32 %v2788, %v369
    %v2811 = vmul.f32 %v2793, %v371
    %v2813 = vsel %vm148, %v2703, 0
    %v2816 = vsel %vm148, %v2708, 0
    %v2819 = vsel %vm148, %v2796, 0
    %v2822 = vsel %vm148, %v2797, 0
    %v2825 = vsel %vm148, %v2798, 0
    %v2828 = vsel %vm148, %v2799, 0
    %v2831 = vsel %vm148, %v2800, 0
    %v2834 = vsel %vm148, %v2801, 0
    %v2837 = vsel %vm148, %v2802, 0
    %v2840 = vsel %vm148, %v2803, 0
    %2842 = vmatprep.subr.mxu0 0.0
    %2843 = vmatpush1.xpose.msra.mxu0 %v2819
    %2844 = vmatprep.subr.mxu0 0.0
    %2845 = vmatpush1.xpose.msra.mxu0 %v2822
    %2846 = vmatprep.subr.mxu0 0.0
    %2847 = vmatpush1.xpose.msra.mxu0 %v2825
    %2848 = vmatprep.subr.mxu0 0.0
    %2849 = vmatpush1.xpose.msra.mxu0 %v2828
    %2850 = vmatprep.subr.mxu0 0.0
    %2851 = vmatpush1.xpose.msra.mxu0 %v2831
    %2852 = vmatprep.subr.mxu0 0.0
    %2853 = vmatpush1.xpose.msra.mxu0 %v2834
    %2854 = vmatprep.subr.mxu0 0.0
    %2855 = vmatpush1.xpose.msra.mxu0 %v2837
    %2856 = vmatprep.subr.mxu0 0.0
    %2857 = vmatpush1.xpose.msra.mxu0 %v2840
    %2858 = vmatprep.subr.mxu0 0.0
    %2859 = vmatpush1.xpose.msra.mxu0 0.0
    %2860 = vmatprep.subr.mxu0 0.0
    %2861 = vmatpush1.xpose.msra.mxu0 0.0
    %2862 = vmatprep.subr.mxu0 0.0
    %2863 = vmatpush1.xpose.msra.mxu0 0.0
    %2864 = vmatprep.subr.mxu0 0.0
    %2865 = vmatpush1.xpose.msra.mxu0 0.0
    %2866 = vmatprep.subr.mxu0 0.0
    %2867 = vmatpush1.xpose.msra.mxu0 0.0
    %2868 = vmatprep.subr.mxu0 0.0
    %2869 = vmatpush1.xpose.msra.mxu0 0.0
    %2870 = vmatprep.subr.mxu0 0.0
    %2871 = vmatpush1.xpose.msra.mxu0 0.0
    %2872 = vmatprep.subr.mxu0 0.0
    %2873 = vmatpush1.xpose.msra.mxu0 0.0
    %2874 = vmatprep.subr.mxu0 0.0
    %2875 = vmatpush1.xpose.msra.mxu0 0.0
    %2876 = vmatprep.subr.mxu0 0.0
    %2877 = vmatpush1.xpose.msra.mxu0 0.0
    %2878 = vmatprep.subr.mxu0 0.0
    %2879 = vmatpush1.xpose.msra.mxu0 0.0
    %2880 = vmatprep.subr.mxu0 0.0
    %2881 = vmatpush1.xpose.msra.mxu0 0.0
    %2882 = vmatprep.subr.mxu0 0.0
    %2883 = vmatpush1.xpose.msra.mxu0 0.0
    %2884 = vmatprep.subr.mxu0 0.0
    %2885 = vmatpush1.xpose.msra.mxu0 0.0
    %2886 = vmatprep.subr.mxu0 0.0
    %2887 = vmatpush1.xpose.msra.mxu0 0.0
    %2888 = vmatprep.subr.mxu0 0.0
    %2889 = vmatpush1.xpose.msra.mxu0 0.0
    %2890 = vmatprep.subr.mxu0 0.0
    %2891 = vmatpush1.xpose.msra.mxu0 0.0
    %2892 = vmatprep.subr.mxu0 0.0
    %2893 = vmatpush1.xpose.msra.mxu0 0.0
    %2894 = vmatprep.subr.mxu0 0.0
    %2895 = vmatpush1.xpose.msra.mxu0 0.0
    %2896 = vmatprep.subr.mxu0 0.0
    %2897 = vmatpush1.xpose.msra.mxu0 0.0
    %2898 = vmatprep.subr.mxu0 0.0
    %2899 = vmatpush1.xpose.msra.mxu0 0.0
    %2900 = vmatprep.subr.mxu0 0.0
    %2901 = vmatpush1.xpose.msra.mxu0 0.0
    %2902 = vmatprep.subr.mxu0 0.0
    %2903 = vmatpush1.xpose.msra.mxu0 0.0
    %2904 = vmatprep.subr.mxu0 0.0
    %2905 = vmatpush1.xpose.msra.mxu0 0.0
    %2906 = vmatprep.mubr.f32.mxu0 0.0
    %2907 = vmatmul.mubr.f32.gmra.mrb[0].mxu0 %v2813
    %v2908 = vpop.f32.mrb[0].mxu0
    %v2909 = vadd.f32 0.0, %v2908
    %v2910 = vpop.f32.mrb[0].mxu0
    %2911 = vmatprep.mubr.f32.mxu0 0.0
    %2912 = vmatmul.mubr.f32.gmra.mrb[0].mxu0 %v2816
    %v2913 = vpop.f32.mrb[0].mxu0
    %v2914 = vadd.f32 0.0, %v2913
    %v2915 = vpop.f32.mrb[0].mxu0
    %2916 = vdwg.mxu0
    %v2917 = vmul.f32 %v2909, 0.35355338
    %v2918 = vmul.f32 %v2914, 0.35355338
    %v2919 = vadd.f32 %v2917, %v152
    %v2920 = vadd.f32 %v2918, %v153
    %v2921 = vsel %vm545, %v2919, -inf
    %2922 = vmax.xlane.f32.xlu0 %v2921
    %v2923 = vpop.xlane.xlu0 %2922
    %v2924 = vsel %vm545, %v2920, -inf
    %2925 = vmax.xlane.f32.xlu0 %v2924
    %v2926 = vpop.xlane.xlu0 %2925
    %v2927 = vsub.f32 %v2919, %v2923
    %v2928 = vsub.f32 %v2920, %v2926
    %v2929 = vmul.f32 %v2927, 1.442695
    %v2930 = vpow.pop %v2929
    %v2931 = vmul.f32 %v2928, 1.442695
    %v2932 = vpow.pop %v2931
    %v2934 = vsel %vm545, %v2930, 0
    %v2937 = vsel %vm545, %v2932, 0
    %2939 = vmatprep.subr.mxu0 0.0
    %2940 = vmatpush1.msra.mxu0 %v84
    %2941 = vmatprep.subr.mxu0 0.0
    %2942 = vmatpush1.msra.mxu0 %v85
    %2943 = vmatprep.subr.mxu0 0.0
    %2944 = vmatpush1.msra.mxu0 %v86
    %2945 = vmatprep.subr.mxu0 0.0
    %2946 = vmatpush1.msra.mxu0 %v87
    %2947 = vmatprep.subr.mxu0 0.0
    %2948 = vmatpush1.msra.mxu0 %v88
    %2949 = vmatprep.subr.mxu0 0.0
    %2950 = vmatpush1.msra.mxu0 %v89
    %2951 = vmatprep.subr.mxu0 0.0
    %2952 = vmatpush1.msra.mxu0 %v90
    %2953 = vmatprep.subr.mxu0 0.0
    %2954 = vmatpush1.msra.mxu0 %v91
    %2955 = vmatprep.subr.mxu0 0.0
    %2956 = vmatpush1.msra.mxu0 0.0
    %2957 = vmatprep.subr.mxu0 0.0
    %2958 = vmatpush1.msra.mxu0 0.0
    %2959 = vmatprep.subr.mxu0 0.0
    %2960 = vmatpush1.msra.mxu0 0.0
    %2961 = vmatprep.subr.mxu0 0.0
    %2962 = vmatpush1.msra.mxu0 0.0
    %2963 = vmatprep.subr.mxu0 0.0
    %2964 = vmatpush1.msra.mxu0 0.0
    %2965 = vmatprep.subr.mxu0 0.0
    %2966 = vmatpush1.msra.mxu0 0.0
    %2967 = vmatprep.subr.mxu0 0.0
    %2968 = vmatpush1.msra.mxu0 0.0
    %2969 = vmatprep.subr.mxu0 0.0
    %2970 = vmatpush1.msra.mxu0 0.0
    %2971 = vmatprep.subr.mxu0 0.0
    %2972 = vmatpush1.msra.mxu0 0.0
    %2973 = vmatprep.subr.mxu0 0.0
    %2974 = vmatpush1.msra.mxu0 0.0
    %2975 = vmatprep.subr.mxu0 0.0
    %2976 = vmatpush1.msra.mxu0 0.0
    %2977 = vmatprep.subr.mxu0 0.0
    %2978 = vmatpush1.msra.mxu0 0.0
    %2979 = vmatprep.subr.mxu0 0.0
    %2980 = vmatpush1.msra.mxu0 0.0
    %2981 = vmatprep.subr.mxu0 0.0
    %2982 = vmatpush1.msra.mxu0 0.0
    %2983 = vmatprep.subr.mxu0 0.0
    %2984 = vmatpush1.msra.mxu0 0.0
    %2985 = vmatprep.subr.mxu0 0.0
    %2986 = vmatpush1.msra.mxu0 0.0
    %2987 = vmatprep.subr.mxu0 0.0
    %2988 = vmatpush1.msra.mxu0 0.0
    %2989 = vmatprep.subr.mxu0 0.0
    %2990 = vmatpush1.msra.mxu0 0.0
    %2991 = vmatprep.subr.mxu0 0.0
    %2992 = vmatpush1.msra.mxu0 0.0
    %2993 = vmatprep.subr.mxu0 0.0
    %2994 = vmatpush1.msra.mxu0 0.0
    %2995 = vmatprep.subr.mxu0 0.0
    %2996 = vmatpush1.msra.mxu0 0.0
    %2997 = vmatprep.subr.mxu0 0.0
    %2998 = vmatpush1.msra.mxu0 0.0
    %2999 = vmatprep.subr.mxu0 0.0
    %3000 = vmatpush1.msra.mxu0 0.0
    %3001 = vmatprep.subr.mxu0 0.0
    %3002 = vmatpush1.msra.mxu0 0.0
    %3003 = vmatprep.mubr.f32.mxu0 0.0
    %3004 = vmatmul.mubr.f32.gmra.mrb[0].mxu0 %v2934
    %v3005 = vpop.f32.mrb[0].mxu0
    %v3006 = vadd.f32 0.0, %v3005
    %v3007 = vpop.f32.mrb[0].mxu0
    %3008 = vmatprep.mubr.f32.mxu0 0.0
    %3009 = vmatmul.mubr.f32.gmra.mrb[0].mxu0 %v2937
    %v3010 = vpop.f32.mrb[0].mxu0
    %v3011 = vadd.f32 0.0, %v3010
    %v3012 = vpop.f32.mrb[0].mxu0
    %3013 = vdwg.mxu0
    %v3014 = vrcp.pop %v3006
    %v3015 = vrcp.pop %v3011
    %v3016 = vmul.f32 %v2930, %v3014
    %v3017 = vmul.f32 %v2932, %v3015
    %3026 = vrot.lane.b32.xlu0 %v2804, 96
    %v3027 = vpop.permute.xlu0 %3026
    %3028 = vrot.lane.b32.xlu0 %v2805, 96
    %v3029 = vpop.permute.xlu0 %3028
    %3030 = vrot.lane.b32.xlu0 %v2806, 96
    %v3031 = vpop.permute.xlu0 %3030
    %3032 = vrot.lane.b32.xlu0 %v2807, 96
    %v3033 = vpop.permute.xlu0 %3032
    %3034 = vrot.lane.b32.xlu0 %v2808, 96
    %v3035 = vpop.permute.xlu0 %3034
    %3036 = vrot.lane.b32.xlu0 %v2809, 96
    %v3037 = vpop.permute.xlu0 %3036
    %3038 = vrot.lane.b32.xlu0 %v2810, 96
    %v3039 = vpop.permute.xlu0 %3038
    %3040 = vrot.lane.b32.xlu0 %v2811, 96
    %v3041 = vpop.permute.xlu0 %3040
    %v3051 = vsel %vm545, %v3016, 0
    %v3054 = vsel %vm545, %v3017, 0
    %3056 = vmatprep.subr.mxu0 0.0
    %3057 = vmatpush1.msra.mxu0 %v3027
    %3058 = vmatprep.subr.mxu0 0.0
    %3059 = vmatpush1.msra.mxu0 %v3029
    %3060 = vmatprep.subr.mxu0 0.0
    %3061 = vmatpush1.msra.mxu0 %v3031
    %3062 = vmatprep.subr.mxu0 0.0
    %3063 = vmatpush1.msra.mxu0 %v3033
    %3064 = vmatprep.subr.mxu0 0.0
    %3065 = vmatpush1.msra.mxu0 %v3035
    %3066 = vmatprep.subr.mxu0 0.0
    %3067 = vmatpush1.msra.mxu0 %v3037
    %3068 = vmatprep.subr.mxu0 0.0
    %3069 = vmatpush1.msra.mxu0 %v3039
    %3070 = vmatprep.subr.mxu0 0.0
    %3071 = vmatpush1.msra.mxu0 %v3041
    %3072 = vmatprep.subr.mxu0 0.0
    %3073 = vmatpush1.msra.mxu0 0.0
    %3074 = vmatprep.subr.mxu0 0.0
    %3075 = vmatpush1.msra.mxu0 0.0
    %3076 = vmatprep.subr.mxu0 0.0
    %3077 = vmatpush1.msra.mxu0 0.0
    %3078 = vmatprep.subr.mxu0 0.0
    %3079 = vmatpush1.msra.mxu0 0.0
    %3080 = vmatprep.subr.mxu0 0.0
    %3081 = vmatpush1.msra.mxu0 0.0
    %3082 = vmatprep.subr.mxu0 0.0
    %3083 = vmatpush1.msra.mxu0 0.0
    %3084 = vmatprep.subr.mxu0 0.0
    %3085 = vmatpush1.msra.mxu0 0.0
    %3086 = vmatprep.subr.mxu0 0.0
    %3087 = vmatpush1.msra.mxu0 0.0
    %3088 = vmatprep.subr.mxu0 0.0
    %3089 = vmatpush1.msra.mxu0 0.0
    %3090 = vmatprep.subr.mxu0 0.0
    %3091 = vmatpush1.msra.mxu0 0.0
    %3092 = vmatprep.subr.mxu0 0.0
    %3093 = vmatpush1.msra.mxu0 0.0
    %3094 = vmatprep.subr.mxu0 0.0
    %3095 = vmatpush1.msra.mxu0 0.0
    %3096 = vmatprep.subr.mxu0 0.0
    %3097 = vmatpush1.msra.mxu0 0.0
    %3098 = vmatprep.subr.mxu0 0.0
    %3099 = vmatpush1.msra.mxu0 0.0
    %3100 = vmatprep.subr.mxu0 0.0
    %3101 = vmatpush1.msra.mxu0 0.0
    %3102 = vmatprep.subr.mxu0 0.0
    %3103 = vmatpush1.msra.mxu0 0.0
    %3104 = vmatprep.subr.mxu0 0.0
    %3105 = vmatpush1.msra.mxu0 0.0
    %3106 = vmatprep.subr.mxu0 0.0
    %3107 = vmatpush1.msra.mxu0 0.0
    %3108 = vmatprep.subr.mxu0 0.0
    %3109 = vmatpush1.msra.mxu0 0.0
    %3110 = vmatprep.subr.mxu0 0.0
    %3111 = vmatpush1.msra.mxu0 0.0
    %3112 = vmatprep.subr.mxu0 0.0
    %3113 = vmatpush1.msra.mxu0 0.0
    %3114 = vmatprep.subr.mxu0 0.0
    %3115 = vmatpush1.msra.mxu0 0.0
    %3116 = vmatprep.subr.mxu0 0.0
    %3117 = vmatpush1.msra.mxu0 0.0
    %3118 = vmatprep.subr.mxu0 0.0
    %3119 = vmatpush1.msra.mxu0 0.0
    %3120 = vmatprep.mubr.f32.mxu0 0.0
    %3121 = vmatmul.mubr.f32.gmra.mrb[0].mxu0 %v3051
    %v3122 = vpop.f32.mrb[0].mxu0
    %v3123 = vadd.f32 0.0, %v3122
    %v3124 = vpop.f32.mrb[0].mxu0
    %3125 = vmatprep.mubr.f32.mxu0 0.0
    %3126 = vmatmul.mubr.f32.gmra.mrb[0].mxu0 %v3054
    %v3127 = vpop.f32.mrb[0].mxu0
    %v3128 = vadd.f32 0.0, %v3127
    %v3129 = vpop.f32.mrb[0].mxu0
    %3130 = vdwg.mxu0
    %v3131 = vlaneseq
    %v3132 = vshrl.u32 %v3131, 7
    %v3133 = vsub.s32 0, %v3132
    %v3134 = vrot.slane %v2625, %v3133
    %v3136 = vsel %vm148, %v3123, 0
    %v3139 = vsel %vm148, %v3128, 0
    %3141 = vmatprep.subr.mxu0 0.0
    %3142 = vmatpush1.msra.mxu0 %v2621
    %3143 = vmatprep.subr.mxu0 0.0
    %3144 = vmatpush1.msra.mxu0 %v2622
    %3145 = vmatprep.subr.mxu0 0.0
    %3146 = vmatpush1.msra.mxu0 %v2623
    %3147 = vmatprep.subr.mxu0 0.0
    %3148 = vmatpush1.msra.mxu0 %v2624
    %3149 = vmatprep.subr.mxu0 0.0
    %3150 = vmatpush1.msra.mxu0 0.0
    %3151 = vmatprep.subr.mxu0 0.0
    %3152 = vmatpush1.msra.mxu0 0.0
    %3153 = vmatprep.subr.mxu0 0.0
    %3154 = vmatpush1.msra.mxu0 0.0
    %3155 = vmatprep.subr.mxu0 0.0
    %3156 = vmatpush1.msra.mxu0 0.0
    %3157 = vmatprep.subr.mxu0 0.0
    %3158 = vmatpush1.msra.mxu0 0.0
    %3159 = vmatprep.subr.mxu0 0.0
    %3160 = vmatpush1.msra.mxu0 0.0
    %3161 = vmatprep.subr.mxu0 0.0
    %3162 = vmatpush1.msra.mxu0 0.0
    %3163 = vmatprep.subr.mxu0 0.0
    %3164 = vmatpush1.msra.mxu0 0.0
    %3165 = vmatprep.subr.mxu0 0.0
    %3166 = vmatpush1.msra.mxu0 0.0
    %3167 = vmatprep.subr.mxu0 0.0
    %3168 = vmatpush1.msra.mxu0 0.0
    %3169 = vmatprep.subr.mxu0 0.0
    %3170 = vmatpush1.msra.mxu0 0.0
    %3171 = vmatprep.subr.mxu0 0.0
    %3172 = vmatpush1.msra.mxu0 0.0
    %3173 = vmatprep.subr.mxu0 0.0
    %3174 = vmatpush1.msra.mxu0 0.0
    %3175 = vmatprep.subr.mxu0 0.0
    %3176 = vmatpush1.msra.mxu0 0.0
    %3177 = vmatprep.subr.mxu0 0.0
    %3178 = vmatpush1.msra.mxu0 0.0
    %3179 = vmatprep.subr.mxu0 0.0
    %3180 = vmatpush1.msra.mxu0 0.0
    %3181 = vmatprep.subr.mxu0 0.0
    %3182 = vmatpush1.msra.mxu0 0.0
    %3183 = vmatprep.subr.mxu0 0.0
    %3184 = vmatpush1.msra.mxu0 0.0
    %3185 = vmatprep.subr.mxu0 0.0
    %3186 = vmatpush1.msra.mxu0 0.0
    %3187 = vmatprep.subr.mxu0 0.0
    %3188 = vmatpush1.msra.mxu0 0.0
    %3189 = vmatprep.subr.mxu0 0.0
    %3190 = vmatpush1.msra.mxu0 0.0
    %3191 = vmatprep.subr.mxu0 0.0
    %3192 = vmatpush1.msra.mxu0 0.0
    %3193 = vmatprep.subr.mxu0 0.0
    %3194 = vmatpush1.msra.mxu0 0.0
    %3195 = vmatprep.subr.mxu0 0.0
    %3196 = vmatpush1.msra.mxu0 0.0
    %3197 = vmatprep.subr.mxu0 0.0
    %3198 = vmatpush1.msra.mxu0 0.0
    %3199 = vmatprep.subr.mxu0 0.0
    %3200 = vmatpush1.msra.mxu0 0.0
    %3201 = vmatprep.subr.mxu0 0.0
    %3202 = vmatpush1.msra.mxu0 0.0
    %3203 = vmatprep.subr.mxu0 0.0
    %3204 = vmatpush1.msra.mxu0 0.0
    %3205 = vmatprep.mubr.f32.mxu0 0.0
    %3206 = vmatmul.mubr.f32.gmra.mrb[0].mxu0 %v3136
    %v3207 = vpop.f32.mrb[0].mxu0
    %v3208 = vadd.f32 %v3134, %v3207
    %v3209 = vpop.f32.mrb[0].mxu0
    %3210 = vmatprep.mubr.f32.mxu0 0.0
    %3211 = vmatmul.mubr.f32.gmra.mrb[0].mxu0 %v3139
    %v3212 = vpop.f32.mrb[0].mxu0
    %v3213 = vadd.f32 %v3134, %v3212
    %v3214 = vpop.f32.mrb[0].mxu0
    %3215 = vdwg.mxu0
    %v3216 = vadd.f32 %v2555, %v3208
    %v3217 = vadd.f32 %v2556, %v3213
    %v3218 = vld [vmem:[#allocation2 + $0x328] sm:$0x1]
    %v3219 = vld [vmem:[#allocation2 + $0x330] sm:$0x1]
    %v3220 = vsel %vm148, %v3216, 0.0
    %3221 = vadd.xlane.f32.xlu0 %v3220
    %v3222 = vpop.xlane.xlu0 %3221
    %v3223 = vsel %vm148, %v3217, 0.0
    %3224 = vadd.xlane.f32.xlu0 %v3223
    %v3225 = vpop.xlane.xlu0 %3224
    %v3226 = vmul.f32 %v3222, %v206
    %v3227 = vmul.f32 %v3225, %v206
    %v3228 = vsub.f32 %v3216, %v3226
    %v3229 = vsub.f32 %v3217, %v3227
    %v3230 = vmul.f32 %v3228, %v3228
    %v3231 = vmul.f32 %v3229, %v3229
    %v3232 = vsel %vm148, %v3230, 0.0
    %3233 = vadd.xlane.f32.xlu0 %v3232
    %v3234 = vpop.xlane.xlu0 %3233
    %v3235 = vsel %vm148, %v3231, 0.0
    %3236 = vadd.xlane.f32.xlu0 %v3235
    %v3237 = vpop.xlane.xlu0 %3236
    %v3238 = vmul.f32 %v3234, 0.032258064
    %v3239 = vmul.f32 %v3237, 0.032258064
    %v3240 = vrsqrt.pop %v3238
    %v3241 = vmul.f32 %v3238, %v3240
    %vm3242 = vcmp.eq.f32.partialorder %v3238, inf
    %v3243 = vsel %vm3242, %v3238, %v3241
    %vm3244 = vcmp.eq.f32.partialorder %v3238, 0.0
    %v3245 = vand.u32 %v3238, 2147483648
    %v3246 = vsel %vm3244, %v3245, %v3243
    %v3247 = vrsqrt.pop %v3239
    %v3248 = vmul.f32 %v3239, %v3247
    %vm3249 = vcmp.eq.f32.partialorder %v3239, inf
    %v3250 = vsel %vm3249, %v3239, %v3248
    %vm3251 = vcmp.eq.f32.partialorder %v3239, 0.0
    %v3252 = vand.u32 %v3239, 2147483648
    %v3253 = vsel %vm3251, %v3252, %v3250
    %v3254 = vlaneseq
    %v3255 = vshrl.u32 %v3254, 7
    %v3256 = vsub.s32 0, %v3255
    %v3257 = vrot.slane %v3218, %v3256
    %v3258 = vmul.f32 %v3257, %v3228
    %v3259 = vmul.f32 %v3257, %v3229
    %v3260 = vadd.f32 %v3246, 1e-06
    %v3261 = vadd.f32 %v3253, 1e-06
    %v3262 = vrcp.pop %v3260
    %v3263 = vmul.f32 %v3258, %v3262
    %v3264 = vrcp.pop %v3261
    %v3265 = vmul.f32 %v3259, %v3264
    %v3266 = vlaneseq
    %v3267 = vshrl.u32 %v3266, 7
    %v3268 = vsub.s32 0, %v3267
    %v3269 = vrot.slane %v3219, %v3268
    %v3270 = vadd.f32 %v3263, %v3269
    %v3271 = vadd.f32 %v3265, %v3269
    %v3272 = vld [vmem:[#allocation2 + $0x298] sm:$0xff]
    %v3273 = vld [vmem:[#allocation2 + $0x2a0] sm:$0xff]
    %v3274 = vld [vmem:[#allocation2 + $0x2a8] sm:$0xff]
    %v3275 = vld [vmem:[#allocation2 + $0x2b0] sm:$0xff]
    %v3276 = vld [vmem:[#allocation2 + $0x2b8] sm:$0x1]
    %v3277 = vld [vmem:[#allocation2 + $0x2c0] sm:$0xff]
    %v3278 = vld [vmem:[#allocation2 + $0x2c8] sm:$0xff]
    %v3279 = vld [vmem:[#allocation2 + $0x2d0] sm:$0xff]
    %v3280 = vld [vmem:[#allocation2 + $0x2d8] sm:$0xff]
    %v3281 = vld [vmem:[#allocation2 + $0x2e0] sm:$0xff]
    %v3282 = vld [vmem:[#allocation2 + $0x2e8] sm:$0xff]
    %v3283 = vld [vmem:[#allocation2 + $0x2f0] sm:$0xff]
    %v3284 = vld [vmem:[#allocation2 + $0x2f8] sm:$0xff]
    %v3285 = vld [vmem:[#allocation2 + $0x300] sm:$0x1]
    %v3286 = vlaneseq
    %v3287 = vshrl.u32 %v3286, 7
    %v3288 = vsub.s32 0, %v3287
    %v3289 = vrot.slane %v3276, %v3288
    %v3291 = vsel %vm148, %v3270, 0
    %v3294 = vsel %vm148, %v3271, 0
    %3296 = vmatprep.subr.mxu0 0.0
    %3297 = vmatpush1.msra.mxu0 %v3272
    %3298 = vmatprep.subr.mxu0 0.0
    %3299 = vmatpush1.msra.mxu0 %v3273
    %3300 = vmatprep.subr.mxu0 0.0
    %3301 = vmatpush1.msra.mxu0 %v3274
    %3302 = vmatprep.subr.mxu0 0.0
    %3303 = vmatpush1.msra.mxu0 %v3275
    %3304 = vmatprep.subr.mxu0 0.0
    %3305 = vmatpush1.msra.mxu0 0.0
    %3306 = vmatprep.subr.mxu0 0.0
    %3307 = vmatpush1.msra.mxu0 0.0
    %3308 = vmatprep.subr.mxu0 0.0
    %3309 = vmatpush1.msra.mxu0 0.0
    %3310 = vmatprep.subr.mxu0 0.0
    %3311 = vmatpush1.msra.mxu0 0.0
    %3312 = vmatprep.subr.mxu0 0.0
    %3313 = vmatpush1.msra.mxu0 0.0
    %3314 = vmatprep.subr.mxu0 0.0
    %3315 = vmatpush1.msra.mxu0 0.0
    %3316 = vmatprep.subr.mxu0 0.0
    %3317 = vmatpush1.msra.mxu0 0.0
    %3318 = vmatprep.subr.mxu0 0.0
    %3319 = vmatpush1.msra.mxu0 0.0
    %3320 = vmatprep.subr.mxu0 0.0
    %3321 = vmatpush1.msra.mxu0 0.0
    %3322 = vmatprep.subr.mxu0 0.0
    %3323 = vmatpush1.msra.mxu0 0.0
    %3324 = vmatprep.subr.mxu0 0.0
    %3325 = vmatpush1.msra.mxu0 0.0
    %3326 = vmatprep.subr.mxu0 0.0
    %3327 = vmatpush1.msra.mxu0 0.0
    %3328 = vmatprep.subr.mxu0 0.0
    %3329 = vmatpush1.msra.mxu0 0.0
    %3330 = vmatprep.subr.mxu0 0.0
    %3331 = vmatpush1.msra.mxu0 0.0
    %3332 = vmatprep.subr.mxu0 0.0
    %3333 = vmatpush1.msra.mxu0 0.0
    %3334 = vmatprep.subr.mxu0 0.0
    %3335 = vmatpush1.msra.mxu0 0.0
    %3336 = vmatprep.subr.mxu0 0.0
    %3337 = vmatpush1.msra.mxu0 0.0
    %3338 = vmatprep.subr.mxu0 0.0
    %3339 = vmatpush1.msra.mxu0 0.0
    %3340 = vmatprep.subr.mxu0 0.0
    %3341 = vmatpush1.msra.mxu0 0.0
    %3342 = vmatprep.subr.mxu0 0.0
    %3343 = vmatpush1.msra.mxu0 0.0
    %3344 = vmatprep.subr.mxu0 0.0
    %3345 = vmatpush1.msra.mxu0 0.0
    %3346 = vmatprep.subr.mxu0 0.0
    %3347 = vmatpush1.msra.mxu0 0.0
    %3348 = vmatprep.subr.mxu0 0.0
    %3349 = vmatpush1.msra.mxu0 0.0
    %3350 = vmatprep.subr.mxu0 0.0
    %3351 = vmatpush1.msra.mxu0 0.0
    %3352 = vmatprep.subr.mxu0 0.0
    %3353 = vmatpush1.msra.mxu0 0.0
    %3354 = vmatprep.subr.mxu0 0.0
    %3355 = vmatpush1.msra.mxu0 0.0
    %3356 = vmatprep.subr.mxu0 0.0
    %3357 = vmatpush1.msra.mxu0 0.0
    %3358 = vmatprep.subr.mxu0 0.0
    %3359 = vmatpush1.msra.mxu0 0.0
    %3360 = vmatprep.mubr.f32.mxu0 0.0
    %3361 = vmatmul.mubr.f32.gmra.mrb[0].mxu0 %v3291
    %v3362 = vpop.f32.mrb[0].mxu0
    %v3363 = vadd.f32 %v3289, %v3362
    %v3364 = vpop.f32.mrb[0].mxu0
    %3365 = vmatprep.mubr.f32.mxu0 0.0
    %3366 = vmatmul.mubr.f32.gmra.mrb[0].mxu0 %v3294
    %v3367 = vpop.f32.mrb[0].mxu0
    %v3368 = vadd.f32 %v3289, %v3367
    %v3369 = vpop.f32.mrb[0].mxu0
    %3370 = vdwg.mxu0
    %v3371 = vmax.f32 %v3363, 0.0
    %v3372 = vmax.f32 %v3368, 0.0
    %v3373 = vlaneseq
    %v3374 = vshrl.u32 %v3373, 7
    %v3375 = vsub.s32 0, %v3374
    %v3376 = vrot.slane %v3285, %v3375
    %v3378 = vsel %vm545, %v3371, 0
    %v3381 = vsel %vm545, %v3372, 0
    %3383 = vmatprep.subr.mxu0 0.0
    %3384 = vmatpush1.msra.mxu0 %v3277
    %3385 = vmatprep.subr.mxu0 0.0
    %3386 = vmatpush1.msra.mxu0 %v3278
    %3387 = vmatprep.subr.mxu0 0.0
    %3388 = vmatpush1.msra.mxu0 %v3279
    %3389 = vmatprep.subr.mxu0 0.0
    %3390 = vmatpush1.msra.mxu0 %v3280
    %3391 = vmatprep.subr.mxu0 0.0
    %3392 = vmatpush1.msra.mxu0 %v3281
    %3393 = vmatprep.subr.mxu0 0.0
    %3394 = vmatpush1.msra.mxu0 %v3282
    %3395 = vmatprep.subr.mxu0 0.0
    %3396 = vmatpush1.msra.mxu0 %v3283
    %3397 = vmatprep.subr.mxu0 0.0
    %3398 = vmatpush1.msra.mxu0 %v3284
    %3399 = vmatprep.subr.mxu0 0.0
    %3400 = vmatpush1.msra.mxu0 0.0
    %3401 = vmatprep.subr.mxu0 0.0
    %3402 = vmatpush1.msra.mxu0 0.0
    %3403 = vmatprep.subr.mxu0 0.0
    %3404 = vmatpush1.msra.mxu0 0.0
    %3405 = vmatprep.subr.mxu0 0.0
    %3406 = vmatpush1.msra.mxu0 0.0
    %3407 = vmatprep.subr.mxu0 0.0
    %3408 = vmatpush1.msra.mxu0 0.0
    %3409 = vmatprep.subr.mxu0 0.0
    %3410 = vmatpush1.msra.mxu0 0.0
    %3411 = vmatprep.subr.mxu0 0.0
    %3412 = vmatpush1.msra.mxu0 0.0
    %3413 = vmatprep.subr.mxu0 0.0
    %3414 = vmatpush1.msra.mxu0 0.0
    %3415 = vmatprep.subr.mxu0 0.0
    %3416 = vmatpush1.msra.mxu0 0.0
    %3417 = vmatprep.subr.mxu0 0.0
    %3418 = vmatpush1.msra.mxu0 0.0
    %3419 = vmatprep.subr.mxu0 0.0
    %3420 = vmatpush1.msra.mxu0 0.0
    %3421 = vmatprep.subr.mxu0 0.0
    %3422 = vmatpush1.msra.mxu0 0.0
    %3423 = vmatprep.subr.mxu0 0.0
    %3424 = vmatpush1.msra.mxu0 0.0
    %3425 = vmatprep.subr.mxu0 0.0
    %3426 = vmatpush1.msra.mxu0 0.0
    %3427 = vmatprep.subr.mxu0 0.0
    %3428 = vmatpush1.msra.mxu0 0.0
    %3429 = vmatprep.subr.mxu0 0.0
    %3430 = vmatpush1.msra.mxu0 0.0
    %3431 = vmatprep.subr.mxu0 0.0
    %3432 = vmatpush1.msra.mxu0 0.0
    %3433 = vmatprep.subr.mxu0 0.0
    %3434 = vmatpush1.msra.mxu0 0.0
    %3435 = vmatprep.subr.mxu0 0.0
    %3436 = vmatpush1.msra.mxu0 0.0
    %3437 = vmatprep.subr.mxu0 0.0
    %3438 = vmatpush1.msra.mxu0 0.0
    %3439 = vmatprep.subr.mxu0 0.0
    %3440 = vmatpush1.msra.mxu0 0.0
    %3441 = vmatprep.subr.mxu0 0.0
    %3442 = vmatpush1.msra.mxu0 0.0
    %3443 = vmatprep.subr.mxu0 0.0
    %3444 = vmatpush1.msra.mxu0 0.0
    %3445 = vmatprep.subr.mxu0 0.0
    %3446 = vmatpush1.msra.mxu0 0.0
    %3447 = vmatprep.mubr.f32.mxu0 0.0
    %3448 = vmatmul.mubr.f32.gmra.mrb[0].mxu0 %v3378
    %v3449 = vpop.f32.mrb[0].mxu0
    %v3450 = vadd.f32 %v3376, %v3449
    %v3451 = vpop.f32.mrb[0].mxu0
    %3452 = vmatprep.mubr.f32.mxu0 0.0
    %3453 = vmatmul.mubr.f32.gmra.mrb[0].mxu0 %v3381
    %v3454 = vpop.f32.mrb[0].mxu0
    %v3455 = vadd.f32 %v3376, %v3454
    %v3456 = vpop.f32.mrb[0].mxu0
    %3457 = vdwg.mxu0
    %v3458 = vadd.f32 %v3216, %v3450
    %v3459 = vadd.f32 %v3217, %v3455
    %v3460 = vld [vmem:[#allocation2 + $0x470] sm:$0x1]
    %v3461 = vld [vmem:[#allocation2 + $0x478] sm:$0x1]
    %v3462 = vsel %vm148, %v3458, 0.0
    %3463 = vadd.xlane.f32.xlu0 %v3462
    %v3464 = vpop.xlane.xlu0 %3463
    %v3465 = vsel %vm148, %v3459, 0.0
    %3466 = vadd.xlane.f32.xlu0 %v3465
    %v3467 = vpop.xlane.xlu0 %3466
    %v3468 = vmul.f32 %v3464, %v206
    %v3469 = vmul.f32 %v3467, %v206
    %v3470 = vsub.f32 %v3458, %v3468
    %v3471 = vsub.f32 %v3459, %v3469
    %v3472 = vmul.f32 %v3470, %v3470
    %v3473 = vmul.f32 %v3471, %v3471
    %v3474 = vsel %vm148, %v3472, 0.0
    %3475 = vadd.xlane.f32.xlu0 %v3474
    %v3476 = vpop.xlane.xlu0 %3475
    %v3477 = vsel %vm148, %v3473, 0.0
    %3478 = vadd.xlane.f32.xlu0 %v3477
    %v3479 = vpop.xlane.xlu0 %3478
    %v3480 = vmul.f32 %v3476, 0.032258064
    %v3481 = vmul.f32 %v3479, 0.032258064
    %v3482 = vrsqrt.pop %v3480
    %v3483 = vmul.f32 %v3480, %v3482
    %vm3484 = vcmp.eq.f32.partialorder %v3480, inf
    %v3485 = vsel %vm3484, %v3480, %v3483
    %vm3486 = vcmp.eq.f32.partialorder %v3480, 0.0
    %v3487 = vand.u32 %v3480, 2147483648
    %v3488 = vsel %vm3486, %v3487, %v3485
    %v3489 = vrsqrt.pop %v3481
    %v3490 = vmul.f32 %v3481, %v3489
    %vm3491 = vcmp.eq.f32.partialorder %v3481, inf
    %v3492 = vsel %vm3491, %v3481, %v3490
    %vm3493 = vcmp.eq.f32.partialorder %v3481, 0.0
    %v3494 = vand.u32 %v3481, 2147483648
    %v3495 = vsel %vm3493, %v3494, %v3492
    %v3496 = vlaneseq
    %v3497 = vshrl.u32 %v3496, 7
    %v3498 = vsub.s32 0, %v3497
    %v3499 = vrot.slane %v3460, %v3498
    %v3500 = vmul.f32 %v3499, %v3470
    %v3501 = vmul.f32 %v3499, %v3471
    %v3502 = vadd.f32 %v3488, 1e-06
    %v3503 = vadd.f32 %v3495, 1e-06
    %v3504 = vrcp.pop %v3502
    %v3505 = vmul.f32 %v3500, %v3504
    %v3506 = vrcp.pop %v3503
    %v3507 = vmul.f32 %v3501, %v3506
    %v3508 = vlaneseq
    %v3509 = vshrl.u32 %v3508, 7
    %v3510 = vsub.s32 0, %v3509
    %v3511 = vrot.slane %v3461, %v3510
    %v3512 = vadd.f32 %v3505, %v3511
    %v3513 = vadd.f32 %v3507, %v3511
    %v3514 = vld [vmem:[#allocation2 + $0x338] sm:$0xff]
    %v3515 = vld [vmem:[#allocation2 + $0x340] sm:$0xff]
    %v3516 = vld [vmem:[#allocation2 + $0x348] sm:$0xff]
    %v3517 = vld [vmem:[#allocation2 + $0x350] sm:$0xff]
    %v3518 = vld [vmem:[#allocation2 + $0x358] sm:$0x1]
    %v3519 = vld [vmem:[#allocation2 + $0x360] sm:$0xff]
    %v3520 = vld [vmem:[#allocation2 + $0x368] sm:$0xff]
    %v3521 = vld [vmem:[#allocation2 + $0x370] sm:$0xff]
    %v3522 = vld [vmem:[#allocation2 + $0x378] sm:$0xff]
    %v3523 = vld [vmem:[#allocation2 + $0x380] sm:$0x1]
    %v3524 = vlaneseq
    %v3525 = vshrl.u32 %v3524, 7
    %v3526 = vsub.s32 0, %v3525
    %v3527 = vrot.slane %v3518, %v3526
    %v3529 = vsel %vm148, %v3512, 0
    %v3532 = vsel %vm148, %v3513, 0
    %3534 = vmatprep.subr.mxu0 0.0
    %3535 = vmatpush1.msra.mxu0 %v3514
    %3536 = vmatprep.subr.mxu0 0.0
    %3537 = vmatpush1.msra.mxu0 %v3515
    %3538 = vmatprep.subr.mxu0 0.0
    %3539 = vmatpush1.msra.mxu0 %v3516
    %3540 = vmatprep.subr.mxu0 0.0
    %3541 = vmatpush1.msra.mxu0 %v3517
    %3542 = vmatprep.subr.mxu0 0.0
    %3543 = vmatpush1.msra.mxu0 0.0
    %3544 = vmatprep.subr.mxu0 0.0
    %3545 = vmatpush1.msra.mxu0 0.0
    %3546 = vmatprep.subr.mxu0 0.0
    %3547 = vmatpush1.msra.mxu0 0.0
    %3548 = vmatprep.subr.mxu0 0.0
    %3549 = vmatpush1.msra.mxu0 0.0
    %3550 = vmatprep.subr.mxu0 0.0
    %3551 = vmatpush1.msra.mxu0 0.0
    %3552 = vmatprep.subr.mxu0 0.0
    %3553 = vmatpush1.msra.mxu0 0.0
    %3554 = vmatprep.subr.mxu0 0.0
    %3555 = vmatpush1.msra.mxu0 0.0
    %3556 = vmatprep.subr.mxu0 0.0
    %3557 = vmatpush1.msra.mxu0 0.0
    %3558 = vmatprep.subr.mxu0 0.0
    %3559 = vmatpush1.msra.mxu0 0.0
    %3560 = vmatprep.subr.mxu0 0.0
    %3561 = vmatpush1.msra.mxu0 0.0
    %3562 = vmatprep.subr.mxu0 0.0
    %3563 = vmatpush1.msra.mxu0 0.0
    %3564 = vmatprep.subr.mxu0 0.0
    %3565 = vmatpush1.msra.mxu0 0.0
    %3566 = vmatprep.subr.mxu0 0.0
    %3567 = vmatpush1.msra.mxu0 0.0
    %3568 = vmatprep.subr.mxu0 0.0
    %3569 = vmatpush1.msra.mxu0 0.0
    %3570 = vmatprep.subr.mxu0 0.0
    %3571 = vmatpush1.msra.mxu0 0.0
    %3572 = vmatprep.subr.mxu0 0.0
    %3573 = vmatpush1.msra.mxu0 0.0
    %3574 = vmatprep.subr.mxu0 0.0
    %3575 = vmatpush1.msra.mxu0 0.0
    %3576 = vmatprep.subr.mxu0 0.0
    %3577 = vmatpush1.msra.mxu0 0.0
    %3578 = vmatprep.subr.mxu0 0.0
    %3579 = vmatpush1.msra.mxu0 0.0
    %3580 = vmatprep.subr.mxu0 0.0
    %3581 = vmatpush1.msra.mxu0 0.0
    %3582 = vmatprep.subr.mxu0 0.0
    %3583 = vmatpush1.msra.mxu0 0.0
    %3584 = vmatprep.subr.mxu0 0.0
    %3585 = vmatpush1.msra.mxu0 0.0
    %3586 = vmatprep.subr.mxu0 0.0
    %3587 = vmatpush1.msra.mxu0 0.0
    %3588 = vmatprep.subr.mxu0 0.0
    %3589 = vmatpush1.msra.mxu0 0.0
    %3590 = vmatprep.subr.mxu0 0.0
    %3591 = vmatpush1.msra.mxu0 0.0
    %3592 = vmatprep.subr.mxu0 0.0
    %3593 = vmatpush1.msra.mxu0 0.0
    %3594 = vmatprep.subr.mxu0 0.0
    %3595 = vmatpush1.msra.mxu0 0.0
    %3596 = vmatprep.subr.mxu0 0.0
    %3597 = vmatpush1.msra.mxu0 0.0
    %3598 = vmatprep.mubr.f32.mxu0 0.0
    %3599 = vmatmul.mubr.f32.gmra.mrb[0].mxu0 %v3529
    %v3600 = vpop.f32.mrb[0].mxu0
    %v3601 = vadd.f32 %v3527, %v3600
    %v3602 = vpop.f32.mrb[0].mxu0
    %3603 = vmatprep.mubr.f32.mxu0 0.0
    %3604 = vmatmul.mubr.f32.gmra.mrb[0].mxu0 %v3532
    %v3605 = vpop.f32.mrb[0].mxu0
    %v3606 = vadd.f32 %v3527, %v3605
    %v3607 = vpop.f32.mrb[0].mxu0
    %3608 = vdwg.mxu0
    %v3609 = vmul.f32 %v3601, %v357
    %v3610 = vmul.f32 %v3606, %v359
    %v3611 = vmul.f32 %v3601, %v361
    %v3612 = vmul.f32 %v3606, %v363
    %v3613 = vmul.f32 %v3601, %v365
    %v3614 = vmul.f32 %v3606, %v367
    %v3615 = vmul.f32 %v3601, %v369
    %v3616 = vmul.f32 %v3606, %v371
    %v3617 = vmul.f32 %v3601, %v389
    %v3618 = vmul.f32 %v3606, %v391
    %v3619 = vmul.f32 %v3601, %v393
    %v3620 = vmul.f32 %v3606, %v395
    %v3621 = vmul.f32 %v3601, %v397
    %v3622 = vmul.f32 %v3606, %v399
    %v3623 = vmul.f32 %v3601, %v401
    %v3624 = vmul.f32 %v3606, %v403
    %3633 = vrot.lane.b32.xlu0 %v3609, 96
    %v3634 = vpop.permute.xlu0 %3633
    %3635 = vrot.lane.b32.xlu0 %v3610, 96
    %v3636 = vpop.permute.xlu0 %3635
    %3637 = vrot.lane.b32.xlu0 %v3611, 96
    %v3638 = vpop.permute.xlu0 %3637
    %3639 = vrot.lane.b32.xlu0 %v3612, 96
    %v3640 = vpop.permute.xlu0 %3639
    %3641 = vrot.lane.b32.xlu0 %v3613, 96
    %v3642 = vpop.permute.xlu0 %3641
    %3643 = vrot.lane.b32.xlu0 %v3614, 96
    %v3644 = vpop.permute.xlu0 %3643
    %3645 = vrot.lane.b32.xlu0 %v3615, 96
    %v3646 = vpop.permute.xlu0 %3645
    %3647 = vrot.lane.b32.xlu0 %v3616, 96
    %v3648 = vpop.permute.xlu0 %3647
    %v3650 = vsel %vm148, %v3601, 0
    %v3653 = vsel %vm148, %v3606, 0
    %v3655 = vsel %vm148, %v3634, 0
    %v3657 = vsel %vm148, %v3636, 0
    %v3659 = vsel %vm148, %v3638, 0
    %v3661 = vsel %vm148, %v3640, 0
    %v3663 = vsel %vm148, %v3642, 0
    %v3665 = vsel %vm148, %v3644, 0
    %v3667 = vsel %vm148, %v3646, 0
    %v3669 = vsel %vm148, %v3648, 0
    %3671 = vmatprep.subr.mxu0 0.0
    %3672 = vmatpush1.xpose.msra.mxu0 %v3655
    %3673 = vmatprep.subr.mxu0 0.0
    %3674 = vmatpush1.xpose.msra.mxu0 %v3657
    %3675 = vmatprep.subr.mxu0 0.0
    %3676 = vmatpush1.xpose.msra.mxu0 %v3659
    %3677 = vmatprep.subr.mxu0 0.0
    %3678 = vmatpush1.xpose.msra.mxu0 %v3661
    %3679 = vmatprep.subr.mxu0 0.0
    %3680 = vmatpush1.xpose.msra.mxu0 %v3663
    %3681 = vmatprep.subr.mxu0 0.0
    %3682 = vmatpush1.xpose.msra.mxu0 %v3665
    %3683 = vmatprep.subr.mxu0 0.0
    %3684 = vmatpush1.xpose.msra.mxu0 %v3667
    %3685 = vmatprep.subr.mxu0 0.0
    %3686 = vmatpush1.xpose.msra.mxu0 %v3669
    %3687 = vmatprep.subr.mxu0 0.0
    %3688 = vmatpush1.xpose.msra.mxu0 0.0
    %3689 = vmatprep.subr.mxu0 0.0
    %3690 = vmatpush1.xpose.msra.mxu0 0.0
    %3691 = vmatprep.subr.mxu0 0.0
    %3692 = vmatpush1.xpose.msra.mxu0 0.0
    %3693 = vmatprep.subr.mxu0 0.0
    %3694 = vmatpush1.xpose.msra.mxu0 0.0
    %3695 = vmatprep.subr.mxu0 0.0
    %3696 = vmatpush1.xpose.msra.mxu0 0.0
    %3697 = vmatprep.subr.mxu0 0.0
    %3698 = vmatpush1.xpose.msra.mxu0 0.0
    %3699 = vmatprep.subr.mxu0 0.0
    %3700 = vmatpush1.xpose.msra.mxu0 0.0
    %3701 = vmatprep.subr.mxu0 0.0
    %3702 = vmatpush1.xpose.msra.mxu0 0.0
    %3703 = vmatprep.subr.mxu0 0.0
    %3704 = vmatpush1.xpose.msra.mxu0 0.0
    %3705 = vmatprep.subr.mxu0 0.0
    %3706 = vmatpush1.xpose.msra.mxu0 0.0
    %3707 = vmatprep.subr.mxu0 0.0
    %3708 = vmatpush1.xpose.msra.mxu0 0.0
    %3709 = vmatprep.subr.mxu0 0.0
    %3710 = vmatpush1.xpose.msra.mxu0 0.0
    %3711 = vmatprep.subr.mxu0 0.0
    %3712 = vmatpush1.xpose.msra.mxu0 0.0
    %3713 = vmatprep.subr.mxu0 0.0
    %3714 = vmatpush1.xpose.msra.mxu0 0.0
    %3715 = vmatprep.subr.mxu0 0.0
    %3716 = vmatpush1.xpose.msra.mxu0 0.0
    %3717 = vmatprep.subr.mxu0 0.0
    %3718 = vmatpush1.xpose.msra.mxu0 0.0
    %3719 = vmatprep.subr.mxu0 0.0
    %3720 = vmatpush1.xpose.msra.mxu0 0.0
    %3721 = vmatprep.subr.mxu0 0.0
    %3722 = vmatpush1.xpose.msra.mxu0 0.0
    %3723 = vmatprep.subr.mxu0 0.0
    %3724 = vmatpush1.xpose.msra.mxu0 0.0
    %3725 = vmatprep.subr.mxu0 0.0
    %3726 = vmatpush1.xpose.msra.mxu0 0.0
    %3727 = vmatprep.subr.mxu0 0.0
    %3728 = vmatpush1.xpose.msra.mxu0 0.0
    %3729 = vmatprep.subr.mxu0 0.0
    %3730 = vmatpush1.xpose.msra.mxu0 0.0
    %3731 = vmatprep.subr.mxu0 0.0
    %3732 = vmatpush1.xpose.msra.mxu0 0.0
    %3733 = vmatprep.subr.mxu0 0.0
    %3734 = vmatpush1.xpose.msra.mxu0 0.0
    %3735 = vmatprep.mubr.f32.mxu0 0.0
    %3736 = vmatmul.mubr.f32.gmra.mrb[0].mxu0 %v3650
    %v3737 = vpop.f32.mrb[0].mxu0
    %v3738 = vadd.f32 0.0, %v3737
    %v3739 = vpop.f32.mrb[0].mxu0
    %3740 = vmatprep.mubr.f32.mxu0 0.0
    %3741 = vmatmul.mubr.f32.gmra.mrb[0].mxu0 %v3653
    %v3742 = vpop.f32.mrb[0].mxu0
    %v3743 = vadd.f32 0.0, %v3742
    %v3744 = vpop.f32.mrb[0].mxu0
    %3745 = vdwg.mxu0
    %v3746 = vmul.f32 %v3738, 0.35355338
    %v3747 = vmul.f32 %v3743, 0.35355338
    %v3748 = vadd.f32 %v3746, %v194
    %v3749 = vadd.f32 %v3747, %v195
    %v3750 = vsel %vm545, %v3748, -inf
    %3751 = vmax.xlane.f32.xlu0 %v3750
    %v3752 = vpop.xlane.xlu0 %3751
    %v3753 = vsel %vm545, %v3749, -inf
    %3754 = vmax.xlane.f32.xlu0 %v3753
    %v3755 = vpop.xlane.xlu0 %3754
    %v3756 = vsub.f32 %v3748, %v3752
    %v3757 = vsub.f32 %v3749, %v3755
    %v3758 = vmul.f32 %v3756, 1.442695
    %v3759 = vpow.pop %v3758
    %v3760 = vmul.f32 %v3757, 1.442695
    %v3761 = vpow.pop %v3760
    %v3763 = vsel %vm545, %v3759, 0
    %v3766 = vsel %vm545, %v3761, 0
    %3768 = vmatprep.subr.mxu0 0.0
    %3769 = vmatpush1.msra.mxu0 %v84
    %3770 = vmatprep.subr.mxu0 0.0
    %3771 = vmatpush1.msra.mxu0 %v85
    %3772 = vmatprep.subr.mxu0 0.0
    %3773 = vmatpush1.msra.mxu0 %v86
    %3774 = vmatprep.subr.mxu0 0.0
    %3775 = vmatpush1.msra.mxu0 %v87
    %3776 = vmatprep.subr.mxu0 0.0
    %3777 = vmatpush1.msra.mxu0 %v88
    %3778 = vmatprep.subr.mxu0 0.0
    %3779 = vmatpush1.msra.mxu0 %v89
    %3780 = vmatprep.subr.mxu0 0.0
    %3781 = vmatpush1.msra.mxu0 %v90
    %3782 = vmatprep.subr.mxu0 0.0
    %3783 = vmatpush1.msra.mxu0 %v91
    %3784 = vmatprep.subr.mxu0 0.0
    %3785 = vmatpush1.msra.mxu0 0.0
    %3786 = vmatprep.subr.mxu0 0.0
    %3787 = vmatpush1.msra.mxu0 0.0
    %3788 = vmatprep.subr.mxu0 0.0
    %3789 = vmatpush1.msra.mxu0 0.0
    %3790 = vmatprep.subr.mxu0 0.0
    %3791 = vmatpush1.msra.mxu0 0.0
    %3792 = vmatprep.subr.mxu0 0.0
    %3793 = vmatpush1.msra.mxu0 0.0
    %3794 = vmatprep.subr.mxu0 0.0
    %3795 = vmatpush1.msra.mxu0 0.0
    %3796 = vmatprep.subr.mxu0 0.0
    %3797 = vmatpush1.msra.mxu0 0.0
    %3798 = vmatprep.subr.mxu0 0.0
    %3799 = vmatpush1.msra.mxu0 0.0
    %3800 = vmatprep.subr.mxu0 0.0
    %3801 = vmatpush1.msra.mxu0 0.0
    %3802 = vmatprep.subr.mxu0 0.0
    %3803 = vmatpush1.msra.mxu0 0.0
    %3804 = vmatprep.subr.mxu0 0.0
    %3805 = vmatpush1.msra.mxu0 0.0
    %3806 = vmatprep.subr.mxu0 0.0
    %3807 = vmatpush1.msra.mxu0 0.0
    %3808 = vmatprep.subr.mxu0 0.0
    %3809 = vmatpush1.msra.mxu0 0.0
    %3810 = vmatprep.subr.mxu0 0.0
    %3811 = vmatpush1.msra.mxu0 0.0
    %3812 = vmatprep.subr.mxu0 0.0
    %3813 = vmatpush1.msra.mxu0 0.0
    %3814 = vmatprep.subr.mxu0 0.0
    %3815 = vmatpush1.msra.mxu0 0.0
    %3816 = vmatprep.subr.mxu0 0.0
    %3817 = vmatpush1.msra.mxu0 0.0
    %3818 = vmatprep.subr.mxu0 0.0
    %3819 = vmatpush1.msra.mxu0 0.0
    %3820 = vmatprep.subr.mxu0 0.0
    %3821 = vmatpush1.msra.mxu0 0.0
    %3822 = vmatprep.subr.mxu0 0.0
    %3823 = vmatpush1.msra.mxu0 0.0
    %3824 = vmatprep.subr.mxu0 0.0
    %3825 = vmatpush1.msra.mxu0 0.0
    %3826 = vmatprep.subr.mxu0 0.0
    %3827 = vmatpush1.msra.mxu0 0.0
    %3828 = vmatprep.subr.mxu0 0.0
    %3829 = vmatpush1.msra.mxu0 0.0
    %3830 = vmatprep.subr.mxu0 0.0
    %3831 = vmatpush1.msra.mxu0 0.0
    %3832 = vmatprep.mubr.f32.mxu0 0.0
    %3833 = vmatmul.mubr.f32.gmra.mrb[0].mxu0 %v3763
    %v3834 = vpop.f32.mrb[0].mxu0
    %v3835 = vadd.f32 0.0, %v3834
    %v3836 = vpop.f32.mrb[0].mxu0
    %3837 = vmatprep.mubr.f32.mxu0 0.0
    %3838 = vmatmul.mubr.f32.gmra.mrb[0].mxu0 %v3766
    %v3839 = vpop.f32.mrb[0].mxu0
    %v3840 = vadd.f32 0.0, %v3839
    %v3841 = vpop.f32.mrb[0].mxu0
    %3842 = vdwg.mxu0
    %v3843 = vrcp.pop %v3835
    %v3844 = vrcp.pop %v3840
    %v3845 = vmul.f32 %v3759, %v3843
    %v3846 = vmul.f32 %v3761, %v3844
    %3855 = vrot.lane.b32.xlu0 %v3617, 64
    %v3856 = vpop.permute.xlu0 %3855
    %3857 = vrot.lane.b32.xlu0 %v3618, 64
    %v3858 = vpop.permute.xlu0 %3857
    %3859 = vrot.lane.b32.xlu0 %v3619, 64
    %v3860 = vpop.permute.xlu0 %3859
    %3861 = vrot.lane.b32.xlu0 %v3620, 64
    %v3862 = vpop.permute.xlu0 %3861
    %3863 = vrot.lane.b32.xlu0 %v3621, 64
    %v3864 = vpop.permute.xlu0 %3863
    %3865 = vrot.lane.b32.xlu0 %v3622, 64
    %v3866 = vpop.permute.xlu0 %3865
    %3867 = vrot.lane.b32.xlu0 %v3623, 64
    %v3868 = vpop.permute.xlu0 %3867
    %3869 = vrot.lane.b32.xlu0 %v3624, 64
    %v3870 = vpop.permute.xlu0 %3869
    %v3880 = vsel %vm545, %v3845, 0
    %v3883 = vsel %vm545, %v3846, 0
    %3885 = vmatprep.subr.mxu0 0.0
    %3886 = vmatpush1.msra.mxu0 %v3856
    %3887 = vmatprep.subr.mxu0 0.0
    %3888 = vmatpush1.msra.mxu0 %v3858
    %3889 = vmatprep.subr.mxu0 0.0
    %3890 = vmatpush1.msra.mxu0 %v3860
    %3891 = vmatprep.subr.mxu0 0.0
    %3892 = vmatpush1.msra.mxu0 %v3862
    %3893 = vmatprep.subr.mxu0 0.0
    %3894 = vmatpush1.msra.mxu0 %v3864
    %3895 = vmatprep.subr.mxu0 0.0
    %3896 = vmatpush1.msra.mxu0 %v3866
    %3897 = vmatprep.subr.mxu0 0.0
    %3898 = vmatpush1.msra.mxu0 %v3868
    %3899 = vmatprep.subr.mxu0 0.0
    %3900 = vmatpush1.msra.mxu0 %v3870
    %3901 = vmatprep.subr.mxu0 0.0
    %3902 = vmatpush1.msra.mxu0 0.0
    %3903 = vmatprep.subr.mxu0 0.0
    %3904 = vmatpush1.msra.mxu0 0.0
    %3905 = vmatprep.subr.mxu0 0.0
    %3906 = vmatpush1.msra.mxu0 0.0
    %3907 = vmatprep.subr.mxu0 0.0
    %3908 = vmatpush1.msra.mxu0 0.0
    %3909 = vmatprep.subr.mxu0 0.0
    %3910 = vmatpush1.msra.mxu0 0.0
    %3911 = vmatprep.subr.mxu0 0.0
    %3912 = vmatpush1.msra.mxu0 0.0
    %3913 = vmatprep.subr.mxu0 0.0
    %3914 = vmatpush1.msra.mxu0 0.0
    %3915 = vmatprep.subr.mxu0 0.0
    %3916 = vmatpush1.msra.mxu0 0.0
    %3917 = vmatprep.subr.mxu0 0.0
    %3918 = vmatpush1.msra.mxu0 0.0
    %3919 = vmatprep.subr.mxu0 0.0
    %3920 = vmatpush1.msra.mxu0 0.0
    %3921 = vmatprep.subr.mxu0 0.0
    %3922 = vmatpush1.msra.mxu0 0.0
    %3923 = vmatprep.subr.mxu0 0.0
    %3924 = vmatpush1.msra.mxu0 0.0
    %3925 = vmatprep.subr.mxu0 0.0
    %3926 = vmatpush1.msra.mxu0 0.0
    %3927 = vmatprep.subr.mxu0 0.0
    %3928 = vmatpush1.msra.mxu0 0.0
    %3929 = vmatprep.subr.mxu0 0.0
    %3930 = vmatpush1.msra.mxu0 0.0
    %3931 = vmatprep.subr.mxu0 0.0
    %3932 = vmatpush1.msra.mxu0 0.0
    %3933 = vmatprep.subr.mxu0 0.0
    %3934 = vmatpush1.msra.mxu0 0.0
    %3935 = vmatprep.subr.mxu0 0.0
    %3936 = vmatpush1.msra.mxu0 0.0
    %3937 = vmatprep.subr.mxu0 0.0
    %3938 = vmatpush1.msra.mxu0 0.0
    %3939 = vmatprep.subr.mxu0 0.0
    %3940 = vmatpush1.msra.mxu0 0.0
    %3941 = vmatprep.subr.mxu0 0.0
    %3942 = vmatpush1.msra.mxu0 0.0
    %3943 = vmatprep.subr.mxu0 0.0
    %3944 = vmatpush1.msra.mxu0 0.0
    %3945 = vmatprep.subr.mxu0 0.0
    %3946 = vmatpush1.msra.mxu0 0.0
    %3947 = vmatprep.subr.mxu0 0.0
    %3948 = vmatpush1.msra.mxu0 0.0
    %3949 = vmatprep.mubr.f32.mxu0 0.0
    %3950 = vmatmul.mubr.f32.gmra.mrb[0].mxu0 %v3880
    %v3951 = vpop.f32.mrb[0].mxu0
    %v3952 = vadd.f32 0.0, %v3951
    %v3953 = vpop.f32.mrb[0].mxu0
    %3954 = vmatprep.mubr.f32.mxu0 0.0
    %3955 = vmatmul.mubr.f32.gmra.mrb[0].mxu0 %v3883
    %v3956 = vpop.f32.mrb[0].mxu0
    %v3957 = vadd.f32 0.0, %v3956
    %v3958 = vpop.f32.mrb[0].mxu0
    %3959 = vdwg.mxu0
    %v3960 = vlaneseq
    %v3961 = vshrl.u32 %v3960, 7
    %v3962 = vsub.s32 0, %v3961
    %v3963 = vrot.slane %v3523, %v3962
    %v3965 = vsel %vm148, %v3952, 0
    %v3968 = vsel %vm148, %v3957, 0
    %3970 = vmatprep.subr.mxu0 0.0
    %3971 = vmatpush1.msra.mxu0 %v3519
    %3972 = vmatprep.subr.mxu0 0.0
    %3973 = vmatpush1.msra.mxu0 %v3520
    %3974 = vmatprep.subr.mxu0 0.0
    %3975 = vmatpush1.msra.mxu0 %v3521
    %3976 = vmatprep.subr.mxu0 0.0
    %3977 = vmatpush1.msra.mxu0 %v3522
    %3978 = vmatprep.subr.mxu0 0.0
    %3979 = vmatpush1.msra.mxu0 0.0
    %3980 = vmatprep.subr.mxu0 0.0
    %3981 = vmatpush1.msra.mxu0 0.0
    %3982 = vmatprep.subr.mxu0 0.0
    %3983 = vmatpush1.msra.mxu0 0.0
    %3984 = vmatprep.subr.mxu0 0.0
    %3985 = vmatpush1.msra.mxu0 0.0
    %3986 = vmatprep.subr.mxu0 0.0
    %3987 = vmatpush1.msra.mxu0 0.0
    %3988 = vmatprep.subr.mxu0 0.0
    %3989 = vmatpush1.msra.mxu0 0.0
    %3990 = vmatprep.subr.mxu0 0.0
    %3991 = vmatpush1.msra.mxu0 0.0
    %3992 = vmatprep.subr.mxu0 0.0
    %3993 = vmatpush1.msra.mxu0 0.0
    %3994 = vmatprep.subr.mxu0 0.0
    %3995 = vmatpush1.msra.mxu0 0.0
    %3996 = vmatprep.subr.mxu0 0.0
    %3997 = vmatpush1.msra.mxu0 0.0
    %3998 = vmatprep.subr.mxu0 0.0
    %3999 = vmatpush1.msra.mxu0 0.0
    %4000 = vmatprep.subr.mxu0 0.0
    %4001 = vmatpush1.msra.mxu0 0.0
    %4002 = vmatprep.subr.mxu0 0.0
    %4003 = vmatpush1.msra.mxu0 0.0
    %4004 = vmatprep.subr.mxu0 0.0
    %4005 = vmatpush1.msra.mxu0 0.0
    %4006 = vmatprep.subr.mxu0 0.0
    %4007 = vmatpush1.msra.mxu0 0.0
    %4008 = vmatprep.subr.mxu0 0.0
    %4009 = vmatpush1.msra.mxu0 0.0
    %4010 = vmatprep.subr.mxu0 0.0
    %4011 = vmatpush1.msra.mxu0 0.0
    %4012 = vmatprep.subr.mxu0 0.0
    %4013 = vmatpush1.msra.mxu0 0.0
    %4014 = vmatprep.subr.mxu0 0.0
    %4015 = vmatpush1.msra.mxu0 0.0
    %4016 = vmatprep.subr.mxu0 0.0
    %4017 = vmatpush1.msra.mxu0 0.0
    %4018 = vmatprep.subr.mxu0 0.0
    %4019 = vmatpush1.msra.mxu0 0.0
    %4020 = vmatprep.subr.mxu0 0.0
    %4021 = vmatpush1.msra.mxu0 0.0
    %4022 = vmatprep.subr.mxu0 0.0
    %4023 = vmatpush1.msra.mxu0 0.0
    %4024 = vmatprep.subr.mxu0 0.0
    %4025 = vmatpush1.msra.mxu0 0.0
    %4026 = vmatprep.subr.mxu0 0.0
    %4027 = vmatpush1.msra.mxu0 0.0
    %4028 = vmatprep.subr.mxu0 0.0
    %4029 = vmatpush1.msra.mxu0 0.0
    %4030 = vmatprep.subr.mxu0 0.0
    %4031 = vmatpush1.msra.mxu0 0.0
    %4032 = vmatprep.subr.mxu0 0.0
    %4033 = vmatpush1.msra.mxu0 0.0
    %4034 = vmatprep.mubr.f32.mxu0 0.0
    %4035 = vmatmul.mubr.f32.gmra.mrb[0].mxu0 %v3965
    %v4036 = vpop.f32.mrb[0].mxu0
    %v4037 = vadd.f32 %v3963, %v4036
    %v4038 = vpop.f32.mrb[0].mxu0
    %4039 = vmatprep.mubr.f32.mxu0 0.0
    %4040 = vmatmul.mubr.f32.gmra.mrb[0].mxu0 %v3968
    %v4041 = vpop.f32.mrb[0].mxu0
    %v4042 = vadd.f32 %v3963, %v4041
    %v4043 = vpop.f32.mrb[0].mxu0
    %4044 = vdwg.mxu0
    %v4045 = vadd.f32 %v3458, %v4037
    %v4046 = vadd.f32 %v3459, %v4042
    %v4047 = vld [vmem:[#allocation2 + $0x480] sm:$0x1]
    %v4048 = vld [vmem:[#allocation2 + $0x488] sm:$0x1]
    %v4049 = vsel %vm148, %v4045, 0.0
    %4050 = vadd.xlane.f32.xlu0 %v4049
    %v4051 = vpop.xlane.xlu0 %4050
    %v4052 = vsel %vm148, %v4046, 0.0
    %4053 = vadd.xlane.f32.xlu0 %v4052
    %v4054 = vpop.xlane.xlu0 %4053
    %v4055 = vmul.f32 %v4051, %v206
    %v4056 = vmul.f32 %v4054, %v206
    %v4057 = vsub.f32 %v4045, %v4055
    %v4058 = vsub.f32 %v4046, %v4056
    %v4059 = vmul.f32 %v4057, %v4057
    %v4060 = vmul.f32 %v4058, %v4058
    %v4061 = vsel %vm148, %v4059, 0.0
    %4062 = vadd.xlane.f32.xlu0 %v4061
    %v4063 = vpop.xlane.xlu0 %4062
    %v4064 = vsel %vm148, %v4060, 0.0
    %4065 = vadd.xlane.f32.xlu0 %v4064
    %v4066 = vpop.xlane.xlu0 %4065
    %v4067 = vmul.f32 %v4063, 0.032258064
    %v4068 = vmul.f32 %v4066, 0.032258064
    %v4069 = vrsqrt.pop %v4067
    %v4070 = vmul.f32 %v4067, %v4069
    %vm4071 = vcmp.eq.f32.partialorder %v4067, inf
    %v4072 = vsel %vm4071, %v4067, %v4070
    %vm4073 = vcmp.eq.f32.partialorder %v4067, 0.0
    %v4074 = vand.u32 %v4067, 2147483648
    %v4075 = vsel %vm4073, %v4074, %v4072
    %v4076 = vrsqrt.pop %v4068
    %v4077 = vmul.f32 %v4068, %v4076
    %vm4078 = vcmp.eq.f32.partialorder %v4068, inf
    %v4079 = vsel %vm4078, %v4068, %v4077
    %vm4080 = vcmp.eq.f32.partialorder %v4068, 0.0
    %v4081 = vand.u32 %v4068, 2147483648
    %v4082 = vsel %vm4080, %v4081, %v4079
    %v4083 = vlaneseq
    %v4084 = vshrl.u32 %v4083, 7
    %v4085 = vsub.s32 0, %v4084
    %v4086 = vrot.slane %v4047, %v4085
    %v4087 = vmul.f32 %v4086, %v4057
    %v4088 = vmul.f32 %v4086, %v4058
    %v4089 = vadd.f32 %v4075, 1e-06
    %v4090 = vadd.f32 %v4082, 1e-06
    %v4091 = vrcp.pop %v4089
    %v4092 = vmul.f32 %v4087, %v4091
    %v4093 = vrcp.pop %v4090
    %v4094 = vmul.f32 %v4088, %v4093
    %v4095 = vlaneseq
    %v4096 = vshrl.u32 %v4095, 7
    %v4097 = vsub.s32 0, %v4096
    %v4098 = vrot.slane %v4048, %v4097
    %v4099 = vadd.f32 %v4092, %v4098
    %v4100 = vadd.f32 %v4094, %v4098
    %v4101 = vld [vmem:[#allocation2 + $0x388] sm:$0xff]
    %v4102 = vld [vmem:[#allocation2 + $0x390] sm:$0xff]
    %v4103 = vld [vmem:[#allocation2 + $0x398] sm:$0xff]
    %v4104 = vld [vmem:[#allocation2 + $0x3a0] sm:$0xff]
    %v4105 = vld [vmem:[#allocation2 + $0x3a8] sm:$0x1]
    %v4106 = vld [vmem:[#allocation2 + $0x3b0] sm:$0xff]
    %v4107 = vld [vmem:[#allocation2 + $0x3b8] sm:$0xff]
    %v4108 = vld [vmem:[#allocation2 + $0x3c0] sm:$0xff]
    %v4109 = vld [vmem:[#allocation2 + $0x3c8] sm:$0xff]
    %v4110 = vld [vmem:[#allocation2 + $0x3d0] sm:$0x1]
    %v4111 = vld [vmem:[#allocation2 + $0x3d8] sm:$0xff]
    %v4112 = vld [vmem:[#allocation2 + $0x3e0] sm:$0xff]
    %v4113 = vld [vmem:[#allocation2 + $0x3e8] sm:$0xff]
    %v4114 = vld [vmem:[#allocation2 + $0x3f0] sm:$0xff]
    %v4115 = vld [vmem:[#allocation2 + $0x3f8] sm:$0x1]
    %v4116 = vlaneseq
    %v4117 = vshrl.u32 %v4116, 7
    %v4118 = vsub.s32 0, %v4117
    %v4119 = vrot.slane %v4105, %v4118
    %v4121 = vsel %vm148, %v4099, 0
    %v4124 = vsel %vm148, %v4100, 0
    %4126 = vmatprep.subr.mxu0 0.0
    %4127 = vmatpush1.msra.mxu0 %v4101
    %4128 = vmatprep.subr.mxu0 0.0
    %4129 = vmatpush1.msra.mxu0 %v4102
    %4130 = vmatprep.subr.mxu0 0.0
    %4131 = vmatpush1.msra.mxu0 %v4103
    %4132 = vmatprep.subr.mxu0 0.0
    %4133 = vmatpush1.msra.mxu0 %v4104
    %4134 = vmatprep.subr.mxu0 0.0
    %4135 = vmatpush1.msra.mxu0 0.0
    %4136 = vmatprep.subr.mxu0 0.0
    %4137 = vmatpush1.msra.mxu0 0.0
    %4138 = vmatprep.subr.mxu0 0.0
    %4139 = vmatpush1.msra.mxu0 0.0
    %4140 = vmatprep.subr.mxu0 0.0
    %4141 = vmatpush1.msra.mxu0 0.0
    %4142 = vmatprep.subr.mxu0 0.0
    %4143 = vmatpush1.msra.mxu0 0.0
    %4144 = vmatprep.subr.mxu0 0.0
    %4145 = vmatpush1.msra.mxu0 0.0
    %4146 = vmatprep.subr.mxu0 0.0
    %4147 = vmatpush1.msra.mxu0 0.0
    %4148 = vmatprep.subr.mxu0 0.0
    %4149 = vmatpush1.msra.mxu0 0.0
    %4150 = vmatprep.subr.mxu0 0.0
    %4151 = vmatpush1.msra.mxu0 0.0
    %4152 = vmatprep.subr.mxu0 0.0
    %4153 = vmatpush1.msra.mxu0 0.0
    %4154 = vmatprep.subr.mxu0 0.0
    %4155 = vmatpush1.msra.mxu0 0.0
    %4156 = vmatprep.subr.mxu0 0.0
    %4157 = vmatpush1.msra.mxu0 0.0
    %4158 = vmatprep.subr.mxu0 0.0
    %4159 = vmatpush1.msra.mxu0 0.0
    %4160 = vmatprep.subr.mxu0 0.0
    %4161 = vmatpush1.msra.mxu0 0.0
    %4162 = vmatprep.subr.mxu0 0.0
    %4163 = vmatpush1.msra.mxu0 0.0
    %4164 = vmatprep.subr.mxu0 0.0
    %4165 = vmatpush1.msra.mxu0 0.0
    %4166 = vmatprep.subr.mxu0 0.0
    %4167 = vmatpush1.msra.mxu0 0.0
    %4168 = vmatprep.subr.mxu0 0.0
    %4169 = vmatpush1.msra.mxu0 0.0
    %4170 = vmatprep.subr.mxu0 0.0
    %4171 = vmatpush1.msra.mxu0 0.0
    %4172 = vmatprep.subr.mxu0 0.0
    %4173 = vmatpush1.msra.mxu0 0.0
    %4174 = vmatprep.subr.mxu0 0.0
    %4175 = vmatpush1.msra.mxu0 0.0
    %4176 = vmatprep.subr.mxu0 0.0
    %4177 = vmatpush1.msra.mxu0 0.0
    %4178 = vmatprep.subr.mxu0 0.0
    %4179 = vmatpush1.msra.mxu0 0.0
    %4180 = vmatprep.subr.mxu0 0.0
    %4181 = vmatpush1.msra.mxu0 0.0
    %4182 = vmatprep.subr.mxu0 0.0
    %4183 = vmatpush1.msra.mxu0 0.0
    %4184 = vmatprep.subr.mxu0 0.0
    %4185 = vmatpush1.msra.mxu0 0.0
    %4186 = vmatprep.subr.mxu0 0.0
    %4187 = vmatpush1.msra.mxu0 0.0
    %4188 = vmatprep.subr.mxu0 0.0
    %4189 = vmatpush1.msra.mxu0 0.0
    %4190 = vmatprep.mubr.f32.mxu0 0.0
    %4191 = vmatmul.mubr.f32.gmra.mrb[0].mxu0 %v4121
    %v4192 = vpop.f32.mrb[0].mxu0
    %v4193 = vadd.f32 %v4119, %v4192
    %v4194 = vpop.f32.mrb[0].mxu0
    %4195 = vmatprep.mubr.f32.mxu0 0.0
    %4196 = vmatmul.mubr.f32.gmra.mrb[0].mxu0 %v4124
    %v4197 = vpop.f32.mrb[0].mxu0
    %v4198 = vadd.f32 %v4119, %v4197
    %v4199 = vpop.f32.mrb[0].mxu0
    %4200 = vdwg.mxu0
    %v4201 = vlaneseq
    %v4202 = vshrl.u32 %v4201, 7
    %v4203 = vsub.s32 0, %v4202
    %v4204 = vrot.slane %v4110, %v4203
    %4205 = vmatprep.subr.mxu0 0.0
    %4206 = vmatpush1.msra.mxu0 %v4106
    %4207 = vmatprep.subr.mxu0 0.0
    %4208 = vmatpush1.msra.mxu0 %v4107
    %4209 = vmatprep.subr.mxu0 0.0
    %4210 = vmatpush1.msra.mxu0 %v4108
    %4211 = vmatprep.subr.mxu0 0.0
    %4212 = vmatpush1.msra.mxu0 %v4109
    %4213 = vmatprep.subr.mxu0 0.0
    %4214 = vmatpush1.msra.mxu0 0.0
    %4215 = vmatprep.subr.mxu0 0.0
    %4216 = vmatpush1.msra.mxu0 0.0
    %4217 = vmatprep.subr.mxu0 0.0
    %4218 = vmatpush1.msra.mxu0 0.0
    %4219 = vmatprep.subr.mxu0 0.0
    %4220 = vmatpush1.msra.mxu0 0.0
    %4221 = vmatprep.subr.mxu0 0.0
    %4222 = vmatpush1.msra.mxu0 0.0
    %4223 = vmatprep.subr.mxu0 0.0
    %4224 = vmatpush1.msra.mxu0 0.0
    %4225 = vmatprep.subr.mxu0 0.0
    %4226 = vmatpush1.msra.mxu0 0.0
    %4227 = vmatprep.subr.mxu0 0.0
    %4228 = vmatpush1.msra.mxu0 0.0
    %4229 = vmatprep.subr.mxu0 0.0
    %4230 = vmatpush1.msra.mxu0 0.0
    %4231 = vmatprep.subr.mxu0 0.0
    %4232 = vmatpush1.msra.mxu0 0.0
    %4233 = vmatprep.subr.mxu0 0.0
    %4234 = vmatpush1.msra.mxu0 0.0
    %4235 = vmatprep.subr.mxu0 0.0
    %4236 = vmatpush1.msra.mxu0 0.0
    %4237 = vmatprep.subr.mxu0 0.0
    %4238 = vmatpush1.msra.mxu0 0.0
    %4239 = vmatprep.subr.mxu0 0.0
    %4240 = vmatpush1.msra.mxu0 0.0
    %4241 = vmatprep.subr.mxu0 0.0
    %4242 = vmatpush1.msra.mxu0 0.0
    %4243 = vmatprep.subr.mxu0 0.0
    %4244 = vmatpush1.msra.mxu0 0.0
    %4245 = vmatprep.subr.mxu0 0.0
    %4246 = vmatpush1.msra.mxu0 0.0
    %4247 = vmatprep.subr.mxu0 0.0
    %4248 = vmatpush1.msra.mxu0 0.0
    %4249 = vmatprep.subr.mxu0 0.0
    %4250 = vmatpush1.msra.mxu0 0.0
    %4251 = vmatprep.subr.mxu0 0.0
    %4252 = vmatpush1.msra.mxu0 0.0
    %4253 = vmatprep.subr.mxu0 0.0
    %4254 = vmatpush1.msra.mxu0 0.0
    %4255 = vmatprep.subr.mxu0 0.0
    %4256 = vmatpush1.msra.mxu0 0.0
    %4257 = vmatprep.subr.mxu0 0.0
    %4258 = vmatpush1.msra.mxu0 0.0
    %4259 = vmatprep.subr.mxu0 0.0
    %4260 = vmatpush1.msra.mxu0 0.0
    %4261 = vmatprep.subr.mxu0 0.0
    %4262 = vmatpush1.msra.mxu0 0.0
    %4263 = vmatprep.subr.mxu0 0.0
    %4264 = vmatpush1.msra.mxu0 0.0
    %4265 = vmatprep.subr.mxu0 0.0
    %4266 = vmatpush1.msra.mxu0 0.0
    %4267 = vmatprep.subr.mxu0 0.0
    %4268 = vmatpush1.msra.mxu0 0.0
    %4269 = vmatprep.mubr.f32.mxu0 0.0
    %4270 = vmatmul.mubr.f32.gmra.mrb[0].mxu0 %v2716
    %v4271 = vpop.f32.mrb[0].mxu0
    %v4272 = vadd.f32 %v4204, %v4271
    %v4273 = vpop.f32.mrb[0].mxu0
    %4274 = vmatprep.mubr.f32.mxu0 0.0
    %4275 = vmatmul.mubr.f32.gmra.mrb[0].mxu0 %v2719
    %v4276 = vpop.f32.mrb[0].mxu0
    %v4277 = vadd.f32 %v4204, %v4276
    %v4278 = vpop.f32.mrb[0].mxu0
    %4279 = vdwg.mxu0
    %v4280 = vmul.f32 %v4272, %v76
    %v4281 = vmul.f32 %v4277, %v77
    %v4282 = vmul.f32 %v4272, %v78
    %v4283 = vmul.f32 %v4277, %v79
    %v4284 = vmul.f32 %v4272, %v80
    %v4285 = vmul.f32 %v4277, %v81
    %v4286 = vmul.f32 %v4272, %v82
    %v4287 = vmul.f32 %v4277, %v83
    %v4288 = vmul.f32 %v4272, %v357
    %v4289 = vmul.f32 %v4277, %v359
    %v4290 = vmul.f32 %v4272, %v361
    %v4291 = vmul.f32 %v4277, %v363
    %v4292 = vmul.f32 %v4272, %v365
    %v4293 = vmul.f32 %v4277, %v367
    %v4294 = vmul.f32 %v4272, %v369
    %v4295 = vmul.f32 %v4277, %v371
    %v4297 = vsel %vm148, %v4193, 0
    %v4300 = vsel %vm148, %v4198, 0
    %v4303 = vsel %vm148, %v4280, 0
    %v4306 = vsel %vm148, %v4281, 0
    %v4309 = vsel %vm148, %v4282, 0
    %v4312 = vsel %vm148, %v4283, 0
    %v4315 = vsel %vm148, %v4284, 0
    %v4318 = vsel %vm148, %v4285, 0
    %v4321 = vsel %vm148, %v4286, 0
    %v4324 = vsel %vm148, %v4287, 0
    %4326 = vmatprep.subr.mxu0 0.0
    %4327 = vmatpush1.xpose.msra.mxu0 %v4303
    %4328 = vmatprep.subr.mxu0 0.0
    %4329 = vmatpush1.xpose.msra.mxu0 %v4306
    %4330 = vmatprep.subr.mxu0 0.0
    %4331 = vmatpush1.xpose.msra.mxu0 %v4309
    %4332 = vmatprep.subr.mxu0 0.0
    %4333 = vmatpush1.xpose.msra.mxu0 %v4312
    %4334 = vmatprep.subr.mxu0 0.0
    %4335 = vmatpush1.xpose.msra.mxu0 %v4315
    %4336 = vmatprep.subr.mxu0 0.0
    %4337 = vmatpush1.xpose.msra.mxu0 %v4318
    %4338 = vmatprep.subr.mxu0 0.0
    %4339 = vmatpush1.xpose.msra.mxu0 %v4321
    %4340 = vmatprep.subr.mxu0 0.0
    %4341 = vmatpush1.xpose.msra.mxu0 %v4324
    %4342 = vmatprep.subr.mxu0 0.0
    %4343 = vmatpush1.xpose.msra.mxu0 0.0
    %4344 = vmatprep.subr.mxu0 0.0
    %4345 = vmatpush1.xpose.msra.mxu0 0.0
    %4346 = vmatprep.subr.mxu0 0.0
    %4347 = vmatpush1.xpose.msra.mxu0 0.0
    %4348 = vmatprep.subr.mxu0 0.0
    %4349 = vmatpush1.xpose.msra.mxu0 0.0
    %4350 = vmatprep.subr.mxu0 0.0
    %4351 = vmatpush1.xpose.msra.mxu0 0.0
    %4352 = vmatprep.subr.mxu0 0.0
    %4353 = vmatpush1.xpose.msra.mxu0 0.0
    %4354 = vmatprep.subr.mxu0 0.0
    %4355 = vmatpush1.xpose.msra.mxu0 0.0
    %4356 = vmatprep.subr.mxu0 0.0
    %4357 = vmatpush1.xpose.msra.mxu0 0.0
    %4358 = vmatprep.subr.mxu0 0.0
    %4359 = vmatpush1.xpose.msra.mxu0 0.0
    %4360 = vmatprep.subr.mxu0 0.0
    %4361 = vmatpush1.xpose.msra.mxu0 0.0
    %4362 = vmatprep.subr.mxu0 0.0
    %4363 = vmatpush1.xpose.msra.mxu0 0.0
    %4364 = vmatprep.subr.mxu0 0.0
    %4365 = vmatpush1.xpose.msra.mxu0 0.0
    %4366 = vmatprep.subr.mxu0 0.0
    %4367 = vmatpush1.xpose.msra.mxu0 0.0
    %4368 = vmatprep.subr.mxu0 0.0
    %4369 = vmatpush1.xpose.msra.mxu0 0.0
    %4370 = vmatprep.subr.mxu0 0.0
    %4371 = vmatpush1.xpose.msra.mxu0 0.0
    %4372 = vmatprep.subr.mxu0 0.0
    %4373 = vmatpush1.xpose.msra.mxu0 0.0
    %4374 = vmatprep.subr.mxu0 0.0
    %4375 = vmatpush1.xpose.msra.mxu0 0.0
    %4376 = vmatprep.subr.mxu0 0.0
    %4377 = vmatpush1.xpose.msra.mxu0 0.0
    %4378 = vmatprep.subr.mxu0 0.0
    %4379 = vmatpush1.xpose.msra.mxu0 0.0
    %4380 = vmatprep.subr.mxu0 0.0
    %4381 = vmatpush1.xpose.msra.mxu0 0.0
    %4382 = vmatprep.subr.mxu0 0.0
    %4383 = vmatpush1.xpose.msra.mxu0 0.0
    %4384 = vmatprep.subr.mxu0 0.0
    %4385 = vmatpush1.xpose.msra.mxu0 0.0
    %4386 = vmatprep.subr.mxu0 0.0
    %4387 = vmatpush1.xpose.msra.mxu0 0.0
    %4388 = vmatprep.subr.mxu0 0.0
    %4389 = vmatpush1.xpose.msra.mxu0 0.0
    %4390 = vmatprep.mubr.f32.mxu0 0.0
    %4391 = vmatmul.mubr.f32.gmra.mrb[0].mxu0 %v4297
    %v4392 = vpop.f32.mrb[0].mxu0
    %v4393 = vadd.f32 0.0, %v4392
    %v4394 = vpop.f32.mrb[0].mxu0
    %4395 = vmatprep.mubr.f32.mxu0 0.0
    %4396 = vmatmul.mubr.f32.gmra.mrb[0].mxu0 %v4300
    %v4397 = vpop.f32.mrb[0].mxu0
    %v4398 = vadd.f32 0.0, %v4397
    %v4399 = vpop.f32.mrb[0].mxu0
    %4400 = vdwg.mxu0
    %v4401 = vmul.f32 %v4393, 0.35355338
    %v4402 = vmul.f32 %v4398, 0.35355338
    %v4403 = vadd.f32 %v4401, %v152
    %v4404 = vadd.f32 %v4402, %v153
    %v4405 = vsel %vm545, %v4403, -inf
    %4406 = vmax.xlane.f32.xlu0 %v4405
    %v4407 = vpop.xlane.xlu0 %4406
    %v4408 = vsel %vm545, %v4404, -inf
    %4409 = vmax.xlane.f32.xlu0 %v4408
    %v4410 = vpop.xlane.xlu0 %4409
    %v4411 = vsub.f32 %v4403, %v4407
    %v4412 = vsub.f32 %v4404, %v4410
    %v4413 = vmul.f32 %v4411, 1.442695
    %v4414 = vpow.pop %v4413
    %v4415 = vmul.f32 %v4412, 1.442695
    %v4416 = vpow.pop %v4415
    %v4418 = vsel %vm545, %v4414, 0
    %v4421 = vsel %vm545, %v4416, 0
    %4423 = vmatprep.subr.mxu0 0.0
    %4424 = vmatpush1.msra.mxu0 %v84
    %4425 = vmatprep.subr.mxu0 0.0
    %4426 = vmatpush1.msra.mxu0 %v85
    %4427 = vmatprep.subr.mxu0 0.0
    %4428 = vmatpush1.msra.mxu0 %v86
    %4429 = vmatprep.subr.mxu0 0.0
    %4430 = vmatpush1.msra.mxu0 %v87
    %4431 = vmatprep.subr.mxu0 0.0
    %4432 = vmatpush1.msra.mxu0 %v88
    %4433 = vmatprep.subr.mxu0 0.0
    %4434 = vmatpush1.msra.mxu0 %v89
    %4435 = vmatprep.subr.mxu0 0.0
    %4436 = vmatpush1.msra.mxu0 %v90
    %4437 = vmatprep.subr.mxu0 0.0
    %4438 = vmatpush1.msra.mxu0 %v91
    %4439 = vmatprep.subr.mxu0 0.0
    %4440 = vmatpush1.msra.mxu0 0.0
    %4441 = vmatprep.subr.mxu0 0.0
    %4442 = vmatpush1.msra.mxu0 0.0
    %4443 = vmatprep.subr.mxu0 0.0
    %4444 = vmatpush1.msra.mxu0 0.0
    %4445 = vmatprep.subr.mxu0 0.0
    %4446 = vmatpush1.msra.mxu0 0.0
    %4447 = vmatprep.subr.mxu0 0.0
    %4448 = vmatpush1.msra.mxu0 0.0
    %4449 = vmatprep.subr.mxu0 0.0
    %4450 = vmatpush1.msra.mxu0 0.0
    %4451 = vmatprep.subr.mxu0 0.0
    %4452 = vmatpush1.msra.mxu0 0.0
    %4453 = vmatprep.subr.mxu0 0.0
    %4454 = vmatpush1.msra.mxu0 0.0
    %4455 = vmatprep.subr.mxu0 0.0
    %4456 = vmatpush1.msra.mxu0 0.0
    %4457 = vmatprep.subr.mxu0 0.0
    %4458 = vmatpush1.msra.mxu0 0.0
    %4459 = vmatprep.subr.mxu0 0.0
    %4460 = vmatpush1.msra.mxu0 0.0
    %4461 = vmatprep.subr.mxu0 0.0
    %4462 = vmatpush1.msra.mxu0 0.0
    %4463 = vmatprep.subr.mxu0 0.0
    %4464 = vmatpush1.msra.mxu0 0.0
    %4465 = vmatprep.subr.mxu0 0.0
    %4466 = vmatpush1.msra.mxu0 0.0
    %4467 = vmatprep.subr.mxu0 0.0
    %4468 = vmatpush1.msra.mxu0 0.0
    %4469 = vmatprep.subr.mxu0 0.0
    %4470 = vmatpush1.msra.mxu0 0.0
    %4471 = vmatprep.subr.mxu0 0.0
    %4472 = vmatpush1.msra.mxu0 0.0
    %4473 = vmatprep.subr.mxu0 0.0
    %4474 = vmatpush1.msra.mxu0 0.0
    %4475 = vmatprep.subr.mxu0 0.0
    %4476 = vmatpush1.msra.mxu0 0.0
    %4477 = vmatprep.subr.mxu0 0.0
    %4478 = vmatpush1.msra.mxu0 0.0
    %4479 = vmatprep.subr.mxu0 0.0
    %4480 = vmatpush1.msra.mxu0 0.0
    %4481 = vmatprep.subr.mxu0 0.0
    %4482 = vmatpush1.msra.mxu0 0.0
    %4483 = vmatprep.subr.mxu0 0.0
    %4484 = vmatpush1.msra.mxu0 0.0
    %4485 = vmatprep.subr.mxu0 0.0
    %4486 = vmatpush1.msra.mxu0 0.0
    %4487 = vmatprep.mubr.f32.mxu0 0.0
    %4488 = vmatmul.mubr.f32.gmra.mrb[0].mxu0 %v4418
    %v4489 = vpop.f32.mrb[0].mxu0
    %v4490 = vadd.f32 0.0, %v4489
    %v4491 = vpop.f32.mrb[0].mxu0
    %4492 = vmatprep.mubr.f32.mxu0 0.0
    %4493 = vmatmul.mubr.f32.gmra.mrb[0].mxu0 %v4421
    %v4494 = vpop.f32.mrb[0].mxu0
    %v4495 = vadd.f32 0.0, %v4494
    %v4496 = vpop.f32.mrb[0].mxu0
    %4497 = vdwg.mxu0
    %v4498 = vrcp.pop %v4490
    %v4499 = vrcp.pop %v4495
    %v4500 = vmul.f32 %v4414, %v4498
    %v4501 = vmul.f32 %v4416, %v4499
    %4510 = vrot.lane.b32.xlu0 %v4288, 96
    %v4511 = vpop.permute.xlu0 %4510
    %4512 = vrot.lane.b32.xlu0 %v4289, 96
    %v4513 = vpop.permute.xlu0 %4512
    %4514 = vrot.lane.b32.xlu0 %v4290, 96
    %v4515 = vpop.permute.xlu0 %4514
    %4516 = vrot.lane.b32.xlu0 %v4291, 96
    %v4517 = vpop.permute.xlu0 %4516
    %4518 = vrot.lane.b32.xlu0 %v4292, 96
    %v4519 = vpop.permute.xlu0 %4518
    %4520 = vrot.lane.b32.xlu0 %v4293, 96
    %v4521 = vpop.permute.xlu0 %4520
    %4522 = vrot.lane.b32.xlu0 %v4294, 96
    %v4523 = vpop.permute.xlu0 %4522
    %4524 = vrot.lane.b32.xlu0 %v4295, 96
    %v4525 = vpop.permute.xlu0 %4524
    %v4535 = vsel %vm545, %v4500, 0
    %v4538 = vsel %vm545, %v4501, 0
    %4540 = vmatprep.subr.mxu0 0.0
    %4541 = vmatpush1.msra.mxu0 %v4511
    %4542 = vmatprep.subr.mxu0 0.0
    %4543 = vmatpush1.msra.mxu0 %v4513
    %4544 = vmatprep.subr.mxu0 0.0
    %4545 = vmatpush1.msra.mxu0 %v4515
    %4546 = vmatprep.subr.mxu0 0.0
    %4547 = vmatpush1.msra.mxu0 %v4517
    %4548 = vmatprep.subr.mxu0 0.0
    %4549 = vmatpush1.msra.mxu0 %v4519
    %4550 = vmatprep.subr.mxu0 0.0
    %4551 = vmatpush1.msra.mxu0 %v4521
    %4552 = vmatprep.subr.mxu0 0.0
    %4553 = vmatpush1.msra.mxu0 %v4523
    %4554 = vmatprep.subr.mxu0 0.0
    %4555 = vmatpush1.msra.mxu0 %v4525
    %4556 = vmatprep.subr.mxu0 0.0
    %4557 = vmatpush1.msra.mxu0 0.0
    %4558 = vmatprep.subr.mxu0 0.0
    %4559 = vmatpush1.msra.mxu0 0.0
    %4560 = vmatprep.subr.mxu0 0.0
    %4561 = vmatpush1.msra.mxu0 0.0
    %4562 = vmatprep.subr.mxu0 0.0
    %4563 = vmatpush1.msra.mxu0 0.0
    %4564 = vmatprep.subr.mxu0 0.0
    %4565 = vmatpush1.msra.mxu0 0.0
    %4566 = vmatprep.subr.mxu0 0.0
    %4567 = vmatpush1.msra.mxu0 0.0
    %4568 = vmatprep.subr.mxu0 0.0
    %4569 = vmatpush1.msra.mxu0 0.0
    %4570 = vmatprep.subr.mxu0 0.0
    %4571 = vmatpush1.msra.mxu0 0.0
    %4572 = vmatprep.subr.mxu0 0.0
    %4573 = vmatpush1.msra.mxu0 0.0
    %4574 = vmatprep.subr.mxu0 0.0
    %4575 = vmatpush1.msra.mxu0 0.0
    %4576 = vmatprep.subr.mxu0 0.0
    %4577 = vmatpush1.msra.mxu0 0.0
    %4578 = vmatprep.subr.mxu0 0.0
    %4579 = vmatpush1.msra.mxu0 0.0
    %4580 = vmatprep.subr.mxu0 0.0
    %4581 = vmatpush1.msra.mxu0 0.0
    %4582 = vmatprep.subr.mxu0 0.0
    %4583 = vmatpush1.msra.mxu0 0.0
    %4584 = vmatprep.subr.mxu0 0.0
    %4585 = vmatpush1.msra.mxu0 0.0
    %4586 = vmatprep.subr.mxu0 0.0
    %4587 = vmatpush1.msra.mxu0 0.0
    %4588 = vmatprep.subr.mxu0 0.0
    %4589 = vmatpush1.msra.mxu0 0.0
    %4590 = vmatprep.subr.mxu0 0.0
    %4591 = vmatpush1.msra.mxu0 0.0
    %4592 = vmatprep.subr.mxu0 0.0
    %4593 = vmatpush1.msra.mxu0 0.0
    %4594 = vmatprep.subr.mxu0 0.0
    %4595 = vmatpush1.msra.mxu0 0.0
    %4596 = vmatprep.subr.mxu0 0.0
    %4597 = vmatpush1.msra.mxu0 0.0
    %4598 = vmatprep.subr.mxu0 0.0
    %4599 = vmatpush1.msra.mxu0 0.0
    %4600 = vmatprep.subr.mxu0 0.0
    %4601 = vmatpush1.msra.mxu0 0.0
    %4602 = vmatprep.subr.mxu0 0.0
    %4603 = vmatpush1.msra.mxu0 0.0
    %4604 = vmatprep.mubr.f32.mxu0 0.0
    %4605 = vmatmul.mubr.f32.gmra.mrb[0].mxu0 %v4535
    %v4606 = vpop.f32.mrb[0].mxu0
    %v4607 = vadd.f32 0.0, %v4606
    %v4608 = vpop.f32.mrb[0].mxu0
    %4609 = vmatprep.mubr.f32.mxu0 0.0
    %4610 = vmatmul.mubr.f32.gmra.mrb[0].mxu0 %v4538
    %v4611 = vpop.f32.mrb[0].mxu0
    %v4612 = vadd.f32 0.0, %v4611
    %v4613 = vpop.f32.mrb[0].mxu0
    %4614 = vdwg.mxu0
    %v4615 = vlaneseq
    %v4616 = vshrl.u32 %v4615, 7
    %v4617 = vsub.s32 0, %v4616
    %v4618 = vrot.slane %v4115, %v4617
    %v4620 = vsel %vm148, %v4607, 0
    %v4623 = vsel %vm148, %v4612, 0
    %4625 = vmatprep.subr.mxu0 0.0
    %4626 = vmatpush1.msra.mxu0 %v4111
    %4627 = vmatprep.subr.mxu0 0.0
    %4628 = vmatpush1.msra.mxu0 %v4112
    %4629 = vmatprep.subr.mxu0 0.0
    %4630 = vmatpush1.msra.mxu0 %v4113
    %4631 = vmatprep.subr.mxu0 0.0
    %4632 = vmatpush1.msra.mxu0 %v4114
    %4633 = vmatprep.subr.mxu0 0.0
    %4634 = vmatpush1.msra.mxu0 0.0
    %4635 = vmatprep.subr.mxu0 0.0
    %4636 = vmatpush1.msra.mxu0 0.0
    %4637 = vmatprep.subr.mxu0 0.0
    %4638 = vmatpush1.msra.mxu0 0.0
    %4639 = vmatprep.subr.mxu0 0.0
    %4640 = vmatpush1.msra.mxu0 0.0
    %4641 = vmatprep.subr.mxu0 0.0
    %4642 = vmatpush1.msra.mxu0 0.0
    %4643 = vmatprep.subr.mxu0 0.0
    %4644 = vmatpush1.msra.mxu0 0.0
    %4645 = vmatprep.subr.mxu0 0.0
    %4646 = vmatpush1.msra.mxu0 0.0
    %4647 = vmatprep.subr.mxu0 0.0
    %4648 = vmatpush1.msra.mxu0 0.0
    %4649 = vmatprep.subr.mxu0 0.0
    %4650 = vmatpush1.msra.mxu0 0.0
    %4651 = vmatprep.subr.mxu0 0.0
    %4652 = vmatpush1.msra.mxu0 0.0
    %4653 = vmatprep.subr.mxu0 0.0
    %4654 = vmatpush1.msra.mxu0 0.0
    %4655 = vmatprep.subr.mxu0 0.0
    %4656 = vmatpush1.msra.mxu0 0.0
    %4657 = vmatprep.subr.mxu0 0.0
    %4658 = vmatpush1.msra.mxu0 0.0
    %4659 = vmatprep.subr.mxu0 0.0
    %4660 = vmatpush1.msra.mxu0 0.0
    %4661 = vmatprep.subr.mxu0 0.0
    %4662 = vmatpush1.msra.mxu0 0.0
    %4663 = vmatprep.subr.mxu0 0.0
    %4664 = vmatpush1.msra.mxu0 0.0
    %4665 = vmatprep.subr.mxu0 0.0
    %4666 = vmatpush1.msra.mxu0 0.0
    %4667 = vmatprep.subr.mxu0 0.0
    %4668 = vmatpush1.msra.mxu0 0.0
    %4669 = vmatprep.subr.mxu0 0.0
    %4670 = vmatpush1.msra.mxu0 0.0
    %4671 = vmatprep.subr.mxu0 0.0
    %4672 = vmatpush1.msra.mxu0 0.0
    %4673 = vmatprep.subr.mxu0 0.0
    %4674 = vmatpush1.msra.mxu0 0.0
    %4675 = vmatprep.subr.mxu0 0.0
    %4676 = vmatpush1.msra.mxu0 0.0
    %4677 = vmatprep.subr.mxu0 0.0
    %4678 = vmatpush1.msra.mxu0 0.0
    %4679 = vmatprep.subr.mxu0 0.0
    %4680 = vmatpush1.msra.mxu0 0.0
    %4681 = vmatprep.subr.mxu0 0.0
    %4682 = vmatpush1.msra.mxu0 0.0
    %4683 = vmatprep.subr.mxu0 0.0
    %4684 = vmatpush1.msra.mxu0 0.0
    %4685 = vmatprep.subr.mxu0 0.0
    %4686 = vmatpush1.msra.mxu0 0.0
    %4687 = vmatprep.subr.mxu0 0.0
    %4688 = vmatpush1.msra.mxu0 0.0
    %4689 = vmatprep.mubr.f32.mxu0 0.0
    %4690 = vmatmul.mubr.f32.gmra.mrb[0].mxu0 %v4620
    %v4691 = vpop.f32.mrb[0].mxu0
    %v4692 = vadd.f32 %v4618, %v4691
    %v4693 = vpop.f32.mrb[0].mxu0
    %4694 = vmatprep.mubr.f32.mxu0 0.0
    %4695 = vmatmul.mubr.f32.gmra.mrb[0].mxu0 %v4623
    %v4696 = vpop.f32.mrb[0].mxu0
    %v4697 = vadd.f32 %v4618, %v4696
    %v4698 = vpop.f32.mrb[0].mxu0
    %4699 = vdwg.mxu0
    %v4700 = vadd.f32 %v4045, %v4692
    %v4701 = vadd.f32 %v4046, %v4697
    %v4702 = vld [vmem:[#allocation2 + $0x490] sm:$0x1]
    %v4703 = vld [vmem:[#allocation2 + $0x498] sm:$0x1]
    %v4704 = vsel %vm148, %v4700, 0.0
    %4705 = vadd.xlane.f32.xlu0 %v4704
    %v4706 = vpop.xlane.xlu0 %4705
    %v4707 = vsel %vm148, %v4701, 0.0
    %4708 = vadd.xlane.f32.xlu0 %v4707
    %v4709 = vpop.xlane.xlu0 %4708
    %v4710 = vmul.f32 %v4706, %v206
    %v4711 = vmul.f32 %v4709, %v206
    %v4712 = vsub.f32 %v4700, %v4710
    %v4713 = vsub.f32 %v4701, %v4711
    %v4714 = vmul.f32 %v4712, %v4712
    %v4715 = vmul.f32 %v4713, %v4713
    %v4716 = vsel %vm148, %v4714, 0.0
    %4717 = vadd.xlane.f32.xlu0 %v4716
    %v4718 = vpop.xlane.xlu0 %4717
    %v4719 = vsel %vm148, %v4715, 0.0
    %4720 = vadd.xlane.f32.xlu0 %v4719
    %v4721 = vpop.xlane.xlu0 %4720
    %v4722 = vmul.f32 %v4718, 0.032258064
    %v4723 = vmul.f32 %v4721, 0.032258064
    %v4724 = vrsqrt.pop %v4722
    %v4725 = vmul.f32 %v4722, %v4724
    %vm4726 = vcmp.eq.f32.partialorder %v4722, inf
    %v4727 = vsel %vm4726, %v4722, %v4725
    %vm4728 = vcmp.eq.f32.partialorder %v4722, 0.0
    %v4729 = vand.u32 %v4722, 2147483648
    %v4730 = vsel %vm4728, %v4729, %v4727
    %v4731 = vrsqrt.pop %v4723
    %v4732 = vmul.f32 %v4723, %v4731
    %vm4733 = vcmp.eq.f32.partialorder %v4723, inf
    %v4734 = vsel %vm4733, %v4723, %v4732
    %vm4735 = vcmp.eq.f32.partialorder %v4723, 0.0
    %v4736 = vand.u32 %v4723, 2147483648
    %v4737 = vsel %vm4735, %v4736, %v4734
    %v4738 = vlaneseq
    %v4739 = vshrl.u32 %v4738, 7
    %v4740 = vsub.s32 0, %v4739
    %v4741 = vrot.slane %v4702, %v4740
    %v4742 = vmul.f32 %v4741, %v4712
    %v4743 = vmul.f32 %v4741, %v4713
    %v4744 = vadd.f32 %v4730, 1e-06
    %v4745 = vadd.f32 %v4737, 1e-06
    %v4746 = vrcp.pop %v4744
    %v4747 = vmul.f32 %v4742, %v4746
    %v4748 = vrcp.pop %v4745
    %v4749 = vmul.f32 %v4743, %v4748
    %v4750 = vlaneseq
    %v4751 = vshrl.u32 %v4750, 7
    %v4752 = vsub.s32 0, %v4751
    %v4753 = vrot.slane %v4703, %v4752
    %v4754 = vadd.f32 %v4747, %v4753
    %v4755 = vadd.f32 %v4749, %v4753
    %v4756 = vld [vmem:[#allocation2 + $0x400] sm:$0xff]
    %v4757 = vld [vmem:[#allocation2 + $0x408] sm:$0xff]
    %v4758 = vld [vmem:[#allocation2 + $0x410] sm:$0xff]
    %v4759 = vld [vmem:[#allocation2 + $0x418] sm:$0xff]
    %v4760 = vld [vmem:[#allocation2 + $0x420] sm:$0x1]
    %v4761 = vld [vmem:[#allocation2 + $0x428] sm:$0xff]
    %v4762 = vld [vmem:[#allocation2 + $0x430] sm:$0xff]
    %v4763 = vld [vmem:[#allocation2 + $0x438] sm:$0xff]
    %v4764 = vld [vmem:[#allocation2 + $0x440] sm:$0xff]
    %v4765 = vld [vmem:[#allocation2 + $0x448] sm:$0xff]
    %v4766 = vld [vmem:[#allocation2 + $0x450] sm:$0xff]
    %v4767 = vld [vmem:[#allocation2 + $0x458] sm:$0xff]
    %v4768 = vld [vmem:[#allocation2 + $0x460] sm:$0xff]
    %v4769 = vld [vmem:[#allocation2 + $0x468] sm:$0x1]
    %v4770 = vlaneseq
    %v4771 = vshrl.u32 %v4770, 7
    %v4772 = vsub.s32 0, %v4771
    %v4773 = vrot.slane %v4760, %v4772
    %v4775 = vsel %vm148, %v4754, 0
    %v4778 = vsel %vm148, %v4755, 0
    %4780 = vmatprep.subr.mxu0 0.0
    %4781 = vmatpush1.msra.mxu0 %v4756
    %4782 = vmatprep.subr.mxu0 0.0
    %4783 = vmatpush1.msra.mxu0 %v4757
    %4784 = vmatprep.subr.mxu0 0.0
    %4785 = vmatpush1.msra.mxu0 %v4758
    %4786 = vmatprep.subr.mxu0 0.0
    %4787 = vmatpush1.msra.mxu0 %v4759
    %4788 = vmatprep.subr.mxu0 0.0
    %4789 = vmatpush1.msra.mxu0 0.0
    %4790 = vmatprep.subr.mxu0 0.0
    %4791 = vmatpush1.msra.mxu0 0.0
    %4792 = vmatprep.subr.mxu0 0.0
    %4793 = vmatpush1.msra.mxu0 0.0
    %4794 = vmatprep.subr.mxu0 0.0
    %4795 = vmatpush1.msra.mxu0 0.0
    %4796 = vmatprep.subr.mxu0 0.0
    %4797 = vmatpush1.msra.mxu0 0.0
    %4798 = vmatprep.subr.mxu0 0.0
    %4799 = vmatpush1.msra.mxu0 0.0
    %4800 = vmatprep.subr.mxu0 0.0
    %4801 = vmatpush1.msra.mxu0 0.0
    %4802 = vmatprep.subr.mxu0 0.0
    %4803 = vmatpush1.msra.mxu0 0.0
    %4804 = vmatprep.subr.mxu0 0.0
    %4805 = vmatpush1.msra.mxu0 0.0
    %4806 = vmatprep.subr.mxu0 0.0
    %4807 = vmatpush1.msra.mxu0 0.0
    %4808 = vmatprep.subr.mxu0 0.0
    %4809 = vmatpush1.msra.mxu0 0.0
    %4810 = vmatprep.subr.mxu0 0.0
    %4811 = vmatpush1.msra.mxu0 0.0
    %4812 = vmatprep.subr.mxu0 0.0
    %4813 = vmatpush1.msra.mxu0 0.0
    %4814 = vmatprep.subr.mxu0 0.0
    %4815 = vmatpush1.msra.mxu0 0.0
    %4816 = vmatprep.subr.mxu0 0.0
    %4817 = vmatpush1.msra.mxu0 0.0
    %4818 = vmatprep.subr.mxu0 0.0
    %4819 = vmatpush1.msra.mxu0 0.0
    %4820 = vmatprep.subr.mxu0 0.0
    %4821 = vmatpush1.msra.mxu0 0.0
    %4822 = vmatprep.subr.mxu0 0.0
    %4823 = vmatpush1.msra.mxu0 0.0
    %4824 = vmatprep.subr.mxu0 0.0
    %4825 = vmatpush1.msra.mxu0 0.0
    %4826 = vmatprep.subr.mxu0 0.0
    %4827 = vmatpush1.msra.mxu0 0.0
    %4828 = vmatprep.subr.mxu0 0.0
    %4829 = vmatpush1.msra.mxu0 0.0
    %4830 = vmatprep.subr.mxu0 0.0
    %4831 = vmatpush1.msra.mxu0 0.0
    %4832 = vmatprep.subr.mxu0 0.0
    %4833 = vmatpush1.msra.mxu0 0.0
    %4834 = vmatprep.subr.mxu0 0.0
    %4835 = vmatpush1.msra.mxu0 0.0
    %4836 = vmatprep.subr.mxu0 0.0
    %4837 = vmatpush1.msra.mxu0 0.0
    %4838 = vmatprep.subr.mxu0 0.0
    %4839 = vmatpush1.msra.mxu0 0.0
    %4840 = vmatprep.subr.mxu0 0.0
    %4841 = vmatpush1.msra.mxu0 0.0
    %4842 = vmatprep.subr.mxu0 0.0
    %4843 = vmatpush1.msra.mxu0 0.0
    %4844 = vmatprep.mubr.f32.mxu0 0.0
    %4845 = vmatmul.mubr.f32.gmra.mrb[0].mxu0 %v4775
    %v4846 = vpop.f32.mrb[0].mxu0
    %v4847 = vadd.f32 %v4773, %v4846
    %v4848 = vpop.f32.mrb[0].mxu0
    %4849 = vmatprep.mubr.f32.mxu0 0.0
    %4850 = vmatmul.mubr.f32.gmra.mrb[0].mxu0 %v4778
    %v4851 = vpop.f32.mrb[0].mxu0
    %v4852 = vadd.f32 %v4773, %v4851
    %v4853 = vpop.f32.mrb[0].mxu0
    %4854 = vdwg.mxu0
    %v4855 = vmax.f32 %v4847, 0.0
    %v4856 = vmax.f32 %v4852, 0.0
    %v4857 = vlaneseq
    %v4858 = vshrl.u32 %v4857, 7
    %v4859 = vsub.s32 0, %v4858
    %v4860 = vrot.slane %v4769, %v4859
    %v4862 = vsel %vm545, %v4855, 0
    %v4865 = vsel %vm545, %v4856, 0
    %4867 = vmatprep.subr.mxu0 0.0
    %4868 = vmatpush1.msra.mxu0 %v4761
    %4869 = vmatprep.subr.mxu0 0.0
    %4870 = vmatpush1.msra.mxu0 %v4762
    %4871 = vmatprep.subr.mxu0 0.0
    %4872 = vmatpush1.msra.mxu0 %v4763
    %4873 = vmatprep.subr.mxu0 0.0
    %4874 = vmatpush1.msra.mxu0 %v4764
    %4875 = vmatprep.subr.mxu0 0.0
    %4876 = vmatpush1.msra.mxu0 %v4765
    %4877 = vmatprep.subr.mxu0 0.0
    %4878 = vmatpush1.msra.mxu0 %v4766
    %4879 = vmatprep.subr.mxu0 0.0
    %4880 = vmatpush1.msra.mxu0 %v4767
    %4881 = vmatprep.subr.mxu0 0.0
    %4882 = vmatpush1.msra.mxu0 %v4768
    %4883 = vmatprep.subr.mxu0 0.0
    %4884 = vmatpush1.msra.mxu0 0.0
    %4885 = vmatprep.subr.mxu0 0.0
    %4886 = vmatpush1.msra.mxu0 0.0
    %4887 = vmatprep.subr.mxu0 0.0
    %4888 = vmatpush1.msra.mxu0 0.0
    %4889 = vmatprep.subr.mxu0 0.0
    %4890 = vmatpush1.msra.mxu0 0.0
    %4891 = vmatprep.subr.mxu0 0.0
    %4892 = vmatpush1.msra.mxu0 0.0
    %4893 = vmatprep.subr.mxu0 0.0
    %4894 = vmatpush1.msra.mxu0 0.0
    %4895 = vmatprep.subr.mxu0 0.0
    %4896 = vmatpush1.msra.mxu0 0.0
    %4897 = vmatprep.subr.mxu0 0.0
    %4898 = vmatpush1.msra.mxu0 0.0
    %4899 = vmatprep.subr.mxu0 0.0
    %4900 = vmatpush1.msra.mxu0 0.0
    %4901 = vmatprep.subr.mxu0 0.0
    %4902 = vmatpush1.msra.mxu0 0.0
    %4903 = vmatprep.subr.mxu0 0.0
    %4904 = vmatpush1.msra.mxu0 0.0
    %4905 = vmatprep.subr.mxu0 0.0
    %4906 = vmatpush1.msra.mxu0 0.0
    %4907 = vmatprep.subr.mxu0 0.0
    %4908 = vmatpush1.msra.mxu0 0.0
    %4909 = vmatprep.subr.mxu0 0.0
    %4910 = vmatpush1.msra.mxu0 0.0
    %4911 = vmatprep.subr.mxu0 0.0
    %4912 = vmatpush1.msra.mxu0 0.0
    %4913 = vmatprep.subr.mxu0 0.0
    %4914 = vmatpush1.msra.mxu0 0.0
    %4915 = vmatprep.subr.mxu0 0.0
    %4916 = vmatpush1.msra.mxu0 0.0
    %4917 = vmatprep.subr.mxu0 0.0
    %4918 = vmatpush1.msra.mxu0 0.0
    %4919 = vmatprep.subr.mxu0 0.0
    %4920 = vmatpush1.msra.mxu0 0.0
    %4921 = vmatprep.subr.mxu0 0.0
    %4922 = vmatpush1.msra.mxu0 0.0
    %4923 = vmatprep.subr.mxu0 0.0
    %4924 = vmatpush1.msra.mxu0 0.0
    %4925 = vmatprep.subr.mxu0 0.0
    %4926 = vmatpush1.msra.mxu0 0.0
    %4927 = vmatprep.subr.mxu0 0.0
    %4928 = vmatpush1.msra.mxu0 0.0
    %4929 = vmatprep.subr.mxu0 0.0
    %4930 = vmatpush1.msra.mxu0 0.0
    %4931 = vmatprep.mubr.f32.mxu0 0.0
    %4932 = vmatmul.mubr.f32.gmra.mrb[0].mxu0 %v4862
    %v4933 = vpop.f32.mrb[0].mxu0
    %v4934 = vadd.f32 %v4860, %v4933
    %v4935 = vpop.f32.mrb[0].mxu0
    %4936 = vmatprep.mubr.f32.mxu0 0.0
    %4937 = vmatmul.mubr.f32.gmra.mrb[0].mxu0 %v4865
    %v4938 = vpop.f32.mrb[0].mxu0
    %v4939 = vadd.f32 %v4860, %v4938
    %v4940 = vpop.f32.mrb[0].mxu0
    %4941 = vdwg.mxu0
    %v4942 = vadd.f32 %v4700, %v4934
    %v4943 = vadd.f32 %v4701, %v4939
    %v4944 = vld [vmem:[#allocation2 + $0x4a0] sm:$0x1]
    %v4945 = vld [vmem:[#allocation2 + $0x4a8] sm:$0x1]
    %v4946 = vsel %vm148, %v4942, 0.0
    %4947 = vadd.xlane.f32.xlu0 %v4946
    %v4948 = vpop.xlane.xlu0 %4947
    %v4949 = vsel %vm148, %v4943, 0.0
    %4950 = vadd.xlane.f32.xlu0 %v4949
    %v4951 = vpop.xlane.xlu0 %4950
    %v4952 = vmul.f32 %v4948, %v206
    %v4953 = vmul.f32 %v4951, %v206
    %v4954 = vsub.f32 %v4942, %v4952
    %v4955 = vsub.f32 %v4943, %v4953
    %v4956 = vmul.f32 %v4954, %v4954
    %v4957 = vmul.f32 %v4955, %v4955
    %v4958 = vsel %vm148, %v4956, 0.0
    %4959 = vadd.xlane.f32.xlu0 %v4958
    %v4960 = vpop.xlane.xlu0 %4959
    %v4961 = vsel %vm148, %v4957, 0.0
    %4962 = vadd.xlane.f32.xlu0 %v4961
    %v4963 = vpop.xlane.xlu0 %4962
    %v4964 = vmul.f32 %v4960, 0.032258064
    %v4965 = vmul.f32 %v4963, 0.032258064
    %v4966 = vrsqrt.pop %v4964
    %v4967 = vmul.f32 %v4964, %v4966
    %vm4968 = vcmp.eq.f32.partialorder %v4964, inf
    %v4969 = vsel %vm4968, %v4964, %v4967
    %vm4970 = vcmp.eq.f32.partialorder %v4964, 0.0
    %v4971 = vand.u32 %v4964, 2147483648
    %v4972 = vsel %vm4970, %v4971, %v4969
    %v4973 = vrsqrt.pop %v4965
    %v4974 = vmul.f32 %v4965, %v4973
    %vm4975 = vcmp.eq.f32.partialorder %v4965, inf
    %v4976 = vsel %vm4975, %v4965, %v4974
    %vm4977 = vcmp.eq.f32.partialorder %v4965, 0.0
    %v4978 = vand.u32 %v4965, 2147483648
    %v4979 = vsel %vm4977, %v4978, %v4976
    %v4980 = vlaneseq
    %v4981 = vshrl.u32 %v4980, 7
    %v4982 = vsub.s32 0, %v4981
    %v4983 = vrot.slane %v4944, %v4982
    %v4984 = vmul.f32 %v4983, %v4954
    %v4985 = vmul.f32 %v4983, %v4955
    %v4986 = vadd.f32 %v4972, 1e-06
    %v4987 = vadd.f32 %v4979, 1e-06
    %v4988 = vrcp.pop %v4986
    %v4989 = vmul.f32 %v4984, %v4988
    %v4990 = vrcp.pop %v4987
    %v4991 = vmul.f32 %v4985, %v4990
    %v4992 = vlaneseq
    %v4993 = vshrl.u32 %v4992, 7
    %v4994 = vsub.s32 0, %v4993
    %v4995 = vrot.slane %v4945, %v4994
    %v4996 = vadd.f32 %v4989, %v4995
    %v4997 = vadd.f32 %v4991, %v4995
    %4998 = vst.msk [vmem:[#allocation10] sm:$0xff] %vm148, %v4996
    %4999 = vst.msk [vmem:[#allocation10 + $0x8] sm:$0xff] %vm148, %v4997
    // Predicated region
    $region38: #{encoder_decoder_forward.1} parent=1 // pred_check
      _
    $region39: #{encoder_decoder_forward.1} parent=1 // pred_check_branch
      %5001 = sbr.rel (0) target = $region41
    $region40: #{encoder_decoder_forward.1} parent=1 // pred_region
      %s5003 = ssub.s32 256, 256
      %5004 = vsyncadd [#allocation4], %s5003
      %s5005 = sshll.u32 [#allocation10], 4
      %s5006 = int_to_ptr.vmem [resolvable:$true] %s5005
      %5011 = dma.vmem_to_hbm [thread:$0]  %s5006, 256, %s5, [#allocation4], 128, 128, 8
    $region41: #{encoder_decoder_forward.1} parent=1 // pred_fallthru
      _
    // Predicated region
    $region42: #{encoder_decoder_forward.1} parent=1 // pred_check
      _
    $region43: #{encoder_decoder_forward.1} parent=1 // pred_check_branch
      %5013 = sbr.rel (0) target = $region45
    $region44: #{encoder_decoder_forward.1} parent=1 // pred_region
      %5014 = dma.done [#allocation4], 256
    $region45: #{encoder_decoder_forward.1} parent=1 // pred_fallthru
      _
    %5015 = vsyncpa [#allocation3], 1
    %5016 = vsyncpa [#allocation6], 1
    %5017 = vsyncpa [#allocation9], 1
    %5018 = vsyncpa [#allocation4], 1

</llo_original>
